<compile_context>
chip_gen: v7x
topology: tpu7x:2x2x1
jax: 0.10.0
libtpu: 0.0.40
codegen_flags: <defaults>
</compile_context>

<pallas_src>
import jax
import jax.numpy as jnp
from jax.experimental import pallas as pl
from jax.experimental.pallas import tpu as pltpu

INPUT_DIM = 32
VOX_DIM = 64
WIDTH = 128
HEAD_OUT = WIDTH - VOX_DIM      # 64
OUT_COLS = 8                    # rgb (3) zero-padded to 8 output columns


def _round_up(x, m):
    return ((x + m - 1) // m) * m


def _cdiv(a, b):
    return (a + b - 1) // b


def _choose_tiling(n, tm_max):
    """Pick (tm, n_pad, n_tiles) with tm a multiple of 256 and an even tile count."""
    tm_max = max(256, _round_up(min(tm_max, 8192), 256))
    n_pad = _round_up(max(n, 1), 512)                 # always splittable into 2 tiles
    n_tiles = max(2, 2 * _cdiv(n_pad, 2 * tm_max))    # even, >= 2 (v7x 2-TC sharding)
    tm = _round_up(_cdiv(n_pad, n_tiles), 256)
    n_pad = tm * n_tiles
    return tm, n_pad, n_tiles


def _rgbnet_kernel(pos_ref, vox_ref, w1_ref, b1_ref, w2_ref, b2_ref,
                   w3_ref, b3_ref, w4h_ref, w4v_ref, b4_ref,
                   w5_ref, b5_ref, out_ref):
    pos = pos_ref[...]                                   # (tm, 32)  bf16
    vox = vox_ref[...]                                   # (tm, 64)  bf16

    # --- head --- (bf16 operands, f32 MXU accumulation, f32 bias/ReLU)
    h = jnp.dot(pos, w1_ref[...], preferred_element_type=jnp.float32) + b1_ref[...]
    h = jnp.maximum(h, 0.0)

    h = jnp.dot(h.astype(jnp.bfloat16), w2_ref[...],
                preferred_element_type=jnp.float32) + b2_ref[...]
    h = jnp.maximum(h, 0.0)

    h = jnp.dot(h.astype(jnp.bfloat16), w3_ref[...],
                preferred_element_type=jnp.float32) + b3_ref[...]
    h = jnp.maximum(h, 0.0)                              # (tm, HEAD_OUT)

    # --- mid: cat([h, vox]) @ W4 == h @ W4[:64] + vox @ W4[64:]  (no concat, no zero-K)
    mid = (jnp.dot(h.astype(jnp.bfloat16), w4h_ref[...],
                   preferred_element_type=jnp.float32)
           + jnp.dot(vox, w4v_ref[...], preferred_element_type=jnp.float32)
           + b4_ref[...])
    mid = jnp.maximum(mid, 0.0)                          # (tm, WIDTH)

    # --- rgb: narrow (tm, 8) f32 store -> tiny HBM writeback
    out_ref[...] = (jnp.dot(mid.astype(jnp.bfloat16), w5_ref[...],
                            preferred_element_type=jnp.float32) + b5_ref[...])


def rgbnet_forward(pos_view, vox, params, *, tm=2048):
    N, input_dim = pos_view.shape
    n_vox = vox.shape[-1]
    assert vox.shape == (N, n_vox)

    (w1, b1, w2, b2, w3, b3, w4, b4, w5, b5) = params
    width = w1.shape[1]
    head_out = w3.shape[1]
    n_out = w5.shape[1]
    assert w4.shape[0] == head_out + n_vox
    assert n_out <= OUT_COLS

    tm, n_pad, n_tiles = _choose_tiling(N, tm)
    pad = n_pad - N

    # Single-pass bf16 batch padding -- no 128-wide f32 packing intermediate.
    pos_p = jnp.pad(pos_view.astype(jnp.bfloat16), ((0, pad), (0, 0)))
    vox_p = jnp.pad(vox.astype(jnp.bfloat16), ((0, pad), (0, 0)))

    # Weights as bf16 matmul operands; biases stay f32.
    w1b = w1.astype(jnp.bfloat16)                        # (input_dim, width), K=32
    w2b = w2.astype(jnp.bfloat16)
    w3b = w3.astype(jnp.bfloat16)
    w4h = w4[:head_out, :].astype(jnp.bfloat16)          # (64, width)
    w4v = w4[head_out:, :].astype(jnp.bfloat16)          # (64, width)
    w5p = (jnp.zeros((width, OUT_COLS), jnp.float32)
           .at[:, :n_out].set(w5).astype(jnp.bfloat16))
    b5p = jnp.zeros((1, OUT_COLS), jnp.float32).at[:, :n_out].set(b5)

    def fixed(a):   # whole array, same block every grid step (stays VMEM-resident)
        return pl.BlockSpec(a.shape, lambda i: (0, 0))

    grid_spec = pltpu.PrefetchScalarGridSpec(
        num_scalar_prefetch=0,
        grid=(n_tiles,),
        in_specs=[
            pl.BlockSpec((tm, input_dim), lambda i: (i, 0)),   # pos tile
            pl.BlockSpec((tm, n_vox), lambda i: (i, 0)),       # vox tile
            fixed(w1b), fixed(b1),
            fixed(w2b), fixed(b2),
            fixed(w3b), fixed(b3),
            fixed(w4h), fixed(w4v), fixed(b4),
            fixed(w5p), fixed(b5p),
        ],
        out_specs=pl.BlockSpec((tm, OUT_COLS), lambda i: (i, 0)),
    )

    flops = 2 * n_pad * (input_dim * width + width * width + width * head_out
                         + head_out * width + n_vox * width + width * OUT_COLS)
    weight_bytes = sum(int(a.size) * a.dtype.itemsize
                       for a in (w1b, b1, w2b, b2, w3b, b3, w4h, w4v, b4, w5p, b5p))
    cost = pl.CostEstimate(
        flops=flops,
        transcendentals=0,
        bytes_accessed=(n_pad * (input_dim + n_vox) * 2      # bf16 inputs
                        + n_pad * OUT_COLS * 4               # narrow f32 output
                        + weight_bytes),
    )

    out = pl.pallas_call(
        _rgbnet_kernel,
        out_shape=jax.ShapeDtypeStruct((n_pad, OUT_COLS), jnp.float32),
        grid_spec=grid_spec,
        compiler_params=pltpu.CompilerParams(
            dimension_semantics=("parallel",),
            vmem_limit_bytes=32 * 1024 * 1024),
        cost_estimate=cost,
    )(pos_p, vox_p, w1b, b1, w2b, b2, w3b, b3, w4h, w4v, b4, w5p, b5p)

    return out[:N, :n_out]


def init_params(key, input_dim=INPUT_DIM, vox_dim=VOX_DIM, width=WIDTH):
    """Synthetic init matching nn.Linear shapes (weights stored (in, out))."""
    dims = [
        (input_dim, width),          # head[0]
        (width, width),              # head[2]
        (width, width - vox_dim),    # head[4]
        (width, width),              # mid[0]
        (width, 3),                  # rgb
    ]
    params = []
    for (fan_in, fan_out) in dims:
        key, kw, kb = jax.random.split(key, 3)
        bound = 1.0 / jnp.sqrt(fan_in)
        w = jax.random.uniform(kw, (fan_in, fan_out), jnp.float32, -bound, bound)
        b = jax.random.uniform(kb, (1, fan_out), jnp.float32, -bound, bound)
        params += [w, b]
    return tuple(params)


def rgbnet_reference(pos_view, vox, params):
    """Pure-f32 reference (exact PyTorch forward semantics)."""
    (w1, b1, w2, b2, w3, b3, w4, b4, w5, b5) = params
    h = jax.nn.relu(pos_view @ w1 + b1)
    h = jax.nn.relu(h @ w2 + b2)
    h = jax.nn.relu(h @ w3 + b3)
    hid = jnp.concatenate([h, vox], axis=-1)
    mid = jax.nn.relu(hid @ w4 + b4)
    return mid @ w5 + b5


def rgbnet_reference_bf16(pos_view, vox, params):
    """Reference with the same bf16-operand / f32-accum scheme as the kernel."""
    (w1, b1, w2, b2, w3, b3, w4, b4, w5, b5) = params
    bf = lambda a: a.astype(jnp.bfloat16)
    dot = lambda a, b: jnp.dot(bf(a), bf(b), preferred_element_type=jnp.float32)
    h = jax.nn.relu(dot(pos_view, w1) + b1)
    h = jax.nn.relu(dot(h, w2) + b2)
    h = jax.nn.relu(dot(h, w3) + b3)
    hid = jnp.concatenate([h, vox], axis=-1)
    mid = jax.nn.relu(dot(hid, w4) + b4)
    return dot(mid, w5) + b5


if __name__ == "__main__":
    key = jax.random.PRNGKey(0)
    kp, kx, kv = jax.random.split(key, 3)

    N = 600   # deliberately not a tile multiple -> exercises batch padding path
    pos_view = jax.random.normal(kx, (N, INPUT_DIM), jnp.float32)
    vox = jax.random.normal(kv, (N, VOX_DIM), jnp.float32)
    params = init_params(kp)

    forward = jax.jit(rgbnet_forward)
    out = jax.block_until_ready(forward(pos_view, vox, params))
    assert out.shape == (N, 3)

    ref_bf16 = rgbnet_reference_bf16(pos_view, vox, params)
    ref_f32 = rgbnet_reference(pos_view, vox, params)
    assert jnp.allclose(out, ref_bf16, atol=3e-3, rtol=3e-3), \
        "mismatch vs bf16-operand reference"
    assert jnp.allclose(out, ref_f32, atol=5e-2, rtol=5e-2), \
        "mismatch vs f32 reference"

    print("KERNEL_OK")
</pallas_src>

<mosaic_0001>
module attributes {stable_mosaic.version = 11 : i64} {
  func.func @_rgbnet_kernel(%arg0: i32, %arg1: memref<512x32xbf16, #tpu.memory_space<vmem>>, %arg2: memref<512x64xbf16, #tpu.memory_space<vmem>>, %arg3: memref<32x128xbf16, #tpu.memory_space<vmem>>, %arg4: memref<1x128xf32, #tpu.memory_space<vmem>>, %arg5: memref<128x128xbf16, #tpu.memory_space<vmem>>, %arg6: memref<1x128xf32, #tpu.memory_space<vmem>>, %arg7: memref<128x64xbf16, #tpu.memory_space<vmem>>, %arg8: memref<1x64xf32, #tpu.memory_space<vmem>>, %arg9: memref<64x128xbf16, #tpu.memory_space<vmem>>, %arg10: memref<64x128xbf16, #tpu.memory_space<vmem>>, %arg11: memref<1x128xf32, #tpu.memory_space<vmem>>, %arg12: memref<128x8xbf16, #tpu.memory_space<vmem>>, %arg13: memref<1x8xf32, #tpu.memory_space<vmem>>, %arg14: memref<512x8xf32, #tpu.memory_space<vmem>>) attributes {dimension_semantics = [#tpu.dimension_semantics<parallel>], iteration_bounds = array<i64: 2>, scalar_prefetch = 0 : i64, scratch_operands = 0 : i64, tpu.core_type = #tpu.core_type<tc>, window_params = [{transform_indices = @transform_0, window_bounds = array<i64: 512, 32>}, {transform_indices = @transform_1, window_bounds = array<i64: 512, 64>}, {pipeline_mode = #tpu.pipeline_mode<synchronous>, transform_indices = @transform_2, window_bounds = array<i64: 32, 128>}, {pipeline_mode = #tpu.pipeline_mode<synchronous>, transform_indices = @transform_3, window_bounds = array<i64: 1, 128>}, {pipeline_mode = #tpu.pipeline_mode<synchronous>, transform_indices = @transform_4, window_bounds = array<i64: 128, 128>}, {pipeline_mode = #tpu.pipeline_mode<synchronous>, transform_indices = @transform_5, window_bounds = array<i64: 1, 128>}, {pipeline_mode = #tpu.pipeline_mode<synchronous>, transform_indices = @transform_6, window_bounds = array<i64: 128, 64>}, {pipeline_mode = #tpu.pipeline_mode<synchronous>, transform_indices = @transform_7, window_bounds = array<i64: 1, 64>}, {pipeline_mode = #tpu.pipeline_mode<synchronous>, transform_indices = @transform_8, window_bounds = array<i64: 64, 128>}, {pipeline_mode = #tpu.pipeline_mode<synchronous>, transform_indices = @transform_9, window_bounds = array<i64: 64, 128>}, {pipeline_mode = #tpu.pipeline_mode<synchronous>, transform_indices = @transform_10, window_bounds = array<i64: 1, 128>}, {pipeline_mode = #tpu.pipeline_mode<synchronous>, transform_indices = @transform_11, window_bounds = array<i64: 128, 8>}, {pipeline_mode = #tpu.pipeline_mode<synchronous>, transform_indices = @transform_12, window_bounds = array<i64: 1, 8>}, {transform_indices = @transform_13, window_bounds = array<i64: 512, 8>}]} {
    %c0 = arith.constant 0 : index
    %c0_0 = arith.constant 0 : index
    %0 = vector.load %arg1[%c0, %c0_0] : memref<512x32xbf16, #tpu.memory_space<vmem>>, vector<512x32xbf16>
    %c0_1 = arith.constant 0 : index
    %c0_2 = arith.constant 0 : index
    %1 = vector.load %arg2[%c0_1, %c0_2] : memref<512x64xbf16, #tpu.memory_space<vmem>>, vector<512x64xbf16>
    %c0_3 = arith.constant 0 : index
    %c0_4 = arith.constant 0 : index
    %2 = vector.load %arg3[%c0_3, %c0_4] : memref<32x128xbf16, #tpu.memory_space<vmem>>, vector<32x128xbf16>
    %cst = arith.constant dense<0.000000e+00> : vector<512x128xf32>
    %3 = tpu.matmul %0, %2, %cst {dimension_numbers = #tpu.dot_dimension_numbers<[1], [0], [0], [1], [0, 0, 1, 1], [], []>} : vector<512x32xbf16>, vector<32x128xbf16>, vector<512x128xf32> -> vector<512x128xf32>
    %c0_5 = arith.constant 0 : index
    %c0_6 = arith.constant 0 : index
    %4 = vector.load %arg4[%c0_5, %c0_6] : memref<1x128xf32, #tpu.memory_space<vmem>>, vector<1x128xf32>
    %5 = vector.broadcast %4 : vector<1x128xf32> to vector<512x128xf32>
    %6 = arith.addf %3, %5 : vector<512x128xf32>
    %cst_7 = arith.constant 0.000000e+00 : f32
    %7 = vector.broadcast %cst_7 : f32 to vector<512x128xf32>
    %8 = arith.maximumf %6, %7 : vector<512x128xf32>
    %9 = arith.truncf %8 : vector<512x128xf32> to vector<512x128xbf16>
    %c0_8 = arith.constant 0 : index
    %c0_9 = arith.constant 0 : index
    %10 = vector.load %arg5[%c0_8, %c0_9] : memref<128x128xbf16, #tpu.memory_space<vmem>>, vector<128x128xbf16>
    %cst_10 = arith.constant dense<0.000000e+00> : vector<512x128xf32>
    %11 = tpu.matmul %9, %10, %cst_10 {dimension_numbers = #tpu.dot_dimension_numbers<[1], [0], [0], [1], [0, 0, 1, 1], [], []>} : vector<512x128xbf16>, vector<128x128xbf16>, vector<512x128xf32> -> vector<512x128xf32>
    %c0_11 = arith.constant 0 : index
    %c0_12 = arith.constant 0 : index
    %12 = vector.load %arg6[%c0_11, %c0_12] : memref<1x128xf32, #tpu.memory_space<vmem>>, vector<1x128xf32>
    %13 = vector.broadcast %12 : vector<1x128xf32> to vector<512x128xf32>
    %14 = arith.addf %11, %13 : vector<512x128xf32>
    %cst_13 = arith.constant 0.000000e+00 : f32
    %15 = vector.broadcast %cst_13 : f32 to vector<512x128xf32>
    %16 = arith.maximumf %14, %15 : vector<512x128xf32>
    %17 = arith.truncf %16 : vector<512x128xf32> to vector<512x128xbf16>
    %c0_14 = arith.constant 0 : index
    %c0_15 = arith.constant 0 : index
    %18 = vector.load %arg7[%c0_14, %c0_15] : memref<128x64xbf16, #tpu.memory_space<vmem>>, vector<128x64xbf16>
    %cst_16 = arith.constant dense<0.000000e+00> : vector<512x64xf32>
    %19 = tpu.matmul %17, %18, %cst_16 {dimension_numbers = #tpu.dot_dimension_numbers<[1], [0], [0], [1], [0, 0, 1, 1], [], []>} : vector<512x128xbf16>, vector<128x64xbf16>, vector<512x64xf32> -> vector<512x64xf32>
    %c0_17 = arith.constant 0 : index
    %c0_18 = arith.constant 0 : index
    %20 = vector.load %arg8[%c0_17, %c0_18] : memref<1x64xf32, #tpu.memory_space<vmem>>, vector<1x64xf32>
    %21 = vector.broadcast %20 : vector<1x64xf32> to vector<512x64xf32>
    %22 = arith.addf %19, %21 : vector<512x64xf32>
    %cst_19 = arith.constant 0.000000e+00 : f32
    %23 = vector.broadcast %cst_19 : f32 to vector<512x64xf32>
    %24 = arith.maximumf %22, %23 : vector<512x64xf32>
    %25 = arith.truncf %24 : vector<512x64xf32> to vector<512x64xbf16>
    %c0_20 = arith.constant 0 : index
    %c0_21 = arith.constant 0 : index
    %26 = vector.load %arg9[%c0_20, %c0_21] : memref<64x128xbf16, #tpu.memory_space<vmem>>, vector<64x128xbf16>
    %cst_22 = arith.constant dense<0.000000e+00> : vector<512x128xf32>
    %27 = tpu.matmul %25, %26, %cst_22 {dimension_numbers = #tpu.dot_dimension_numbers<[1], [0], [0], [1], [0, 0, 1, 1], [], []>} : vector<512x64xbf16>, vector<64x128xbf16>, vector<512x128xf32> -> vector<512x128xf32>
    %c0_23 = arith.constant 0 : index
    %c0_24 = arith.constant 0 : index
    %28 = vector.load %arg10[%c0_23, %c0_24] : memref<64x128xbf16, #tpu.memory_space<vmem>>, vector<64x128xbf16>
    %cst_25 = arith.constant dense<0.000000e+00> : vector<512x128xf32>
    %29 = tpu.matmul %1, %28, %cst_25 {dimension_numbers = #tpu.dot_dimension_numbers<[1], [0], [0], [1], [0, 0, 1, 1], [], []>} : vector<512x64xbf16>, vector<64x128xbf16>, vector<512x128xf32> -> vector<512x128xf32>
    %30 = arith.addf %27, %29 : vector<512x128xf32>
    %c0_26 = arith.constant 0 : index
    %c0_27 = arith.constant 0 : index
    %31 = vector.load %arg11[%c0_26, %c0_27] : memref<1x128xf32, #tpu.memory_space<vmem>>, vector<1x128xf32>
    %32 = vector.broadcast %31 : vector<1x128xf32> to vector<512x128xf32>
    %33 = arith.addf %30, %32 : vector<512x128xf32>
    %cst_28 = arith.constant 0.000000e+00 : f32
    %34 = vector.broadcast %cst_28 : f32 to vector<512x128xf32>
    %35 = arith.maximumf %33, %34 : vector<512x128xf32>
    %36 = arith.truncf %35 : vector<512x128xf32> to vector<512x128xbf16>
    %c0_29 = arith.constant 0 : index
    %c0_30 = arith.constant 0 : index
    %37 = vector.load %arg12[%c0_29, %c0_30] : memref<128x8xbf16, #tpu.memory_space<vmem>>, vector<128x8xbf16>
    %cst_31 = arith.constant dense<0.000000e+00> : vector<512x8xf32>
    %38 = tpu.matmul %36, %37, %cst_31 {dimension_numbers = #tpu.dot_dimension_numbers<[1], [0], [0], [1], [0, 0, 1, 1], [], []>} : vector<512x128xbf16>, vector<128x8xbf16>, vector<512x8xf32> -> vector<512x8xf32>
    %c0_32 = arith.constant 0 : index
    %c0_33 = arith.constant 0 : index
    %39 = vector.load %arg13[%c0_32, %c0_33] : memref<1x8xf32, #tpu.memory_space<vmem>>, vector<1x8xf32>
    %40 = vector.broadcast %39 : vector<1x8xf32> to vector<512x8xf32>
    %41 = arith.addf %38, %40 : vector<512x8xf32>
    %c0_34 = arith.constant 0 : index
    %c0_35 = arith.constant 0 : index
    %42 = vector.load %arg14[%c0_34, %c0_35] : memref<512x8xf32, #tpu.memory_space<vmem>>, vector<512x8xf32>
    tpu.vector_store %arg14[%c0_34, %c0_35], %41 {strides = array<i32>} : memref<512x8xf32, #tpu.memory_space<vmem>>, vector<512x8xf32>,
    return
  }
  func.func @transform_0(%arg0: i32) -> (i32, i32) {
    %c0_i32 = arith.constant 0 : i32
    %c0_i32_0 = arith.constant 0 : i32
    return %arg0, %c0_i32 : i32, i32
  }
  func.func @transform_1(%arg0: i32) -> (i32, i32) {
    %c0_i32 = arith.constant 0 : i32
    %c0_i32_0 = arith.constant 0 : i32
    return %arg0, %c0_i32 : i32, i32
  }
  func.func @transform_2(%arg0: i32) -> (i32, i32) {
    %c0_i32 = arith.constant 0 : i32
    %c0_i32_0 = arith.constant 0 : i32
    %c0_i32_1 = arith.constant 0 : i32
    return %c0_i32, %c0_i32_0 : i32, i32
  }
  func.func @transform_3(%arg0: i32) -> (i32, i32) {
    %c0_i32 = arith.constant 0 : i32
    %c0_i32_0 = arith.constant 0 : i32
    %c0_i32_1 = arith.constant 0 : i32
    return %c0_i32, %c0_i32_0 : i32, i32
  }
  func.func @transform_4(%arg0: i32) -> (i32, i32) {
    %c0_i32 = arith.constant 0 : i32
    %c0_i32_0 = arith.constant 0 : i32
    %c0_i32_1 = arith.constant 0 : i32
    return %c0_i32, %c0_i32_0 : i32, i32
  }
  func.func @transform_5(%arg0: i32) -> (i32, i32) {
    %c0_i32 = arith.constant 0 : i32
    %c0_i32_0 = arith.constant 0 : i32
    %c0_i32_1 = arith.constant 0 : i32
    return %c0_i32, %c0_i32_0 : i32, i32
  }
  func.func @transform_6(%arg0: i32) -> (i32, i32) {
    %c0_i32 = arith.constant 0 : i32
    %c0_i32_0 = arith.constant 0 : i32
    %c0_i32_1 = arith.constant 0 : i32
    return %c0_i32, %c0_i32_0 : i32, i32
  }
  func.func @transform_7(%arg0: i32) -> (i32, i32) {
    %c0_i32 = arith.constant 0 : i32
    %c0_i32_0 = arith.constant 0 : i32
    %c0_i32_1 = arith.constant 0 : i32
    return %c0_i32, %c0_i32_0 : i32, i32
  }
  func.func @transform_8(%arg0: i32) -> (i32, i32) {
    %c0_i32 = arith.constant 0 : i32
    %c0_i32_0 = arith.constant 0 : i32
    %c0_i32_1 = arith.constant 0 : i32
    return %c0_i32, %c0_i32_0 : i32, i32
  }
  func.func @transform_9(%arg0: i32) -> (i32, i32) {
    %c0_i32 = arith.constant 0 : i32
    %c0_i32_0 = arith.constant 0 : i32
    %c0_i32_1 = arith.constant 0 : i32
    return %c0_i32, %c0_i32_0 : i32, i32
  }
  func.func @transform_10(%arg0: i32) -> (i32, i32) {
    %c0_i32 = arith.constant 0 : i32
    %c0_i32_0 = arith.constant 0 : i32
    %c0_i32_1 = arith.constant 0 : i32
    return %c0_i32, %c0_i32_0 : i32, i32
  }
  func.func @transform_11(%arg0: i32) -> (i32, i32) {
    %c0_i32 = arith.constant 0 : i32
    %c0_i32_0 = arith.constant 0 : i32
    %c0_i32_1 = arith.constant 0 : i32
    return %c0_i32, %c0_i32_0 : i32, i32
  }
  func.func @transform_12(%arg0: i32) -> (i32, i32) {
    %c0_i32 = arith.constant 0 : i32
    %c0_i32_0 = arith.constant 0 : i32
    %c0_i32_1 = arith.constant 0 : i32
    return %c0_i32, %c0_i32_0 : i32, i32
  }
  func.func @transform_13(%arg0: i32) -> (i32, i32) {
    %c0_i32 = arith.constant 0 : i32
    %c0_i32_0 = arith.constant 0 : i32
    return %arg0, %c0_i32 : i32, i32
  }
}

</mosaic_0001>

<llo_original>
// kernel: rgbnet_forward.1
$region0: #{rgbnet_forward.1}
  #allocation0 [shape = 'u32[]', space=smem, size = 0x4, offset = 0x4, fixed_abs, tag = 'smem constant byte address 0x4 - core index']
  #allocation1 [shape = 'u32[144,128]{1,0:T(1,128)}', space=vmem, size = 0x12000, scoped, tag = 'internal scratch']
  %s0 = inlined_call_operand.vmem [shape: bf16[1024,32], index: 0, kind: input, shape index: {}]
  %s1 = inlined_call_operand.vmem [shape: bf16[1024,64], index: 1, kind: input, shape index: {}]
  %s2 = inlined_call_operand.vmem [shape: bf16[32,128], index: 2, kind: input, shape index: {}]
  %s3 = inlined_call_operand.vmem [shape: f32[1,128], index: 3, kind: input, shape index: {}]
  %s4 = inlined_call_operand.vmem [shape: bf16[128,128], index: 4, kind: input, shape index: {}]
  %s5 = inlined_call_operand.vmem [shape: f32[1,128], index: 5, kind: input, shape index: {}]
  %s6 = inlined_call_operand.vmem [shape: bf16[128,64], index: 6, kind: input, shape index: {}]
  %s7 = inlined_call_operand.vmem [shape: f32[1,64], index: 7, kind: input, shape index: {}]
  %s8 = inlined_call_operand.vmem [shape: bf16[64,128], index: 8, kind: input, shape index: {}]
  %s9 = inlined_call_operand.vmem [shape: bf16[64,128], index: 9, kind: input, shape index: {}]
  %s10 = inlined_call_operand.vmem [shape: f32[1,128], index: 10, kind: input, shape index: {}]
  %s11 = inlined_call_operand.vmem [shape: bf16[128,8], index: 11, kind: input, shape index: {}]
  %s12 = inlined_call_operand.vmem [shape: f32[1,8], index: 12, kind: input, shape index: {}]
  %s13 = inlined_call_operand.vmem [shape: f32[1024,8], index: 13, kind: output, shape index: {}]
  %s14 = sld [smem:[#allocation0]]
  $region85: #{rgbnet_forward.1} parent=0
    _
  %s16 = ssub.s32 1, %s14
  %s17 = scalar_select 0, %s16, %s14
  loop: start=0, step=1, limit=4
  $region2: #{rgbnet_forward.1} parent=0 // loop_pre_header
    _
  $region3: #{rgbnet_forward.1} parent=0 // loop_header
    %s19 = sphi 0, %s23
    %p20 = scmp.ge.s32.totalorder %s19, 4
    %s29 = sphi 0, %s31
    %s32 = sphi 0, %s29
    %s33 = sphi 0, %s32
    %s49 = sphi 0, %s33
    %s55 = sphi 0, %s57
    %s58 = sphi 0, %s55
    %s59 = sphi 0, %s58
    %s75 = sphi 0, %s59
    %s79 = sphi 0, %s79
    %s81 = sphi 0, %s79
    %s82 = sphi 0, %s81
    %s96 = sphi 0, %s82
    %s100 = sphi 0, %s100
    %s102 = sphi 0, %s100
    %s103 = sphi 0, %s102
    %s117 = sphi 0, %s103
    %s121 = sphi 0, %s121
    %s123 = sphi 0, %s121
    %s124 = sphi 0, %s123
    %s138 = sphi 0, %s124
    %s142 = sphi 0, %s142
    %s144 = sphi 0, %s142
    %s145 = sphi 0, %s144
    %s159 = sphi 0, %s145
    %s163 = sphi 0, %s163
    %s165 = sphi 0, %s163
    %s166 = sphi 0, %s165
    %s180 = sphi 0, %s166
    %s184 = sphi 0, %s184
    %s186 = sphi 0, %s184
    %s187 = sphi 0, %s186
    %s201 = sphi 0, %s187
    %s205 = sphi 0, %s205
    %s207 = sphi 0, %s205
    %s208 = sphi 0, %s207
    %s222 = sphi 0, %s208
    %s226 = sphi 0, %s226
    %s228 = sphi 0, %s226
    %s229 = sphi 0, %s228
    %s243 = sphi 0, %s229
    %s247 = sphi 0, %s247
    %s249 = sphi 0, %s247
    %s250 = sphi 0, %s249
    %s264 = sphi 0, %s250
    %s268 = sphi 0, %s268
    %s270 = sphi 0, %s268
    %s271 = sphi 0, %s270
    %s285 = sphi 0, %s271
    %s289 = sphi 0, %s289
    %s291 = sphi 0, %s289
    %s292 = sphi 0, %s291
    %s306 = sphi 0, %s292
    %s312 = sphi 0, %s314
    %s315 = sphi 0, %s312
    %s316 = sphi 0, %s315
    %s332 = sphi 0, %s316
  $region4: #{rgbnet_forward.1} parent=0 // loop_header_branch
    %22 = sbr.rel (%p20) target = $region8
  $region5: #{rgbnet_forward.1} parent=0 // loop_body
    %s24 = ssub.s32 %s19, 1
    %s25 = ssub.s32 %s19, 2
    %s26 = sadd.s32 %s19, 1
    %s27 = ssub.s32 %s19, %s26
    %p28 = scmp.eq.s32.totalorder %s27, 0
    %s30 = sadd.s32 %s29, 1
    %s31 = scalar_select %p28, %s29, %s30
    %p34 = pneg %p28
    %p35 = scmp.eq.s32.totalorder %s19, 1
    %p36 = por %p34, %p35
    %p37 = scmp.ne.s32.totalorder %s29, %s32
    %p38 = scmp.eq.s32.totalorder %s19, 0
    %p39 = por %p37, %p38
    %p40 = scmp.ne.s32.totalorder %s29, %s32
    %p41 = scmp.eq.s32.totalorder %s24, 1
    %p42 = por %p40, %p41
    %p43 = scmp.ne.s32.totalorder %s32, %s33
    %p44 = scmp.eq.s32.totalorder %s24, 0
    %p45 = por %p43, %p44
    %p46 = scmp.ne.s32.totalorder %s32, %s33
    %p47 = scmp.eq.s32.totalorder %s25, 1
    %p48 = por %p46, %p47
    %p50 = scmp.ne.s32.totalorder %s33, %s49
    %p51 = scmp.eq.s32.totalorder %s25, 0
    %p52 = por %p50, %p51
    %s53 = ssub.s32 %s19, %s26
    %p54 = scmp.eq.s32.totalorder %s53, 0
    %s56 = sadd.s32 %s55, 1
    %s57 = scalar_select %p54, %s55, %s56
    %p60 = pneg %p54
    %p61 = scmp.eq.s32.totalorder %s19, 1
    %p62 = por %p60, %p61
    %p63 = scmp.ne.s32.totalorder %s55, %s58
    %p64 = scmp.eq.s32.totalorder %s19, 0
    %p65 = por %p63, %p64
    %p66 = scmp.ne.s32.totalorder %s55, %s58
    %p67 = scmp.eq.s32.totalorder %s24, 1
    %p68 = por %p66, %p67
    %p69 = scmp.ne.s32.totalorder %s58, %s59
    %p70 = scmp.eq.s32.totalorder %s24, 0
    %p71 = por %p69, %p70
    %p72 = scmp.ne.s32.totalorder %s58, %s59
    %p73 = scmp.eq.s32.totalorder %s25, 1
    %p74 = por %p72, %p73
    %p76 = scmp.ne.s32.totalorder %s59, %s75
    %p77 = scmp.eq.s32.totalorder %s25, 0
    %p78 = por %p76, %p77
    %s80 = sadd.s32 %s79, 1
    %p83 = scmp.eq.s32.totalorder %s19, 1
    %p84 = scmp.ne.s32.totalorder %s79, %s81
    %p85 = scmp.eq.s32.totalorder %s19, 0
    %p86 = por %p84, %p85
    %p87 = scmp.ne.s32.totalorder %s79, %s81
    %p88 = scmp.eq.s32.totalorder %s24, 1
    %p89 = por %p87, %p88
    %p90 = scmp.ne.s32.totalorder %s81, %s82
    %p91 = scmp.eq.s32.totalorder %s24, 0
    %p92 = por %p90, %p91
    %p93 = scmp.ne.s32.totalorder %s81, %s82
    %p94 = scmp.eq.s32.totalorder %s25, 1
    %p95 = por %p93, %p94
    %p97 = scmp.ne.s32.totalorder %s82, %s96
    %p98 = scmp.eq.s32.totalorder %s25, 0
    %p99 = por %p97, %p98
    %s101 = sadd.s32 %s100, 1
    %p104 = scmp.eq.s32.totalorder %s19, 1
    %p105 = scmp.ne.s32.totalorder %s100, %s102
    %p106 = scmp.eq.s32.totalorder %s19, 0
    %p107 = por %p105, %p106
    %p108 = scmp.ne.s32.totalorder %s100, %s102
    %p109 = scmp.eq.s32.totalorder %s24, 1
    %p110 = por %p108, %p109
    %p111 = scmp.ne.s32.totalorder %s102, %s103
    %p112 = scmp.eq.s32.totalorder %s24, 0
    %p113 = por %p111, %p112
    %p114 = scmp.ne.s32.totalorder %s102, %s103
    %p115 = scmp.eq.s32.totalorder %s25, 1
    %p116 = por %p114, %p115
    %p118 = scmp.ne.s32.totalorder %s103, %s117
    %p119 = scmp.eq.s32.totalorder %s25, 0
    %p120 = por %p118, %p119
    %s122 = sadd.s32 %s121, 1
    %p125 = scmp.eq.s32.totalorder %s19, 1
    %p126 = scmp.ne.s32.totalorder %s121, %s123
    %p127 = scmp.eq.s32.totalorder %s19, 0
    %p128 = por %p126, %p127
    %p129 = scmp.ne.s32.totalorder %s121, %s123
    %p130 = scmp.eq.s32.totalorder %s24, 1
    %p131 = por %p129, %p130
    %p132 = scmp.ne.s32.totalorder %s123, %s124
    %p133 = scmp.eq.s32.totalorder %s24, 0
    %p134 = por %p132, %p133
    %p135 = scmp.ne.s32.totalorder %s123, %s124
    %p136 = scmp.eq.s32.totalorder %s25, 1
    %p137 = por %p135, %p136
    %p139 = scmp.ne.s32.totalorder %s124, %s138
    %p140 = scmp.eq.s32.totalorder %s25, 0
    %p141 = por %p139, %p140
    %s143 = sadd.s32 %s142, 1
    %p146 = scmp.eq.s32.totalorder %s19, 1
    %p147 = scmp.ne.s32.totalorder %s142, %s144
    %p148 = scmp.eq.s32.totalorder %s19, 0
    %p149 = por %p147, %p148
    %p150 = scmp.ne.s32.totalorder %s142, %s144
    %p151 = scmp.eq.s32.totalorder %s24, 1
    %p152 = por %p150, %p151
    %p153 = scmp.ne.s32.totalorder %s144, %s145
    %p154 = scmp.eq.s32.totalorder %s24, 0
    %p155 = por %p153, %p154
    %p156 = scmp.ne.s32.totalorder %s144, %s145
    %p157 = scmp.eq.s32.totalorder %s25, 1
    %p158 = por %p156, %p157
    %p160 = scmp.ne.s32.totalorder %s145, %s159
    %p161 = scmp.eq.s32.totalorder %s25, 0
    %p162 = por %p160, %p161
    %s164 = sadd.s32 %s163, 1
    %p167 = scmp.eq.s32.totalorder %s19, 1
    %p168 = scmp.ne.s32.totalorder %s163, %s165
    %p169 = scmp.eq.s32.totalorder %s19, 0
    %p170 = por %p168, %p169
    %p171 = scmp.ne.s32.totalorder %s163, %s165
    %p172 = scmp.eq.s32.totalorder %s24, 1
    %p173 = por %p171, %p172
    %p174 = scmp.ne.s32.totalorder %s165, %s166
    %p175 = scmp.eq.s32.totalorder %s24, 0
    %p176 = por %p174, %p175
    %p177 = scmp.ne.s32.totalorder %s165, %s166
    %p178 = scmp.eq.s32.totalorder %s25, 1
    %p179 = por %p177, %p178
    %p181 = scmp.ne.s32.totalorder %s166, %s180
    %p182 = scmp.eq.s32.totalorder %s25, 0
    %p183 = por %p181, %p182
    %s185 = sadd.s32 %s184, 1
    %p188 = scmp.eq.s32.totalorder %s19, 1
    %p189 = scmp.ne.s32.totalorder %s184, %s186
    %p190 = scmp.eq.s32.totalorder %s19, 0
    %p191 = por %p189, %p190
    %p192 = scmp.ne.s32.totalorder %s184, %s186
    %p193 = scmp.eq.s32.totalorder %s24, 1
    %p194 = por %p192, %p193
    %p195 = scmp.ne.s32.totalorder %s186, %s187
    %p196 = scmp.eq.s32.totalorder %s24, 0
    %p197 = por %p195, %p196
    %p198 = scmp.ne.s32.totalorder %s186, %s187
    %p199 = scmp.eq.s32.totalorder %s25, 1
    %p200 = por %p198, %p199
    %p202 = scmp.ne.s32.totalorder %s187, %s201
    %p203 = scmp.eq.s32.totalorder %s25, 0
    %p204 = por %p202, %p203
    %s206 = sadd.s32 %s205, 1
    %p209 = scmp.eq.s32.totalorder %s19, 1
    %p210 = scmp.ne.s32.totalorder %s205, %s207
    %p211 = scmp.eq.s32.totalorder %s19, 0
    %p212 = por %p210, %p211
    %p213 = scmp.ne.s32.totalorder %s205, %s207
    %p214 = scmp.eq.s32.totalorder %s24, 1
    %p215 = por %p213, %p214
    %p216 = scmp.ne.s32.totalorder %s207, %s208
    %p217 = scmp.eq.s32.totalorder %s24, 0
    %p218 = por %p216, %p217
    %p219 = scmp.ne.s32.totalorder %s207, %s208
    %p220 = scmp.eq.s32.totalorder %s25, 1
    %p221 = por %p219, %p220
    %p223 = scmp.ne.s32.totalorder %s208, %s222
    %p224 = scmp.eq.s32.totalorder %s25, 0
    %p225 = por %p223, %p224
    %s227 = sadd.s32 %s226, 1
    %p230 = scmp.eq.s32.totalorder %s19, 1
    %p231 = scmp.ne.s32.totalorder %s226, %s228
    %p232 = scmp.eq.s32.totalorder %s19, 0
    %p233 = por %p231, %p232
    %p234 = scmp.ne.s32.totalorder %s226, %s228
    %p235 = scmp.eq.s32.totalorder %s24, 1
    %p236 = por %p234, %p235
    %p237 = scmp.ne.s32.totalorder %s228, %s229
    %p238 = scmp.eq.s32.totalorder %s24, 0
    %p239 = por %p237, %p238
    %p240 = scmp.ne.s32.totalorder %s228, %s229
    %p241 = scmp.eq.s32.totalorder %s25, 1
    %p242 = por %p240, %p241
    %p244 = scmp.ne.s32.totalorder %s229, %s243
    %p245 = scmp.eq.s32.totalorder %s25, 0
    %p246 = por %p244, %p245
    %s248 = sadd.s32 %s247, 1
    %p251 = scmp.eq.s32.totalorder %s19, 1
    %p252 = scmp.ne.s32.totalorder %s247, %s249
    %p253 = scmp.eq.s32.totalorder %s19, 0
    %p254 = por %p252, %p253
    %p255 = scmp.ne.s32.totalorder %s247, %s249
    %p256 = scmp.eq.s32.totalorder %s24, 1
    %p257 = por %p255, %p256
    %p258 = scmp.ne.s32.totalorder %s249, %s250
    %p259 = scmp.eq.s32.totalorder %s24, 0
    %p260 = por %p258, %p259
    %p261 = scmp.ne.s32.totalorder %s249, %s250
    %p262 = scmp.eq.s32.totalorder %s25, 1
    %p263 = por %p261, %p262
    %p265 = scmp.ne.s32.totalorder %s250, %s264
    %p266 = scmp.eq.s32.totalorder %s25, 0
    %p267 = por %p265, %p266
    %s269 = sadd.s32 %s268, 1
    %p272 = scmp.eq.s32.totalorder %s19, 1
    %p273 = scmp.ne.s32.totalorder %s268, %s270
    %p274 = scmp.eq.s32.totalorder %s19, 0
    %p275 = por %p273, %p274
    %p276 = scmp.ne.s32.totalorder %s268, %s270
    %p277 = scmp.eq.s32.totalorder %s24, 1
    %p278 = por %p276, %p277
    %p279 = scmp.ne.s32.totalorder %s270, %s271
    %p280 = scmp.eq.s32.totalorder %s24, 0
    %p281 = por %p279, %p280
    %p282 = scmp.ne.s32.totalorder %s270, %s271
    %p283 = scmp.eq.s32.totalorder %s25, 1
    %p284 = por %p282, %p283
    %p286 = scmp.ne.s32.totalorder %s271, %s285
    %p287 = scmp.eq.s32.totalorder %s25, 0
    %p288 = por %p286, %p287
    %s290 = sadd.s32 %s289, 1
    %p293 = scmp.eq.s32.totalorder %s19, 1
    %p294 = scmp.ne.s32.totalorder %s289, %s291
    %p295 = scmp.eq.s32.totalorder %s19, 0
    %p296 = por %p294, %p295
    %p297 = scmp.ne.s32.totalorder %s289, %s291
    %p298 = scmp.eq.s32.totalorder %s24, 1
    %p299 = por %p297, %p298
    %p300 = scmp.ne.s32.totalorder %s291, %s292
    %p301 = scmp.eq.s32.totalorder %s24, 0
    %p302 = por %p300, %p301
    %p303 = scmp.ne.s32.totalorder %s291, %s292
    %p304 = scmp.eq.s32.totalorder %s25, 1
    %p305 = por %p303, %p304
    %p307 = scmp.ne.s32.totalorder %s292, %s306
    %p308 = scmp.eq.s32.totalorder %s25, 0
    %p309 = por %p307, %p308
    %s310 = ssub.s32 %s19, %s26
    %p311 = scmp.eq.s32.totalorder %s310, 0
    %s313 = sadd.s32 %s312, 1
    %s314 = scalar_select %p311, %s312, %s313
    %p317 = pneg %p311
    %p318 = scmp.eq.s32.totalorder %s19, 1
    %p319 = por %p317, %p318
    %p320 = scmp.ne.s32.totalorder %s312, %s315
    %p321 = scmp.eq.s32.totalorder %s19, 0
    %p322 = por %p320, %p321
    %p323 = scmp.ne.s32.totalorder %s312, %s315
    %p324 = scmp.eq.s32.totalorder %s24, 1
    %p325 = por %p323, %p324
    %p326 = scmp.ne.s32.totalorder %s315, %s316
    %p327 = scmp.eq.s32.totalorder %s24, 0
    %p328 = por %p326, %p327
    %p329 = scmp.ne.s32.totalorder %s315, %s316
    %p330 = scmp.eq.s32.totalorder %s25, 1
    %p331 = por %p329, %p330
    %p333 = scmp.ne.s32.totalorder %s316, %s332
    %p334 = scmp.eq.s32.totalorder %s25, 0
    %p335 = por %p333, %p334
    %p336 = scmp.le.s32.totalorder 1, %s19
    %p337 = scmp.lt.s32.totalorder %s19, 3
    %p338 = pnand %p336, %p337
    %p339 = pneg %p338
    // Predicated region
    $region9: #{rgbnet_forward.1} parent=5 // pred_check
      _
    $region10: #{rgbnet_forward.1} parent=5 // pred_check_branch
      %341 = sbr.rel (%p338) target = $region12
    $region11: #{rgbnet_forward.1} parent=5 // pred_region
      %s342 = ssub.s32 %s19, 1
      // Predicated region
      $region13: #{rgbnet_forward.1} parent=11 // pred_check
        %p343 = pneg %p92
      $region14: #{rgbnet_forward.1} parent=11 // pred_check_branch
        %345 = sbr.rel (%p343) target = $region16
      $region15: #{rgbnet_forward.1} parent=11 // pred_region
        _
      $region16: #{rgbnet_forward.1} parent=11 // pred_fallthru
        _
      // Predicated region
      $region17: #{rgbnet_forward.1} parent=11 // pred_check
        %p346 = pneg %p113
      $region18: #{rgbnet_forward.1} parent=11 // pred_check_branch
        %348 = sbr.rel (%p346) target = $region20
      $region19: #{rgbnet_forward.1} parent=11 // pred_region
        _
      $region20: #{rgbnet_forward.1} parent=11 // pred_fallthru
        _
      // Predicated region
      $region21: #{rgbnet_forward.1} parent=11 // pred_check
        %p349 = pneg %p134
      $region22: #{rgbnet_forward.1} parent=11 // pred_check_branch
        %351 = sbr.rel (%p349) target = $region24
      $region23: #{rgbnet_forward.1} parent=11 // pred_region
        _
      $region24: #{rgbnet_forward.1} parent=11 // pred_fallthru
        _
      // Predicated region
      $region25: #{rgbnet_forward.1} parent=11 // pred_check
        %p352 = pneg %p155
      $region26: #{rgbnet_forward.1} parent=11 // pred_check_branch
        %354 = sbr.rel (%p352) target = $region28
      $region27: #{rgbnet_forward.1} parent=11 // pred_region
        _
      $region28: #{rgbnet_forward.1} parent=11 // pred_fallthru
        _
      // Predicated region
      $region29: #{rgbnet_forward.1} parent=11 // pred_check
        %p355 = pneg %p176
      $region30: #{rgbnet_forward.1} parent=11 // pred_check_branch
        %357 = sbr.rel (%p355) target = $region32
      $region31: #{rgbnet_forward.1} parent=11 // pred_region
        _
      $region32: #{rgbnet_forward.1} parent=11 // pred_fallthru
        _
      // Predicated region
      $region33: #{rgbnet_forward.1} parent=11 // pred_check
        %p358 = pneg %p197
      $region34: #{rgbnet_forward.1} parent=11 // pred_check_branch
        %360 = sbr.rel (%p358) target = $region36
      $region35: #{rgbnet_forward.1} parent=11 // pred_region
        _
      $region36: #{rgbnet_forward.1} parent=11 // pred_fallthru
        _
      // Predicated region
      $region37: #{rgbnet_forward.1} parent=11 // pred_check
        %p361 = pneg %p218
      $region38: #{rgbnet_forward.1} parent=11 // pred_check_branch
        %363 = sbr.rel (%p361) target = $region40
      $region39: #{rgbnet_forward.1} parent=11 // pred_region
        _
      $region40: #{rgbnet_forward.1} parent=11 // pred_fallthru
        _
      // Predicated region
      $region41: #{rgbnet_forward.1} parent=11 // pred_check
        %p364 = pneg %p239
      $region42: #{rgbnet_forward.1} parent=11 // pred_check_branch
        %366 = sbr.rel (%p364) target = $region44
      $region43: #{rgbnet_forward.1} parent=11 // pred_region
        _
      $region44: #{rgbnet_forward.1} parent=11 // pred_fallthru
        _
      // Predicated region
      $region45: #{rgbnet_forward.1} parent=11 // pred_check
        %p367 = pneg %p260
      $region46: #{rgbnet_forward.1} parent=11 // pred_check_branch
        %369 = sbr.rel (%p367) target = $region48
      $region47: #{rgbnet_forward.1} parent=11 // pred_region
        _
      $region48: #{rgbnet_forward.1} parent=11 // pred_fallthru
        _
      // Predicated region
      $region49: #{rgbnet_forward.1} parent=11 // pred_check
        %p370 = pneg %p281
      $region50: #{rgbnet_forward.1} parent=11 // pred_check_branch
        %372 = sbr.rel (%p370) target = $region52
      $region51: #{rgbnet_forward.1} parent=11 // pred_region
        _
      $region52: #{rgbnet_forward.1} parent=11 // pred_fallthru
        _
      // Predicated region
      $region53: #{rgbnet_forward.1} parent=11 // pred_check
        %p373 = pneg %p302
      $region54: #{rgbnet_forward.1} parent=11 // pred_check_branch
        %375 = sbr.rel (%p373) target = $region56
      $region55: #{rgbnet_forward.1} parent=11 // pred_region
        _
      $region56: #{rgbnet_forward.1} parent=11 // pred_fallthru
        _
    $region12: #{rgbnet_forward.1} parent=5 // pred_fallthru
      _
    %p376 = scmp.lt.s32.totalorder %s19, 2
    // Predicated region
    $region57: #{rgbnet_forward.1} parent=5 // pred_check
      %p377 = pneg %p376
    $region58: #{rgbnet_forward.1} parent=5 // pred_check_branch
      %379 = sbr.rel (%p377) target = $region60
    $region59: #{rgbnet_forward.1} parent=5 // pred_region
      // Predicated region
      $region61: #{rgbnet_forward.1} parent=59 // pred_check
        %p380 = pneg %p39
      $region62: #{rgbnet_forward.1} parent=59 // pred_check_branch
        %382 = sbr.rel (%p380) target = $region64
      $region63: #{rgbnet_forward.1} parent=59 // pred_region
        %s383 = smul.u32 64, %s19
        %p384 = scmp.lt.s32.totalorder %s383, 127
        %s385 = scalar_select %p384, %s383, 127
        %s386 = smul.addr %s385, 4
        %s387 = scalar_lea.vmem %s0, %s386
        %s388 = smul.u32 64, %s19
      $region64: #{rgbnet_forward.1} parent=59 // pred_fallthru
        _
      // Predicated region
      $region65: #{rgbnet_forward.1} parent=59 // pred_check
        %p389 = pneg %p65
      $region66: #{rgbnet_forward.1} parent=59 // pred_check_branch
        %391 = sbr.rel (%p389) target = $region68
      $region67: #{rgbnet_forward.1} parent=59 // pred_region
        %s392 = smul.u32 64, %s19
        %p393 = scmp.lt.s32.totalorder %s392, 127
        %s394 = scalar_select %p393, %s392, 127
        %s395 = smul.addr %s394, 4
        %s396 = scalar_lea.vmem %s1, %s395
        %s397 = smul.u32 64, %s19
      $region68: #{rgbnet_forward.1} parent=59 // pred_fallthru
        _
    $region60: #{rgbnet_forward.1} parent=5 // pred_fallthru
      _
    %p398 = scmp.le.s32.totalorder 1, %s19
    %p399 = scmp.lt.s32.totalorder %s19, 3
    %p400 = pnand %p398, %p399
    %p401 = pneg %p400
    // Predicated region
    $region69: #{rgbnet_forward.1} parent=5 // pred_check
      _
    $region70: #{rgbnet_forward.1} parent=5 // pred_check_branch
      %403 = sbr.rel (%p400) target = $region72
    $region71: #{rgbnet_forward.1} parent=5 // pred_region
      %s404 = ssub.s32 %s19, 1
      %s405 = smul.u32 64, %s24
      %p406 = scmp.lt.s32.totalorder %s405, 127
      %s407 = scalar_select %p406, %s405, 127
      %s408 = smul.addr %s407, 4
      %s409 = scalar_lea.vmem %s0, %s408
      %p410 = pneg %p45
      %p411 = pneg %p42
      %s412 = smul.u32 64, %s24
      %p413 = scmp.lt.s32.totalorder %s412, 127
      %s414 = scalar_select %p413, %s412, 127
      %s415 = smul.addr %s414, 4
      %s416 = scalar_lea.vmem %s1, %s415
      %p417 = pneg %p71
      %p418 = pneg %p68
      %p419 = pneg %p92
      %p420 = pneg %p89
      %p421 = pneg %p113
      %p422 = pneg %p110
      %p423 = pneg %p134
      %p424 = pneg %p131
      %p425 = pneg %p155
      %p426 = pneg %p152
      %p427 = pneg %p176
      %p428 = pneg %p173
      %p429 = pneg %p197
      %p430 = pneg %p194
      %p431 = pneg %p218
      %p432 = pneg %p215
      %p433 = pneg %p239
      %p434 = pneg %p236
      %p435 = pneg %p260
      %p436 = pneg %p257
      %p437 = pneg %p281
      %p438 = pneg %p278
      %p439 = pneg %p302
      %p440 = pneg %p299
      %p441 = pneg %p328
      %p442 = pneg %p325
      %s443 = smul.u32 64, %s24
      %p444 = scmp.lt.s32.totalorder %s443, 127
      %s445 = scalar_select %p444, %s443, 127
      %s446 = smul.addr %s445, 8
      %s447 = scalar_lea.vmem %s13, %s446
      %s448 = smul.u32 64, %s24
      %p449 = scmp.lt.s32.totalorder %s448, 127
      %s450 = scalar_select %p449, %s448, 127
      %s451 = smul.addr %s450, 4
      %s452 = scalar_lea.vmem %s0, %s451
      %s453 = smul.u32 64, %s24
      %s454 = smul.u32 64, %s24
      %p455 = scmp.lt.s32.totalorder %s454, 127
      %s456 = scalar_select %p455, %s454, 127
      %s457 = smul.addr %s456, 4
      %s458 = scalar_lea.vmem %s1, %s457
      %s459 = smul.u32 64, %s24
      %s460 = smul.u32 64, %s24
      %p461 = scmp.lt.s32.totalorder %s460, 127
      %s462 = scalar_select %p461, %s460, 127
      %s463 = smul.addr %s462, 8
      %s464 = scalar_lea.vmem %s13, %s463
      %s465 = smul.u32 64, %s24
      %v467 = vld [vmem:[%s452] sm:$0xf]
      %v468 = vld [vmem:[%s452 + $0x4] sm:$0xf]
      %v469 = vld [vmem:[%s452 + $0x8] sm:$0xf]
      %v470 = vld [vmem:[%s452 + $0xc] sm:$0xf]
      %v471 = vld [vmem:[%s452 + $0x10] sm:$0xf]
      %v472 = vld [vmem:[%s452 + $0x14] sm:$0xf]
      %v473 = vld [vmem:[%s452 + $0x18] sm:$0xf]
      %v474 = vld [vmem:[%s452 + $0x1c] sm:$0xf]
      %v475 = vld [vmem:[%s452 + $0x20] sm:$0xf]
      %v476 = vld [vmem:[%s452 + $0x24] sm:$0xf]
      %v477 = vld [vmem:[%s452 + $0x28] sm:$0xf]
      %v478 = vld [vmem:[%s452 + $0x2c] sm:$0xf]
      %v479 = vld [vmem:[%s452 + $0x30] sm:$0xf]
      %v480 = vld [vmem:[%s452 + $0x34] sm:$0xf]
      %v481 = vld [vmem:[%s452 + $0x38] sm:$0xf]
      %v482 = vld [vmem:[%s452 + $0x3c] sm:$0xf]
      %v483 = vld [vmem:[%s452 + $0x40] sm:$0xf]
      %v484 = vld [vmem:[%s452 + $0x44] sm:$0xf]
      %v485 = vld [vmem:[%s452 + $0x48] sm:$0xf]
      %v486 = vld [vmem:[%s452 + $0x4c] sm:$0xf]
      %v487 = vld [vmem:[%s452 + $0x50] sm:$0xf]
      %v488 = vld [vmem:[%s452 + $0x54] sm:$0xf]
      %v489 = vld [vmem:[%s452 + $0x58] sm:$0xf]
      %v490 = vld [vmem:[%s452 + $0x5c] sm:$0xf]
      %v491 = vld [vmem:[%s452 + $0x60] sm:$0xf]
      %v492 = vld [vmem:[%s452 + $0x64] sm:$0xf]
      %v493 = vld [vmem:[%s452 + $0x68] sm:$0xf]
      %v494 = vld [vmem:[%s452 + $0x6c] sm:$0xf]
      %v495 = vld [vmem:[%s452 + $0x70] sm:$0xf]
      %v496 = vld [vmem:[%s452 + $0x74] sm:$0xf]
      %v497 = vld [vmem:[%s452 + $0x78] sm:$0xf]
      %v498 = vld [vmem:[%s452 + $0x7c] sm:$0xf]
      %v499 = vld [vmem:[%s452 + $0x80] sm:$0xf]
      %v500 = vld [vmem:[%s452 + $0x84] sm:$0xf]
      %v501 = vld [vmem:[%s452 + $0x88] sm:$0xf]
      %v502 = vld [vmem:[%s452 + $0x8c] sm:$0xf]
      %v503 = vld [vmem:[%s452 + $0x90] sm:$0xf]
      %v504 = vld [vmem:[%s452 + $0x94] sm:$0xf]
      %v505 = vld [vmem:[%s452 + $0x98] sm:$0xf]
      %v506 = vld [vmem:[%s452 + $0x9c] sm:$0xf]
      %v507 = vld [vmem:[%s452 + $0xa0] sm:$0xf]
      %v508 = vld [vmem:[%s452 + $0xa4] sm:$0xf]
      %v509 = vld [vmem:[%s452 + $0xa8] sm:$0xf]
      %v510 = vld [vmem:[%s452 + $0xac] sm:$0xf]
      %v511 = vld [vmem:[%s452 + $0xb0] sm:$0xf]
      %v512 = vld [vmem:[%s452 + $0xb4] sm:$0xf]
      %v513 = vld [vmem:[%s452 + $0xb8] sm:$0xf]
      %v514 = vld [vmem:[%s452 + $0xbc] sm:$0xf]
      %v515 = vld [vmem:[%s452 + $0xc0] sm:$0xf]
      %v516 = vld [vmem:[%s452 + $0xc4] sm:$0xf]
      %v517 = vld [vmem:[%s452 + $0xc8] sm:$0xf]
      %v518 = vld [vmem:[%s452 + $0xcc] sm:$0xf]
      %v519 = vld [vmem:[%s452 + $0xd0] sm:$0xf]
      %v520 = vld [vmem:[%s452 + $0xd4] sm:$0xf]
      %v521 = vld [vmem:[%s452 + $0xd8] sm:$0xf]
      %v522 = vld [vmem:[%s452 + $0xdc] sm:$0xf]
      %v523 = vld [vmem:[%s452 + $0xe0] sm:$0xf]
      %v524 = vld [vmem:[%s452 + $0xe4] sm:$0xf]
      %v525 = vld [vmem:[%s452 + $0xe8] sm:$0xf]
      %v526 = vld [vmem:[%s452 + $0xec] sm:$0xf]
      %v527 = vld [vmem:[%s452 + $0xf0] sm:$0xf]
      %v528 = vld [vmem:[%s452 + $0xf4] sm:$0xf]
      %v529 = vld [vmem:[%s452 + $0xf8] sm:$0xf]
      %v530 = vld [vmem:[%s452 + $0xfc] sm:$0xf]
      %v531 = vld [vmem:[%s458] sm:$0xf]
      %v532 = vld [vmem:[%s458 + $0x4] sm:$0xf]
      %v533 = vld [vmem:[%s458 + $0x8] sm:$0xf]
      %v534 = vld [vmem:[%s458 + $0xc] sm:$0xf]
      %v535 = vld [vmem:[%s458 + $0x10] sm:$0xf]
      %v536 = vld [vmem:[%s458 + $0x14] sm:$0xf]
      %v537 = vld [vmem:[%s458 + $0x18] sm:$0xf]
      %v538 = vld [vmem:[%s458 + $0x1c] sm:$0xf]
      %v539 = vld [vmem:[%s458 + $0x20] sm:$0xf]
      %v540 = vld [vmem:[%s458 + $0x24] sm:$0xf]
      %v541 = vld [vmem:[%s458 + $0x28] sm:$0xf]
      %v542 = vld [vmem:[%s458 + $0x2c] sm:$0xf]
      %v543 = vld [vmem:[%s458 + $0x30] sm:$0xf]
      %v544 = vld [vmem:[%s458 + $0x34] sm:$0xf]
      %v545 = vld [vmem:[%s458 + $0x38] sm:$0xf]
      %v546 = vld [vmem:[%s458 + $0x3c] sm:$0xf]
      %v547 = vld [vmem:[%s458 + $0x40] sm:$0xf]
      %v548 = vld [vmem:[%s458 + $0x44] sm:$0xf]
      %v549 = vld [vmem:[%s458 + $0x48] sm:$0xf]
      %v550 = vld [vmem:[%s458 + $0x4c] sm:$0xf]
      %v551 = vld [vmem:[%s458 + $0x50] sm:$0xf]
      %v552 = vld [vmem:[%s458 + $0x54] sm:$0xf]
      %v553 = vld [vmem:[%s458 + $0x58] sm:$0xf]
      %v554 = vld [vmem:[%s458 + $0x5c] sm:$0xf]
      %v555 = vld [vmem:[%s458 + $0x60] sm:$0xf]
      %v556 = vld [vmem:[%s458 + $0x64] sm:$0xf]
      %v557 = vld [vmem:[%s458 + $0x68] sm:$0xf]
      %v558 = vld [vmem:[%s458 + $0x6c] sm:$0xf]
      %v559 = vld [vmem:[%s458 + $0x70] sm:$0xf]
      %v560 = vld [vmem:[%s458 + $0x74] sm:$0xf]
      %v561 = vld [vmem:[%s458 + $0x78] sm:$0xf]
      %v562 = vld [vmem:[%s458 + $0x7c] sm:$0xf]
      %v563 = vld [vmem:[%s458 + $0x80] sm:$0xf]
      %v564 = vld [vmem:[%s458 + $0x84] sm:$0xf]
      %v565 = vld [vmem:[%s458 + $0x88] sm:$0xf]
      %v566 = vld [vmem:[%s458 + $0x8c] sm:$0xf]
      %v567 = vld [vmem:[%s458 + $0x90] sm:$0xf]
      %v568 = vld [vmem:[%s458 + $0x94] sm:$0xf]
      %v569 = vld [vmem:[%s458 + $0x98] sm:$0xf]
      %v570 = vld [vmem:[%s458 + $0x9c] sm:$0xf]
      %v571 = vld [vmem:[%s458 + $0xa0] sm:$0xf]
      %v572 = vld [vmem:[%s458 + $0xa4] sm:$0xf]
      %v573 = vld [vmem:[%s458 + $0xa8] sm:$0xf]
      %v574 = vld [vmem:[%s458 + $0xac] sm:$0xf]
      %v575 = vld [vmem:[%s458 + $0xb0] sm:$0xf]
      %v576 = vld [vmem:[%s458 + $0xb4] sm:$0xf]
      %v577 = vld [vmem:[%s458 + $0xb8] sm:$0xf]
      %v578 = vld [vmem:[%s458 + $0xbc] sm:$0xf]
      %v579 = vld [vmem:[%s458 + $0xc0] sm:$0xf]
      %v580 = vld [vmem:[%s458 + $0xc4] sm:$0xf]
      %v581 = vld [vmem:[%s458 + $0xc8] sm:$0xf]
      %v582 = vld [vmem:[%s458 + $0xcc] sm:$0xf]
      %v583 = vld [vmem:[%s458 + $0xd0] sm:$0xf]
      %v584 = vld [vmem:[%s458 + $0xd4] sm:$0xf]
      %v585 = vld [vmem:[%s458 + $0xd8] sm:$0xf]
      %v586 = vld [vmem:[%s458 + $0xdc] sm:$0xf]
      %v587 = vld [vmem:[%s458 + $0xe0] sm:$0xf]
      %v588 = vld [vmem:[%s458 + $0xe4] sm:$0xf]
      %v589 = vld [vmem:[%s458 + $0xe8] sm:$0xf]
      %v590 = vld [vmem:[%s458 + $0xec] sm:$0xf]
      %v591 = vld [vmem:[%s458 + $0xf0] sm:$0xf]
      %v592 = vld [vmem:[%s458 + $0xf4] sm:$0xf]
      %v593 = vld [vmem:[%s458 + $0xf8] sm:$0xf]
      %v594 = vld [vmem:[%s458 + $0xfc] sm:$0xf]
      %v595 = vld [vmem:[%s2] sm:$0xf]
      %v596 = vld [vmem:[%s2 + $0x4] sm:$0xf]
      %v597 = vld [vmem:[%s2 + $0x8] sm:$0xf]
      %v598 = vld [vmem:[%s2 + $0xc] sm:$0xf]
      %v599 = vld [vmem:[%s3] sm:$0x1]
      %v601 = vlaneseq
      %v602 = vshrl.u32 %v601, 7
      %v603 = vsub.s32 0, %v602
      %v604 = vrot.slane %v599, %v603
      %v670 = vunpack.c.l.b16 %v467
      %v671 = vunpack.c.l.b16 %v468
      %v672 = vunpack.c.l.b16 %v469
      %v673 = vunpack.c.l.b16 %v470
      %v674 = vunpack.c.l.b16 %v471
      %v675 = vunpack.c.l.b16 %v472
      %v676 = vunpack.c.l.b16 %v473
      %v677 = vunpack.c.l.b16 %v474
      %v678 = vunpack.c.l.b16 %v475
      %v679 = vunpack.c.l.b16 %v476
      %v680 = vunpack.c.l.b16 %v477
      %v681 = vunpack.c.l.b16 %v478
      %v682 = vunpack.c.l.b16 %v479
      %v683 = vunpack.c.l.b16 %v480
      %v684 = vunpack.c.l.b16 %v481
      %v685 = vunpack.c.l.b16 %v482
      %v686 = vunpack.c.l.b16 %v483
      %v687 = vunpack.c.l.b16 %v484
      %v688 = vunpack.c.l.b16 %v485
      %v689 = vunpack.c.l.b16 %v486
      %v690 = vunpack.c.l.b16 %v487
      %v691 = vunpack.c.l.b16 %v488
      %v692 = vunpack.c.l.b16 %v489
      %v693 = vunpack.c.l.b16 %v490
      %v694 = vunpack.c.l.b16 %v491
      %v695 = vunpack.c.l.b16 %v492
      %v696 = vunpack.c.l.b16 %v493
      %v697 = vunpack.c.l.b16 %v494
      %v698 = vunpack.c.l.b16 %v495
      %v699 = vunpack.c.l.b16 %v496
      %v700 = vunpack.c.l.b16 %v497
      %v701 = vunpack.c.l.b16 %v498
      %v702 = vunpack.c.l.b16 %v499
      %v703 = vunpack.c.l.b16 %v500
      %v704 = vunpack.c.l.b16 %v501
      %v705 = vunpack.c.l.b16 %v502
      %v706 = vunpack.c.l.b16 %v503
      %v707 = vunpack.c.l.b16 %v504
      %v708 = vunpack.c.l.b16 %v505
      %v709 = vunpack.c.l.b16 %v506
      %v710 = vunpack.c.l.b16 %v507
      %v711 = vunpack.c.l.b16 %v508
      %v712 = vunpack.c.l.b16 %v509
      %v713 = vunpack.c.l.b16 %v510
      %v714 = vunpack.c.l.b16 %v511
      %v715 = vunpack.c.l.b16 %v512
      %v716 = vunpack.c.l.b16 %v513
      %v717 = vunpack.c.l.b16 %v514
      %v718 = vunpack.c.l.b16 %v515
      %v719 = vunpack.c.l.b16 %v516
      %v720 = vunpack.c.l.b16 %v517
      %v721 = vunpack.c.l.b16 %v518
      %v722 = vunpack.c.l.b16 %v519
      %v723 = vunpack.c.l.b16 %v520
      %v724 = vunpack.c.l.b16 %v521
      %v725 = vunpack.c.l.b16 %v522
      %v726 = vunpack.c.l.b16 %v523
      %v727 = vunpack.c.l.b16 %v524
      %v728 = vunpack.c.l.b16 %v525
      %v729 = vunpack.c.l.b16 %v526
      %v730 = vunpack.c.l.b16 %v527
      %v731 = vunpack.c.l.b16 %v528
      %v732 = vunpack.c.l.b16 %v529
      %v733 = vunpack.c.l.b16 %v530
      %v734 = vpack.c.b16 %v671, %v670
      %v735 = vpack.c.b16 %v673, %v672
      %v736 = vpack.c.b16 %v675, %v674
      %v737 = vpack.c.b16 %v677, %v676
      %v738 = vpack.c.b16 %v679, %v678
      %v739 = vpack.c.b16 %v681, %v680
      %v740 = vpack.c.b16 %v683, %v682
      %v741 = vpack.c.b16 %v685, %v684
      %v742 = vpack.c.b16 %v687, %v686
      %v743 = vpack.c.b16 %v689, %v688
      %v744 = vpack.c.b16 %v691, %v690
      %v745 = vpack.c.b16 %v693, %v692
      %v746 = vpack.c.b16 %v695, %v694
      %v747 = vpack.c.b16 %v697, %v696
      %v748 = vpack.c.b16 %v699, %v698
      %v749 = vpack.c.b16 %v701, %v700
      %v750 = vpack.c.b16 %v703, %v702
      %v751 = vpack.c.b16 %v705, %v704
      %v752 = vpack.c.b16 %v707, %v706
      %v753 = vpack.c.b16 %v709, %v708
      %v754 = vpack.c.b16 %v711, %v710
      %v755 = vpack.c.b16 %v713, %v712
      %v756 = vpack.c.b16 %v715, %v714
      %v757 = vpack.c.b16 %v717, %v716
      %v758 = vpack.c.b16 %v719, %v718
      %v759 = vpack.c.b16 %v721, %v720
      %v760 = vpack.c.b16 %v723, %v722
      %v761 = vpack.c.b16 %v725, %v724
      %v762 = vpack.c.b16 %v727, %v726
      %v763 = vpack.c.b16 %v729, %v728
      %v764 = vpack.c.b16 %v731, %v730
      %v765 = vpack.c.b16 %v733, %v732
      %v770 = vunpack.c.l.b16 %v595
      %v771 = vunpack.c.l.b16 %v596
      %v772 = vunpack.c.l.b16 %v597
      %v773 = vunpack.c.l.b16 %v598
      %v774 = vpack.c.b16 %v771, %v770
      %v775 = vpack.c.b16 %v773, %v772
      %vm778 = vcmask 261120
      %v780 = vsel %vm778, %v734, 0
      %v783 = vsel %vm778, %v735, 0
      %v786 = vsel %vm778, %v736, 0
      %v789 = vsel %vm778, %v737, 0
      %v792 = vsel %vm778, %v738, 0
      %v795 = vsel %vm778, %v739, 0
      %v798 = vsel %vm778, %v740, 0
      %v801 = vsel %vm778, %v741, 0
      %v804 = vsel %vm778, %v742, 0
      %v807 = vsel %vm778, %v743, 0
      %v810 = vsel %vm778, %v744, 0
      %v813 = vsel %vm778, %v745, 0
      %v816 = vsel %vm778, %v746, 0
      %v819 = vsel %vm778, %v747, 0
      %v822 = vsel %vm778, %v748, 0
      %v825 = vsel %vm778, %v749, 0
      %v828 = vsel %vm778, %v750, 0
      %v831 = vsel %vm778, %v751, 0
      %v834 = vsel %vm778, %v752, 0
      %v837 = vsel %vm778, %v753, 0
      %v840 = vsel %vm778, %v754, 0
      %v843 = vsel %vm778, %v755, 0
      %v846 = vsel %vm778, %v756, 0
      %v849 = vsel %vm778, %v757, 0
      %v852 = vsel %vm778, %v758, 0
      %v855 = vsel %vm778, %v759, 0
      %v858 = vsel %vm778, %v760, 0
      %v861 = vsel %vm778, %v761, 0
      %v864 = vsel %vm778, %v762, 0
      %v867 = vsel %vm778, %v763, 0
      %v870 = vsel %vm778, %v764, 0
      %v873 = vsel %vm778, %v765, 0
      %875 = vmatprep.subr.bf16.mxu0 0
      %876 = vmatpush1.bf16.msra.mxu0 %v774
      %877 = vmatprep.subr.bf16.mxu0 0
      %878 = vmatpush1.bf16.msra.mxu0 %v775
      %879 = vmatprep.subr.bf16.mxu0 0
      %880 = vmatpush1.bf16.msra.mxu0 0
      %881 = vmatprep.subr.bf16.mxu0 0
      %882 = vmatpush1.bf16.msra.mxu0 0
      %883 = vmatprep.subr.bf16.mxu0 0
      %884 = vmatpush1.bf16.msra.mxu0 0
      %885 = vmatprep.subr.bf16.mxu0 0
      %886 = vmatpush1.bf16.msra.mxu0 0
      %887 = vmatprep.subr.bf16.mxu0 0
      %888 = vmatpush1.bf16.msra.mxu0 0
      %889 = vmatprep.subr.bf16.mxu0 0
      %890 = vmatpush1.bf16.msra.mxu0 0
      %891 = vmatprep.subr.bf16.mxu0 0
      %892 = vmatpush1.bf16.msra.mxu0 0
      %893 = vmatprep.subr.bf16.mxu0 0
      %894 = vmatpush1.bf16.msra.mxu0 0
      %895 = vmatprep.subr.bf16.mxu0 0
      %896 = vmatpush1.bf16.msra.mxu0 0
      %897 = vmatprep.subr.bf16.mxu0 0
      %898 = vmatpush1.bf16.msra.mxu0 0
      %899 = vmatprep.subr.bf16.mxu0 0
      %900 = vmatpush1.bf16.msra.mxu0 0
      %901 = vmatprep.subr.bf16.mxu0 0
      %902 = vmatpush1.bf16.msra.mxu0 0
      %903 = vmatprep.subr.bf16.mxu0 0
      %904 = vmatpush1.bf16.msra.mxu0 0
      %905 = vmatprep.subr.bf16.mxu0 0
      %906 = vmatpush1.bf16.msra.mxu0 0
      %907 = vmatprep.mubr.bf16.mxu0 0
      %908 = vmatmul.mubr.bf16.gmra.mrb[0].mxu0 %v780
      %v909 = vpop.f32.mrb[0].mxu0
      %v910 = vadd.f32 %v604, %v909
      %v911 = vpop.f32.mrb[0].mxu0
      %v912 = vpop.f32.mrb[0].mxu0
      %v913 = vadd.f32 %v604, %v912
      %v914 = vpop.f32.mrb[0].mxu0
      %915 = vmatprep.mubr.bf16.mxu0 0
      %916 = vmatmul.mubr.bf16.gmra.mrb[0].mxu0 %v783
      %v917 = vpop.f32.mrb[0].mxu0
      %v918 = vadd.f32 %v604, %v917
      %v919 = vpop.f32.mrb[0].mxu0
      %v920 = vpop.f32.mrb[0].mxu0
      %v921 = vadd.f32 %v604, %v920
      %v922 = vpop.f32.mrb[0].mxu0
      %923 = vmatprep.mubr.bf16.mxu0 0
      %924 = vmatmul.mubr.bf16.gmra.mrb[0].mxu0 %v786
      %v925 = vpop.f32.mrb[0].mxu0
      %v926 = vadd.f32 %v604, %v925
      %v927 = vpop.f32.mrb[0].mxu0
      %v928 = vpop.f32.mrb[0].mxu0
      %v929 = vadd.f32 %v604, %v928
      %v930 = vpop.f32.mrb[0].mxu0
      %931 = vmatprep.mubr.bf16.mxu0 0
      %932 = vmatmul.mubr.bf16.gmra.mrb[0].mxu0 %v789
      %v933 = vpop.f32.mrb[0].mxu0
      %v934 = vadd.f32 %v604, %v933
      %v935 = vpop.f32.mrb[0].mxu0
      %v936 = vpop.f32.mrb[0].mxu0
      %v937 = vadd.f32 %v604, %v936
      %v938 = vpop.f32.mrb[0].mxu0
      %939 = vmatprep.mubr.bf16.mxu0 0
      %940 = vmatmul.mubr.bf16.gmra.mrb[0].mxu0 %v792
      %v941 = vpop.f32.mrb[0].mxu0
      %v942 = vadd.f32 %v604, %v941
      %v943 = vpop.f32.mrb[0].mxu0
      %v944 = vpop.f32.mrb[0].mxu0
      %v945 = vadd.f32 %v604, %v944
      %v946 = vpop.f32.mrb[0].mxu0
      %947 = vmatprep.mubr.bf16.mxu0 0
      %948 = vmatmul.mubr.bf16.gmra.mrb[0].mxu0 %v795
      %v949 = vpop.f32.mrb[0].mxu0
      %v950 = vadd.f32 %v604, %v949
      %v951 = vpop.f32.mrb[0].mxu0
      %v952 = vpop.f32.mrb[0].mxu0
      %v953 = vadd.f32 %v604, %v952
      %v954 = vpop.f32.mrb[0].mxu0
      %955 = vmatprep.mubr.bf16.mxu0 0
      %956 = vmatmul.mubr.bf16.gmra.mrb[0].mxu0 %v798
      %v957 = vpop.f32.mrb[0].mxu0
      %v958 = vadd.f32 %v604, %v957
      %v959 = vpop.f32.mrb[0].mxu0
      %v960 = vpop.f32.mrb[0].mxu0
      %v961 = vadd.f32 %v604, %v960
      %v962 = vpop.f32.mrb[0].mxu0
      %963 = vmatprep.mubr.bf16.mxu0 0
      %964 = vmatmul.mubr.bf16.gmra.mrb[0].mxu0 %v801
      %v965 = vpop.f32.mrb[0].mxu0
      %v966 = vadd.f32 %v604, %v965
      %v967 = vpop.f32.mrb[0].mxu0
      %v968 = vpop.f32.mrb[0].mxu0
      %v969 = vadd.f32 %v604, %v968
      %v970 = vpop.f32.mrb[0].mxu0
      %971 = vmatprep.mubr.bf16.mxu0 0
      %972 = vmatmul.mubr.bf16.gmra.mrb[0].mxu0 %v804
      %v973 = vpop.f32.mrb[0].mxu0
      %v974 = vadd.f32 %v604, %v973
      %v975 = vpop.f32.mrb[0].mxu0
      %v976 = vpop.f32.mrb[0].mxu0
      %v977 = vadd.f32 %v604, %v976
      %v978 = vpop.f32.mrb[0].mxu0
      %979 = vmatprep.mubr.bf16.mxu0 0
      %980 = vmatmul.mubr.bf16.gmra.mrb[0].mxu0 %v807
      %v981 = vpop.f32.mrb[0].mxu0
      %v982 = vadd.f32 %v604, %v981
      %v983 = vpop.f32.mrb[0].mxu0
      %v984 = vpop.f32.mrb[0].mxu0
      %v985 = vadd.f32 %v604, %v984
      %v986 = vpop.f32.mrb[0].mxu0
      %987 = vmatprep.mubr.bf16.mxu0 0
      %988 = vmatmul.mubr.bf16.gmra.mrb[0].mxu0 %v810
      %v989 = vpop.f32.mrb[0].mxu0
      %v990 = vadd.f32 %v604, %v989
      %v991 = vpop.f32.mrb[0].mxu0
      %v992 = vpop.f32.mrb[0].mxu0
      %v993 = vadd.f32 %v604, %v992
      %v994 = vpop.f32.mrb[0].mxu0
      %995 = vmatprep.mubr.bf16.mxu0 0
      %996 = vmatmul.mubr.bf16.gmra.mrb[0].mxu0 %v813
      %v997 = vpop.f32.mrb[0].mxu0
      %v998 = vadd.f32 %v604, %v997
      %v999 = vpop.f32.mrb[0].mxu0
      %v1000 = vpop.f32.mrb[0].mxu0
      %v1001 = vadd.f32 %v604, %v1000
      %v1002 = vpop.f32.mrb[0].mxu0
      %1003 = vmatprep.mubr.bf16.mxu0 0
      %1004 = vmatmul.mubr.bf16.gmra.mrb[0].mxu0 %v816
      %v1005 = vpop.f32.mrb[0].mxu0
      %v1006 = vadd.f32 %v604, %v1005
      %v1007 = vpop.f32.mrb[0].mxu0
      %v1008 = vpop.f32.mrb[0].mxu0
      %v1009 = vadd.f32 %v604, %v1008
      %v1010 = vpop.f32.mrb[0].mxu0
      %1011 = vmatprep.mubr.bf16.mxu0 0
      %1012 = vmatmul.mubr.bf16.gmra.mrb[0].mxu0 %v819
      %v1013 = vpop.f32.mrb[0].mxu0
      %v1014 = vadd.f32 %v604, %v1013
      %v1015 = vpop.f32.mrb[0].mxu0
      %v1016 = vpop.f32.mrb[0].mxu0
      %v1017 = vadd.f32 %v604, %v1016
      %v1018 = vpop.f32.mrb[0].mxu0
      %1019 = vmatprep.mubr.bf16.mxu0 0
      %1020 = vmatmul.mubr.bf16.gmra.mrb[0].mxu0 %v822
      %v1021 = vpop.f32.mrb[0].mxu0
      %v1022 = vadd.f32 %v604, %v1021
      %v1023 = vpop.f32.mrb[0].mxu0
      %v1024 = vpop.f32.mrb[0].mxu0
      %v1025 = vadd.f32 %v604, %v1024
      %v1026 = vpop.f32.mrb[0].mxu0
      %1027 = vmatprep.mubr.bf16.mxu0 0
      %1028 = vmatmul.mubr.bf16.gmra.mrb[0].mxu0 %v825
      %v1029 = vpop.f32.mrb[0].mxu0
      %v1030 = vadd.f32 %v604, %v1029
      %v1031 = vpop.f32.mrb[0].mxu0
      %v1032 = vpop.f32.mrb[0].mxu0
      %v1033 = vadd.f32 %v604, %v1032
      %v1034 = vpop.f32.mrb[0].mxu0
      %1035 = vmatprep.mubr.bf16.mxu0 0
      %1036 = vmatmul.mubr.bf16.gmra.mrb[0].mxu0 %v828
      %v1037 = vpop.f32.mrb[0].mxu0
      %v1038 = vadd.f32 %v604, %v1037
      %v1039 = vpop.f32.mrb[0].mxu0
      %v1040 = vpop.f32.mrb[0].mxu0
      %v1041 = vadd.f32 %v604, %v1040
      %v1042 = vpop.f32.mrb[0].mxu0
      %1043 = vmatprep.mubr.bf16.mxu0 0
      %1044 = vmatmul.mubr.bf16.gmra.mrb[0].mxu0 %v831
      %v1045 = vpop.f32.mrb[0].mxu0
      %v1046 = vadd.f32 %v604, %v1045
      %v1047 = vpop.f32.mrb[0].mxu0
      %v1048 = vpop.f32.mrb[0].mxu0
      %v1049 = vadd.f32 %v604, %v1048
      %v1050 = vpop.f32.mrb[0].mxu0
      %1051 = vmatprep.mubr.bf16.mxu0 0
      %1052 = vmatmul.mubr.bf16.gmra.mrb[0].mxu0 %v834
      %v1053 = vpop.f32.mrb[0].mxu0
      %v1054 = vadd.f32 %v604, %v1053
      %v1055 = vpop.f32.mrb[0].mxu0
      %v1056 = vpop.f32.mrb[0].mxu0
      %v1057 = vadd.f32 %v604, %v1056
      %v1058 = vpop.f32.mrb[0].mxu0
      %1059 = vmatprep.mubr.bf16.mxu0 0
      %1060 = vmatmul.mubr.bf16.gmra.mrb[0].mxu0 %v837
      %v1061 = vpop.f32.mrb[0].mxu0
      %v1062 = vadd.f32 %v604, %v1061
      %v1063 = vpop.f32.mrb[0].mxu0
      %v1064 = vpop.f32.mrb[0].mxu0
      %v1065 = vadd.f32 %v604, %v1064
      %v1066 = vpop.f32.mrb[0].mxu0
      %1067 = vmatprep.mubr.bf16.mxu0 0
      %1068 = vmatmul.mubr.bf16.gmra.mrb[0].mxu0 %v840
      %v1069 = vpop.f32.mrb[0].mxu0
      %v1070 = vadd.f32 %v604, %v1069
      %v1071 = vpop.f32.mrb[0].mxu0
      %v1072 = vpop.f32.mrb[0].mxu0
      %v1073 = vadd.f32 %v604, %v1072
      %v1074 = vpop.f32.mrb[0].mxu0
      %1075 = vmatprep.mubr.bf16.mxu0 0
      %1076 = vmatmul.mubr.bf16.gmra.mrb[0].mxu0 %v843
      %v1077 = vpop.f32.mrb[0].mxu0
      %v1078 = vadd.f32 %v604, %v1077
      %v1079 = vpop.f32.mrb[0].mxu0
      %v1080 = vpop.f32.mrb[0].mxu0
      %v1081 = vadd.f32 %v604, %v1080
      %v1082 = vpop.f32.mrb[0].mxu0
      %1083 = vmatprep.mubr.bf16.mxu0 0
      %1084 = vmatmul.mubr.bf16.gmra.mrb[0].mxu0 %v846
      %v1085 = vpop.f32.mrb[0].mxu0
      %v1086 = vadd.f32 %v604, %v1085
      %v1087 = vpop.f32.mrb[0].mxu0
      %v1088 = vpop.f32.mrb[0].mxu0
      %v1089 = vadd.f32 %v604, %v1088
      %v1090 = vpop.f32.mrb[0].mxu0
      %1091 = vmatprep.mubr.bf16.mxu0 0
      %1092 = vmatmul.mubr.bf16.gmra.mrb[0].mxu0 %v849
      %v1093 = vpop.f32.mrb[0].mxu0
      %v1094 = vadd.f32 %v604, %v1093
      %v1095 = vpop.f32.mrb[0].mxu0
      %v1096 = vpop.f32.mrb[0].mxu0
      %v1097 = vadd.f32 %v604, %v1096
      %v1098 = vpop.f32.mrb[0].mxu0
      %1099 = vmatprep.mubr.bf16.mxu0 0
      %1100 = vmatmul.mubr.bf16.gmra.mrb[0].mxu0 %v852
      %v1101 = vpop.f32.mrb[0].mxu0
      %v1102 = vadd.f32 %v604, %v1101
      %v1103 = vpop.f32.mrb[0].mxu0
      %v1104 = vpop.f32.mrb[0].mxu0
      %v1105 = vadd.f32 %v604, %v1104
      %v1106 = vpop.f32.mrb[0].mxu0
      %1107 = vmatprep.mubr.bf16.mxu0 0
      %1108 = vmatmul.mubr.bf16.gmra.mrb[0].mxu0 %v855
      %v1109 = vpop.f32.mrb[0].mxu0
      %v1110 = vadd.f32 %v604, %v1109
      %v1111 = vpop.f32.mrb[0].mxu0
      %v1112 = vpop.f32.mrb[0].mxu0
      %v1113 = vadd.f32 %v604, %v1112
      %v1114 = vpop.f32.mrb[0].mxu0
      %1115 = vmatprep.mubr.bf16.mxu0 0
      %1116 = vmatmul.mubr.bf16.gmra.mrb[0].mxu0 %v858
      %v1117 = vpop.f32.mrb[0].mxu0
      %v1118 = vadd.f32 %v604, %v1117
      %v1119 = vpop.f32.mrb[0].mxu0
      %v1120 = vpop.f32.mrb[0].mxu0
      %v1121 = vadd.f32 %v604, %v1120
      %v1122 = vpop.f32.mrb[0].mxu0
      %1123 = vmatprep.mubr.bf16.mxu0 0
      %1124 = vmatmul.mubr.bf16.gmra.mrb[0].mxu0 %v861
      %v1125 = vpop.f32.mrb[0].mxu0
      %v1126 = vadd.f32 %v604, %v1125
      %v1127 = vpop.f32.mrb[0].mxu0
      %v1128 = vpop.f32.mrb[0].mxu0
      %v1129 = vadd.f32 %v604, %v1128
      %v1130 = vpop.f32.mrb[0].mxu0
      %1131 = vmatprep.mubr.bf16.mxu0 0
      %1132 = vmatmul.mubr.bf16.gmra.mrb[0].mxu0 %v864
      %v1133 = vpop.f32.mrb[0].mxu0
      %v1134 = vadd.f32 %v604, %v1133
      %v1135 = vpop.f32.mrb[0].mxu0
      %v1136 = vpop.f32.mrb[0].mxu0
      %v1137 = vadd.f32 %v604, %v1136
      %v1138 = vpop.f32.mrb[0].mxu0
      %1139 = vmatprep.mubr.bf16.mxu0 0
      %1140 = vmatmul.mubr.bf16.gmra.mrb[0].mxu0 %v867
      %v1141 = vpop.f32.mrb[0].mxu0
      %v1142 = vadd.f32 %v604, %v1141
      %v1143 = vpop.f32.mrb[0].mxu0
      %v1144 = vpop.f32.mrb[0].mxu0
      %v1145 = vadd.f32 %v604, %v1144
      %v1146 = vpop.f32.mrb[0].mxu0
      %1147 = vmatprep.mubr.bf16.mxu0 0
      %1148 = vmatmul.mubr.bf16.gmra.mrb[0].mxu0 %v870
      %v1149 = vpop.f32.mrb[0].mxu0
      %v1150 = vadd.f32 %v604, %v1149
      %v1151 = vpop.f32.mrb[0].mxu0
      %v1152 = vpop.f32.mrb[0].mxu0
      %v1153 = vadd.f32 %v604, %v1152
      %v1154 = vpop.f32.mrb[0].mxu0
      %1155 = vmatprep.mubr.bf16.mxu0 0
      %1156 = vmatmul.mubr.bf16.gmra.mrb[0].mxu0 %v873
      %v1157 = vpop.f32.mrb[0].mxu0
      %v1158 = vadd.f32 %v604, %v1157
      %v1159 = vpop.f32.mrb[0].mxu0
      %v1160 = vpop.f32.mrb[0].mxu0
      %v1161 = vadd.f32 %v604, %v1160
      %v1162 = vpop.f32.mrb[0].mxu0
      %1163 = vdwg.mxu0
      %v1164 = vmax.f32 %v910, 0.0
      %v1165 = vmax.f32 %v913, 0.0
      %v1166 = vmax.f32 %v918, 0.0
      %v1167 = vmax.f32 %v921, 0.0
      %v1168 = vmax.f32 %v926, 0.0
      %v1169 = vmax.f32 %v929, 0.0
      %v1170 = vmax.f32 %v934, 0.0
      %v1171 = vmax.f32 %v937, 0.0
      %v1172 = vmax.f32 %v942, 0.0
      %v1173 = vmax.f32 %v945, 0.0
      %v1174 = vmax.f32 %v950, 0.0
      %v1175 = vmax.f32 %v953, 0.0
      %v1176 = vmax.f32 %v958, 0.0
      %v1177 = vmax.f32 %v961, 0.0
      %v1178 = vmax.f32 %v966, 0.0
      %v1179 = vmax.f32 %v969, 0.0
      %v1180 = vmax.f32 %v974, 0.0
      %v1181 = vmax.f32 %v977, 0.0
      %v1182 = vmax.f32 %v982, 0.0
      %v1183 = vmax.f32 %v985, 0.0
      %v1184 = vmax.f32 %v990, 0.0
      %v1185 = vmax.f32 %v993, 0.0
      %v1186 = vmax.f32 %v998, 0.0
      %v1187 = vmax.f32 %v1001, 0.0
      %v1188 = vmax.f32 %v1006, 0.0
      %v1189 = vmax.f32 %v1009, 0.0
      %v1190 = vmax.f32 %v1014, 0.0
      %v1191 = vmax.f32 %v1017, 0.0
      %v1192 = vmax.f32 %v1022, 0.0
      %v1193 = vmax.f32 %v1025, 0.0
      %v1194 = vmax.f32 %v1030, 0.0
      %v1195 = vmax.f32 %v1033, 0.0
      %v1196 = vmax.f32 %v1038, 0.0
      %v1197 = vmax.f32 %v1041, 0.0
      %v1198 = vmax.f32 %v1046, 0.0
      %v1199 = vmax.f32 %v1049, 0.0
      %v1200 = vmax.f32 %v1054, 0.0
      %v1201 = vmax.f32 %v1057, 0.0
      %v1202 = vmax.f32 %v1062, 0.0
      %v1203 = vmax.f32 %v1065, 0.0
      %v1204 = vmax.f32 %v1070, 0.0
      %v1205 = vmax.f32 %v1073, 0.0
      %v1206 = vmax.f32 %v1078, 0.0
      %v1207 = vmax.f32 %v1081, 0.0
      %v1208 = vmax.f32 %v1086, 0.0
      %v1209 = vmax.f32 %v1089, 0.0
      %v1210 = vmax.f32 %v1094, 0.0
      %v1211 = vmax.f32 %v1097, 0.0
      %v1212 = vmax.f32 %v1102, 0.0
      %v1213 = vmax.f32 %v1105, 0.0
      %v1214 = vmax.f32 %v1110, 0.0
      %v1215 = vmax.f32 %v1113, 0.0
      %v1216 = vmax.f32 %v1118, 0.0
      %v1217 = vmax.f32 %v1121, 0.0
      %v1218 = vmax.f32 %v1126, 0.0
      %v1219 = vmax.f32 %v1129, 0.0
      %v1220 = vmax.f32 %v1134, 0.0
      %v1221 = vmax.f32 %v1137, 0.0
      %v1222 = vmax.f32 %v1142, 0.0
      %v1223 = vmax.f32 %v1145, 0.0
      %v1224 = vmax.f32 %v1150, 0.0
      %v1225 = vmax.f32 %v1153, 0.0
      %v1226 = vmax.f32 %v1158, 0.0
      %v1227 = vmax.f32 %v1161, 0.0
      %v1228 = vpack.c.bf16 %v1165, %v1164
      %v1229 = vpack.c.bf16 %v1167, %v1166
      %v1230 = vpack.c.bf16 %v1169, %v1168
      %v1231 = vpack.c.bf16 %v1171, %v1170
      %v1232 = vpack.c.bf16 %v1173, %v1172
      %v1233 = vpack.c.bf16 %v1175, %v1174
      %v1234 = vpack.c.bf16 %v1177, %v1176
      %v1235 = vpack.c.bf16 %v1179, %v1178
      %v1236 = vpack.c.bf16 %v1181, %v1180
      %v1237 = vpack.c.bf16 %v1183, %v1182
      %v1238 = vpack.c.bf16 %v1185, %v1184
      %v1239 = vpack.c.bf16 %v1187, %v1186
      %v1240 = vpack.c.bf16 %v1189, %v1188
      %v1241 = vpack.c.bf16 %v1191, %v1190
      %v1242 = vpack.c.bf16 %v1193, %v1192
      %v1243 = vpack.c.bf16 %v1195, %v1194
      %v1244 = vpack.c.bf16 %v1197, %v1196
      %v1245 = vpack.c.bf16 %v1199, %v1198
      %v1246 = vpack.c.bf16 %v1201, %v1200
      %v1247 = vpack.c.bf16 %v1203, %v1202
      %v1248 = vpack.c.bf16 %v1205, %v1204
      %v1249 = vpack.c.bf16 %v1207, %v1206
      %v1250 = vpack.c.bf16 %v1209, %v1208
      %v1251 = vpack.c.bf16 %v1211, %v1210
      %v1252 = vpack.c.bf16 %v1213, %v1212
      %v1253 = vpack.c.bf16 %v1215, %v1214
      %v1254 = vpack.c.bf16 %v1217, %v1216
      %v1255 = vpack.c.bf16 %v1219, %v1218
      %v1256 = vpack.c.bf16 %v1221, %v1220
      %v1257 = vpack.c.bf16 %v1223, %v1222
      %v1258 = vpack.c.bf16 %v1225, %v1224
      %v1259 = vpack.c.bf16 %v1227, %v1226
      %v1260 = vld [vmem:[%s4] sm:$0xf]
      %v1261 = vld [vmem:[%s4 + $0x4] sm:$0xf]
      %v1262 = vld [vmem:[%s4 + $0x8] sm:$0xf]
      %v1263 = vld [vmem:[%s4 + $0xc] sm:$0xf]
      %v1264 = vld [vmem:[%s4 + $0x10] sm:$0xf]
      %v1265 = vld [vmem:[%s4 + $0x14] sm:$0xf]
      %v1266 = vld [vmem:[%s4 + $0x18] sm:$0xf]
      %v1267 = vld [vmem:[%s4 + $0x1c] sm:$0xf]
      %v1268 = vld [vmem:[%s4 + $0x20] sm:$0xf]
      %v1269 = vld [vmem:[%s4 + $0x24] sm:$0xf]
      %v1270 = vld [vmem:[%s4 + $0x28] sm:$0xf]
      %v1271 = vld [vmem:[%s4 + $0x2c] sm:$0xf]
      %v1272 = vld [vmem:[%s4 + $0x30] sm:$0xf]
      %v1273 = vld [vmem:[%s4 + $0x34] sm:$0xf]
      %v1274 = vld [vmem:[%s4 + $0x38] sm:$0xf]
      %v1275 = vld [vmem:[%s4 + $0x3c] sm:$0xf]
      %v1276 = vld [vmem:[%s5] sm:$0x1]
      %v1278 = vlaneseq
      %v1279 = vshrl.u32 %v1278, 7
      %v1280 = vsub.s32 0, %v1279
      %v1281 = vrot.slane %v1276, %v1280
      %v1299 = vunpack.c.l.b16 %v1260
      %v1300 = vunpack.c.l.b16 %v1261
      %v1301 = vunpack.c.l.b16 %v1262
      %v1302 = vunpack.c.l.b16 %v1263
      %v1303 = vunpack.c.l.b16 %v1264
      %v1304 = vunpack.c.l.b16 %v1265
      %v1305 = vunpack.c.l.b16 %v1266
      %v1306 = vunpack.c.l.b16 %v1267
      %v1307 = vunpack.c.l.b16 %v1268
      %v1308 = vunpack.c.l.b16 %v1269
      %v1309 = vunpack.c.l.b16 %v1270
      %v1310 = vunpack.c.l.b16 %v1271
      %v1311 = vunpack.c.l.b16 %v1272
      %v1312 = vunpack.c.l.b16 %v1273
      %v1313 = vunpack.c.l.b16 %v1274
      %v1314 = vunpack.c.l.b16 %v1275
      %v1315 = vpack.c.b16 %v1300, %v1299
      %v1316 = vpack.c.b16 %v1302, %v1301
      %v1317 = vpack.c.b16 %v1304, %v1303
      %v1318 = vpack.c.b16 %v1306, %v1305
      %v1319 = vpack.c.b16 %v1308, %v1307
      %v1320 = vpack.c.b16 %v1310, %v1309
      %v1321 = vpack.c.b16 %v1312, %v1311
      %v1322 = vpack.c.b16 %v1314, %v1313
      %1331 = vmatprep.subr.bf16.mxu0 0
      %1332 = vmatpush1.bf16.msra.mxu0 %v1315
      %1333 = vmatprep.subr.bf16.mxu0 0
      %1334 = vmatpush1.bf16.msra.mxu0 %v1316
      %1335 = vmatprep.subr.bf16.mxu0 0
      %1336 = vmatpush1.bf16.msra.mxu0 %v1317
      %1337 = vmatprep.subr.bf16.mxu0 0
      %1338 = vmatpush1.bf16.msra.mxu0 %v1318
      %1339 = vmatprep.subr.bf16.mxu0 0
      %1340 = vmatpush1.bf16.msra.mxu0 %v1319
      %1341 = vmatprep.subr.bf16.mxu0 0
      %1342 = vmatpush1.bf16.msra.mxu0 %v1320
      %1343 = vmatprep.subr.bf16.mxu0 0
      %1344 = vmatpush1.bf16.msra.mxu0 %v1321
      %1345 = vmatprep.subr.bf16.mxu0 0
      %1346 = vmatpush1.bf16.msra.mxu0 %v1322
      %1347 = vmatprep.subr.bf16.mxu0 0
      %1348 = vmatpush1.bf16.msra.mxu0 0
      %1349 = vmatprep.subr.bf16.mxu0 0
      %1350 = vmatpush1.bf16.msra.mxu0 0
      %1351 = vmatprep.subr.bf16.mxu0 0
      %1352 = vmatpush1.bf16.msra.mxu0 0
      %1353 = vmatprep.subr.bf16.mxu0 0
      %1354 = vmatpush1.bf16.msra.mxu0 0
      %1355 = vmatprep.subr.bf16.mxu0 0
      %1356 = vmatpush1.bf16.msra.mxu0 0
      %1357 = vmatprep.subr.bf16.mxu0 0
      %1358 = vmatpush1.bf16.msra.mxu0 0
      %1359 = vmatprep.subr.bf16.mxu0 0
      %1360 = vmatpush1.bf16.msra.mxu0 0
      %1361 = vmatprep.subr.bf16.mxu0 0
      %1362 = vmatpush1.bf16.msra.mxu0 0
      %1363 = vmatprep.mubr.bf16.mxu0 0
      %1364 = vmatmul.mubr.bf16.gmra.mrb[0].mxu0 %v1228
      %v1365 = vpop.f32.mrb[0].mxu0
      %v1366 = vadd.f32 %v1281, %v1365
      %v1367 = vpop.f32.mrb[0].mxu0
      %v1368 = vpop.f32.mrb[0].mxu0
      %v1369 = vadd.f32 %v1281, %v1368
      %v1370 = vpop.f32.mrb[0].mxu0
      %1371 = vmatprep.mubr.bf16.mxu0 0
      %1372 = vmatmul.mubr.bf16.gmra.mrb[0].mxu0 %v1229
      %v1373 = vpop.f32.mrb[0].mxu0
      %v1374 = vadd.f32 %v1281, %v1373
      %v1375 = vpop.f32.mrb[0].mxu0
      %v1376 = vpop.f32.mrb[0].mxu0
      %v1377 = vadd.f32 %v1281, %v1376
      %v1378 = vpop.f32.mrb[0].mxu0
      %1379 = vmatprep.mubr.bf16.mxu0 0
      %1380 = vmatmul.mubr.bf16.gmra.mrb[0].mxu0 %v1230
      %v1381 = vpop.f32.mrb[0].mxu0
      %v1382 = vadd.f32 %v1281, %v1381
      %v1383 = vpop.f32.mrb[0].mxu0
      %v1384 = vpop.f32.mrb[0].mxu0
      %v1385 = vadd.f32 %v1281, %v1384
      %v1386 = vpop.f32.mrb[0].mxu0
      %1387 = vmatprep.mubr.bf16.mxu0 0
      %1388 = vmatmul.mubr.bf16.gmra.mrb[0].mxu0 %v1231
      %v1389 = vpop.f32.mrb[0].mxu0
      %v1390 = vadd.f32 %v1281, %v1389
      %v1391 = vpop.f32.mrb[0].mxu0
      %v1392 = vpop.f32.mrb[0].mxu0
      %v1393 = vadd.f32 %v1281, %v1392
      %v1394 = vpop.f32.mrb[0].mxu0
      %1395 = vmatprep.mubr.bf16.mxu0 0
      %1396 = vmatmul.mubr.bf16.gmra.mrb[0].mxu0 %v1232
      %v1397 = vpop.f32.mrb[0].mxu0
      %v1398 = vadd.f32 %v1281, %v1397
      %v1399 = vpop.f32.mrb[0].mxu0
      %v1400 = vpop.f32.mrb[0].mxu0
      %v1401 = vadd.f32 %v1281, %v1400
      %v1402 = vpop.f32.mrb[0].mxu0
      %1403 = vmatprep.mubr.bf16.mxu0 0
      %1404 = vmatmul.mubr.bf16.gmra.mrb[0].mxu0 %v1233
      %v1405 = vpop.f32.mrb[0].mxu0
      %v1406 = vadd.f32 %v1281, %v1405
      %v1407 = vpop.f32.mrb[0].mxu0
      %v1408 = vpop.f32.mrb[0].mxu0
      %v1409 = vadd.f32 %v1281, %v1408
      %v1410 = vpop.f32.mrb[0].mxu0
      %1411 = vmatprep.mubr.bf16.mxu0 0
      %1412 = vmatmul.mubr.bf16.gmra.mrb[0].mxu0 %v1234
      %v1413 = vpop.f32.mrb[0].mxu0
      %v1414 = vadd.f32 %v1281, %v1413
      %v1415 = vpop.f32.mrb[0].mxu0
      %v1416 = vpop.f32.mrb[0].mxu0
      %v1417 = vadd.f32 %v1281, %v1416
      %v1418 = vpop.f32.mrb[0].mxu0
      %1419 = vmatprep.mubr.bf16.mxu0 0
      %1420 = vmatmul.mubr.bf16.gmra.mrb[0].mxu0 %v1235
      %v1421 = vpop.f32.mrb[0].mxu0
      %v1422 = vadd.f32 %v1281, %v1421
      %v1423 = vpop.f32.mrb[0].mxu0
      %v1424 = vpop.f32.mrb[0].mxu0
      %v1425 = vadd.f32 %v1281, %v1424
      %v1426 = vpop.f32.mrb[0].mxu0
      %1427 = vmatprep.mubr.bf16.mxu0 0
      %1428 = vmatmul.mubr.bf16.gmra.mrb[0].mxu0 %v1236
      %v1429 = vpop.f32.mrb[0].mxu0
      %v1430 = vadd.f32 %v1281, %v1429
      %v1431 = vpop.f32.mrb[0].mxu0
      %v1432 = vpop.f32.mrb[0].mxu0
      %v1433 = vadd.f32 %v1281, %v1432
      %v1434 = vpop.f32.mrb[0].mxu0
      %1435 = vmatprep.mubr.bf16.mxu0 0
      %1436 = vmatmul.mubr.bf16.gmra.mrb[0].mxu0 %v1237
      %v1437 = vpop.f32.mrb[0].mxu0
      %v1438 = vadd.f32 %v1281, %v1437
      %v1439 = vpop.f32.mrb[0].mxu0
      %v1440 = vpop.f32.mrb[0].mxu0
      %v1441 = vadd.f32 %v1281, %v1440
      %v1442 = vpop.f32.mrb[0].mxu0
      %1443 = vmatprep.mubr.bf16.mxu0 0
      %1444 = vmatmul.mubr.bf16.gmra.mrb[0].mxu0 %v1238
      %v1445 = vpop.f32.mrb[0].mxu0
      %v1446 = vadd.f32 %v1281, %v1445
      %v1447 = vpop.f32.mrb[0].mxu0
      %v1448 = vpop.f32.mrb[0].mxu0
      %v1449 = vadd.f32 %v1281, %v1448
      %v1450 = vpop.f32.mrb[0].mxu0
      %1451 = vmatprep.mubr.bf16.mxu0 0
      %1452 = vmatmul.mubr.bf16.gmra.mrb[0].mxu0 %v1239
      %v1453 = vpop.f32.mrb[0].mxu0
      %v1454 = vadd.f32 %v1281, %v1453
      %v1455 = vpop.f32.mrb[0].mxu0
      %v1456 = vpop.f32.mrb[0].mxu0
      %v1457 = vadd.f32 %v1281, %v1456
      %v1458 = vpop.f32.mrb[0].mxu0
      %1459 = vmatprep.mubr.bf16.mxu0 0
      %1460 = vmatmul.mubr.bf16.gmra.mrb[0].mxu0 %v1240
      %v1461 = vpop.f32.mrb[0].mxu0
      %v1462 = vadd.f32 %v1281, %v1461
      %v1463 = vpop.f32.mrb[0].mxu0
      %v1464 = vpop.f32.mrb[0].mxu0
      %v1465 = vadd.f32 %v1281, %v1464
      %v1466 = vpop.f32.mrb[0].mxu0
      %1467 = vmatprep.mubr.bf16.mxu0 0
      %1468 = vmatmul.mubr.bf16.gmra.mrb[0].mxu0 %v1241
      %v1469 = vpop.f32.mrb[0].mxu0
      %v1470 = vadd.f32 %v1281, %v1469
      %v1471 = vpop.f32.mrb[0].mxu0
      %v1472 = vpop.f32.mrb[0].mxu0
      %v1473 = vadd.f32 %v1281, %v1472
      %v1474 = vpop.f32.mrb[0].mxu0
      %1475 = vmatprep.mubr.bf16.mxu0 0
      %1476 = vmatmul.mubr.bf16.gmra.mrb[0].mxu0 %v1242
      %v1477 = vpop.f32.mrb[0].mxu0
      %v1478 = vadd.f32 %v1281, %v1477
      %v1479 = vpop.f32.mrb[0].mxu0
      %v1480 = vpop.f32.mrb[0].mxu0
      %v1481 = vadd.f32 %v1281, %v1480
      %v1482 = vpop.f32.mrb[0].mxu0
      %1483 = vmatprep.mubr.bf16.mxu0 0
      %1484 = vmatmul.mubr.bf16.gmra.mrb[0].mxu0 %v1243
      %v1485 = vpop.f32.mrb[0].mxu0
      %v1486 = vadd.f32 %v1281, %v1485
      %v1487 = vpop.f32.mrb[0].mxu0
      %v1488 = vpop.f32.mrb[0].mxu0
      %v1489 = vadd.f32 %v1281, %v1488
      %v1490 = vpop.f32.mrb[0].mxu0
      %1491 = vmatprep.mubr.bf16.mxu0 0
      %1492 = vmatmul.mubr.bf16.gmra.mrb[0].mxu0 %v1244
      %v1493 = vpop.f32.mrb[0].mxu0
      %v1494 = vadd.f32 %v1281, %v1493
      %v1495 = vpop.f32.mrb[0].mxu0
      %v1496 = vpop.f32.mrb[0].mxu0
      %v1497 = vadd.f32 %v1281, %v1496
      %v1498 = vpop.f32.mrb[0].mxu0
      %1499 = vmatprep.mubr.bf16.mxu0 0
      %1500 = vmatmul.mubr.bf16.gmra.mrb[0].mxu0 %v1245
      %v1501 = vpop.f32.mrb[0].mxu0
      %v1502 = vadd.f32 %v1281, %v1501
      %v1503 = vpop.f32.mrb[0].mxu0
      %v1504 = vpop.f32.mrb[0].mxu0
      %v1505 = vadd.f32 %v1281, %v1504
      %v1506 = vpop.f32.mrb[0].mxu0
      %1507 = vmatprep.mubr.bf16.mxu0 0
      %1508 = vmatmul.mubr.bf16.gmra.mrb[0].mxu0 %v1246
      %v1509 = vpop.f32.mrb[0].mxu0
      %v1510 = vadd.f32 %v1281, %v1509
      %v1511 = vpop.f32.mrb[0].mxu0
      %v1512 = vpop.f32.mrb[0].mxu0
      %v1513 = vadd.f32 %v1281, %v1512
      %v1514 = vpop.f32.mrb[0].mxu0
      %1515 = vmatprep.mubr.bf16.mxu0 0
      %1516 = vmatmul.mubr.bf16.gmra.mrb[0].mxu0 %v1247
      %v1517 = vpop.f32.mrb[0].mxu0
      %v1518 = vadd.f32 %v1281, %v1517
      %v1519 = vpop.f32.mrb[0].mxu0
      %v1520 = vpop.f32.mrb[0].mxu0
      %v1521 = vadd.f32 %v1281, %v1520
      %v1522 = vpop.f32.mrb[0].mxu0
      %1523 = vmatprep.mubr.bf16.mxu0 0
      %1524 = vmatmul.mubr.bf16.gmra.mrb[0].mxu0 %v1248
      %v1525 = vpop.f32.mrb[0].mxu0
      %v1526 = vadd.f32 %v1281, %v1525
      %v1527 = vpop.f32.mrb[0].mxu0
      %v1528 = vpop.f32.mrb[0].mxu0
      %v1529 = vadd.f32 %v1281, %v1528
      %v1530 = vpop.f32.mrb[0].mxu0
      %1531 = vmatprep.mubr.bf16.mxu0 0
      %1532 = vmatmul.mubr.bf16.gmra.mrb[0].mxu0 %v1249
      %v1533 = vpop.f32.mrb[0].mxu0
      %v1534 = vadd.f32 %v1281, %v1533
      %v1535 = vpop.f32.mrb[0].mxu0
      %v1536 = vpop.f32.mrb[0].mxu0
      %v1537 = vadd.f32 %v1281, %v1536
      %v1538 = vpop.f32.mrb[0].mxu0
      %1539 = vmatprep.mubr.bf16.mxu0 0
      %1540 = vmatmul.mubr.bf16.gmra.mrb[0].mxu0 %v1250
      %v1541 = vpop.f32.mrb[0].mxu0
      %v1542 = vadd.f32 %v1281, %v1541
      %v1543 = vpop.f32.mrb[0].mxu0
      %v1544 = vpop.f32.mrb[0].mxu0
      %v1545 = vadd.f32 %v1281, %v1544
      %v1546 = vpop.f32.mrb[0].mxu0
      %1547 = vmatprep.mubr.bf16.mxu0 0
      %1548 = vmatmul.mubr.bf16.gmra.mrb[0].mxu0 %v1251
      %v1549 = vpop.f32.mrb[0].mxu0
      %v1550 = vadd.f32 %v1281, %v1549
      %v1551 = vpop.f32.mrb[0].mxu0
      %v1552 = vpop.f32.mrb[0].mxu0
      %v1553 = vadd.f32 %v1281, %v1552
      %v1554 = vpop.f32.mrb[0].mxu0
      %1555 = vmatprep.mubr.bf16.mxu0 0
      %1556 = vmatmul.mubr.bf16.gmra.mrb[0].mxu0 %v1252
      %v1557 = vpop.f32.mrb[0].mxu0
      %v1558 = vadd.f32 %v1281, %v1557
      %v1559 = vpop.f32.mrb[0].mxu0
      %v1560 = vpop.f32.mrb[0].mxu0
      %v1561 = vadd.f32 %v1281, %v1560
      %v1562 = vpop.f32.mrb[0].mxu0
      %1563 = vmatprep.mubr.bf16.mxu0 0
      %1564 = vmatmul.mubr.bf16.gmra.mrb[0].mxu0 %v1253
      %v1565 = vpop.f32.mrb[0].mxu0
      %v1566 = vadd.f32 %v1281, %v1565
      %v1567 = vpop.f32.mrb[0].mxu0
      %v1568 = vpop.f32.mrb[0].mxu0
      %v1569 = vadd.f32 %v1281, %v1568
      %v1570 = vpop.f32.mrb[0].mxu0
      %1571 = vmatprep.mubr.bf16.mxu0 0
      %1572 = vmatmul.mubr.bf16.gmra.mrb[0].mxu0 %v1254
      %v1573 = vpop.f32.mrb[0].mxu0
      %v1574 = vadd.f32 %v1281, %v1573
      %v1575 = vpop.f32.mrb[0].mxu0
      %v1576 = vpop.f32.mrb[0].mxu0
      %v1577 = vadd.f32 %v1281, %v1576
      %v1578 = vpop.f32.mrb[0].mxu0
      %1579 = vmatprep.mubr.bf16.mxu0 0
      %1580 = vmatmul.mubr.bf16.gmra.mrb[0].mxu0 %v1255
      %v1581 = vpop.f32.mrb[0].mxu0
      %v1582 = vadd.f32 %v1281, %v1581
      %v1583 = vpop.f32.mrb[0].mxu0
      %v1584 = vpop.f32.mrb[0].mxu0
      %v1585 = vadd.f32 %v1281, %v1584
      %v1586 = vpop.f32.mrb[0].mxu0
      %1587 = vmatprep.mubr.bf16.mxu0 0
      %1588 = vmatmul.mubr.bf16.gmra.mrb[0].mxu0 %v1256
      %v1589 = vpop.f32.mrb[0].mxu0
      %v1590 = vadd.f32 %v1281, %v1589
      %v1591 = vpop.f32.mrb[0].mxu0
      %v1592 = vpop.f32.mrb[0].mxu0
      %v1593 = vadd.f32 %v1281, %v1592
      %v1594 = vpop.f32.mrb[0].mxu0
      %1595 = vmatprep.mubr.bf16.mxu0 0
      %1596 = vmatmul.mubr.bf16.gmra.mrb[0].mxu0 %v1257
      %v1597 = vpop.f32.mrb[0].mxu0
      %v1598 = vadd.f32 %v1281, %v1597
      %v1599 = vpop.f32.mrb[0].mxu0
      %v1600 = vpop.f32.mrb[0].mxu0
      %v1601 = vadd.f32 %v1281, %v1600
      %v1602 = vpop.f32.mrb[0].mxu0
      %1603 = vmatprep.mubr.bf16.mxu0 0
      %1604 = vmatmul.mubr.bf16.gmra.mrb[0].mxu0 %v1258
      %v1605 = vpop.f32.mrb[0].mxu0
      %v1606 = vadd.f32 %v1281, %v1605
      %v1607 = vpop.f32.mrb[0].mxu0
      %v1608 = vpop.f32.mrb[0].mxu0
      %v1609 = vadd.f32 %v1281, %v1608
      %v1610 = vpop.f32.mrb[0].mxu0
      %1611 = vmatprep.mubr.bf16.mxu0 0
      %1612 = vmatmul.mubr.bf16.gmra.mrb[0].mxu0 %v1259
      %v1613 = vpop.f32.mrb[0].mxu0
      %v1614 = vadd.f32 %v1281, %v1613
      %v1615 = vpop.f32.mrb[0].mxu0
      %v1616 = vpop.f32.mrb[0].mxu0
      %v1617 = vadd.f32 %v1281, %v1616
      %v1618 = vpop.f32.mrb[0].mxu0
      %1619 = vdwg.mxu0
      %v1620 = vmax.f32 %v1366, 0.0
      %v1621 = vmax.f32 %v1369, 0.0
      %v1622 = vmax.f32 %v1374, 0.0
      %v1623 = vmax.f32 %v1377, 0.0
      %v1624 = vmax.f32 %v1382, 0.0
      %v1625 = vmax.f32 %v1385, 0.0
      %v1626 = vmax.f32 %v1390, 0.0
      %v1627 = vmax.f32 %v1393, 0.0
      %v1628 = vmax.f32 %v1398, 0.0
      %v1629 = vmax.f32 %v1401, 0.0
      %v1630 = vmax.f32 %v1406, 0.0
      %v1631 = vmax.f32 %v1409, 0.0
      %v1632 = vmax.f32 %v1414, 0.0
      %v1633 = vmax.f32 %v1417, 0.0
      %v1634 = vmax.f32 %v1422, 0.0
      %v1635 = vmax.f32 %v1425, 0.0
      %v1636 = vmax.f32 %v1430, 0.0
      %v1637 = vmax.f32 %v1433, 0.0
      %v1638 = vmax.f32 %v1438, 0.0
      %v1639 = vmax.f32 %v1441, 0.0
      %v1640 = vmax.f32 %v1446, 0.0
      %v1641 = vmax.f32 %v1449, 0.0
      %v1642 = vmax.f32 %v1454, 0.0
      %v1643 = vmax.f32 %v1457, 0.0
      %v1644 = vmax.f32 %v1462, 0.0
      %v1645 = vmax.f32 %v1465, 0.0
      %v1646 = vmax.f32 %v1470, 0.0
      %v1647 = vmax.f32 %v1473, 0.0
      %v1648 = vmax.f32 %v1478, 0.0
      %v1649 = vmax.f32 %v1481, 0.0
      %v1650 = vmax.f32 %v1486, 0.0
      %v1651 = vmax.f32 %v1489, 0.0
      %v1652 = vmax.f32 %v1494, 0.0
      %v1653 = vmax.f32 %v1497, 0.0
      %v1654 = vmax.f32 %v1502, 0.0
      %v1655 = vmax.f32 %v1505, 0.0
      %v1656 = vmax.f32 %v1510, 0.0
      %v1657 = vmax.f32 %v1513, 0.0
      %v1658 = vmax.f32 %v1518, 0.0
      %v1659 = vmax.f32 %v1521, 0.0
      %v1660 = vmax.f32 %v1526, 0.0
      %v1661 = vmax.f32 %v1529, 0.0
      %v1662 = vmax.f32 %v1534, 0.0
      %v1663 = vmax.f32 %v1537, 0.0
      %v1664 = vmax.f32 %v1542, 0.0
      %v1665 = vmax.f32 %v1545, 0.0
      %v1666 = vmax.f32 %v1550, 0.0
      %v1667 = vmax.f32 %v1553, 0.0
      %v1668 = vmax.f32 %v1558, 0.0
      %v1669 = vmax.f32 %v1561, 0.0
      %v1670 = vmax.f32 %v1566, 0.0
      %v1671 = vmax.f32 %v1569, 0.0
      %v1672 = vmax.f32 %v1574, 0.0
      %v1673 = vmax.f32 %v1577, 0.0
      %v1674 = vmax.f32 %v1582, 0.0
      %v1675 = vmax.f32 %v1585, 0.0
      %v1676 = vmax.f32 %v1590, 0.0
      %v1677 = vmax.f32 %v1593, 0.0
      %v1678 = vmax.f32 %v1598, 0.0
      %v1679 = vmax.f32 %v1601, 0.0
      %v1680 = vmax.f32 %v1606, 0.0
      %v1681 = vmax.f32 %v1609, 0.0
      %v1682 = vmax.f32 %v1614, 0.0
      %v1683 = vmax.f32 %v1617, 0.0
      %v1684 = vpack.c.bf16 %v1621, %v1620
      %v1685 = vpack.c.bf16 %v1623, %v1622
      %v1686 = vpack.c.bf16 %v1625, %v1624
      %v1687 = vpack.c.bf16 %v1627, %v1626
      %v1688 = vpack.c.bf16 %v1629, %v1628
      %v1689 = vpack.c.bf16 %v1631, %v1630
      %v1690 = vpack.c.bf16 %v1633, %v1632
      %v1691 = vpack.c.bf16 %v1635, %v1634
      %v1692 = vpack.c.bf16 %v1637, %v1636
      %v1693 = vpack.c.bf16 %v1639, %v1638
      %v1694 = vpack.c.bf16 %v1641, %v1640
      %v1695 = vpack.c.bf16 %v1643, %v1642
      %v1696 = vpack.c.bf16 %v1645, %v1644
      %v1697 = vpack.c.bf16 %v1647, %v1646
      %v1698 = vpack.c.bf16 %v1649, %v1648
      %v1699 = vpack.c.bf16 %v1651, %v1650
      %v1700 = vpack.c.bf16 %v1653, %v1652
      %v1701 = vpack.c.bf16 %v1655, %v1654
      %v1702 = vpack.c.bf16 %v1657, %v1656
      %v1703 = vpack.c.bf16 %v1659, %v1658
      %v1704 = vpack.c.bf16 %v1661, %v1660
      %v1705 = vpack.c.bf16 %v1663, %v1662
      %v1706 = vpack.c.bf16 %v1665, %v1664
      %v1707 = vpack.c.bf16 %v1667, %v1666
      %v1708 = vpack.c.bf16 %v1669, %v1668
      %v1709 = vpack.c.bf16 %v1671, %v1670
      %v1710 = vpack.c.bf16 %v1673, %v1672
      %v1711 = vpack.c.bf16 %v1675, %v1674
      %v1712 = vpack.c.bf16 %v1677, %v1676
      %v1713 = vpack.c.bf16 %v1679, %v1678
      %v1714 = vpack.c.bf16 %v1681, %v1680
      %v1715 = vpack.c.bf16 %v1683, %v1682
      %v1716 = vld [vmem:[%s6] sm:$0xf]
      %v1717 = vld [vmem:[%s6 + $0x4] sm:$0xf]
      %v1718 = vld [vmem:[%s6 + $0x8] sm:$0xf]
      %v1719 = vld [vmem:[%s6 + $0xc] sm:$0xf]
      %v1720 = vld [vmem:[%s6 + $0x10] sm:$0xf]
      %v1721 = vld [vmem:[%s6 + $0x14] sm:$0xf]
      %v1722 = vld [vmem:[%s6 + $0x18] sm:$0xf]
      %v1723 = vld [vmem:[%s6 + $0x1c] sm:$0xf]
      %v1724 = vld [vmem:[%s6 + $0x20] sm:$0xf]
      %v1725 = vld [vmem:[%s6 + $0x24] sm:$0xf]
      %v1726 = vld [vmem:[%s6 + $0x28] sm:$0xf]
      %v1727 = vld [vmem:[%s6 + $0x2c] sm:$0xf]
      %v1728 = vld [vmem:[%s6 + $0x30] sm:$0xf]
      %v1729 = vld [vmem:[%s6 + $0x34] sm:$0xf]
      %v1730 = vld [vmem:[%s6 + $0x38] sm:$0xf]
      %v1731 = vld [vmem:[%s6 + $0x3c] sm:$0xf]
      %v1732 = vld [vmem:[%s7] sm:$0x1]
      %v1734 = vlaneseq
      %v1735 = vshrl.u32 %v1734, 7
      %v1736 = vsub.s32 0, %v1735
      %v1737 = vrot.slane %v1732, %v1736
      %v1755 = vunpack.c.l.b16 %v1716
      %v1756 = vunpack.c.l.b16 %v1717
      %v1757 = vunpack.c.l.b16 %v1718
      %v1758 = vunpack.c.l.b16 %v1719
      %v1759 = vunpack.c.l.b16 %v1720
      %v1760 = vunpack.c.l.b16 %v1721
      %v1761 = vunpack.c.l.b16 %v1722
      %v1762 = vunpack.c.l.b16 %v1723
      %v1763 = vunpack.c.l.b16 %v1724
      %v1764 = vunpack.c.l.b16 %v1725
      %v1765 = vunpack.c.l.b16 %v1726
      %v1766 = vunpack.c.l.b16 %v1727
      %v1767 = vunpack.c.l.b16 %v1728
      %v1768 = vunpack.c.l.b16 %v1729
      %v1769 = vunpack.c.l.b16 %v1730
      %v1770 = vunpack.c.l.b16 %v1731
      %v1771 = vpack.c.b16 %v1756, %v1755
      %v1772 = vpack.c.b16 %v1758, %v1757
      %v1773 = vpack.c.b16 %v1760, %v1759
      %v1774 = vpack.c.b16 %v1762, %v1761
      %v1775 = vpack.c.b16 %v1764, %v1763
      %v1776 = vpack.c.b16 %v1766, %v1765
      %v1777 = vpack.c.b16 %v1768, %v1767
      %v1778 = vpack.c.b16 %v1770, %v1769
      %1787 = vmatprep.subr.bf16.mxu0 0
      %1788 = vmatpush1.bf16.msra.mxu0 %v1771
      %1789 = vmatprep.subr.bf16.mxu0 0
      %1790 = vmatpush1.bf16.msra.mxu0 %v1772
      %1791 = vmatprep.subr.bf16.mxu0 0
      %1792 = vmatpush1.bf16.msra.mxu0 %v1773
      %1793 = vmatprep.subr.bf16.mxu0 0
      %1794 = vmatpush1.bf16.msra.mxu0 %v1774
      %1795 = vmatprep.subr.bf16.mxu0 0
      %1796 = vmatpush1.bf16.msra.mxu0 %v1775
      %1797 = vmatprep.subr.bf16.mxu0 0
      %1798 = vmatpush1.bf16.msra.mxu0 %v1776
      %1799 = vmatprep.subr.bf16.mxu0 0
      %1800 = vmatpush1.bf16.msra.mxu0 %v1777
      %1801 = vmatprep.subr.bf16.mxu0 0
      %1802 = vmatpush1.bf16.msra.mxu0 %v1778
      %1803 = vmatprep.subr.bf16.mxu0 0
      %1804 = vmatpush1.bf16.msra.mxu0 0
      %1805 = vmatprep.subr.bf16.mxu0 0
      %1806 = vmatpush1.bf16.msra.mxu0 0
      %1807 = vmatprep.subr.bf16.mxu0 0
      %1808 = vmatpush1.bf16.msra.mxu0 0
      %1809 = vmatprep.subr.bf16.mxu0 0
      %1810 = vmatpush1.bf16.msra.mxu0 0
      %1811 = vmatprep.subr.bf16.mxu0 0
      %1812 = vmatpush1.bf16.msra.mxu0 0
      %1813 = vmatprep.subr.bf16.mxu0 0
      %1814 = vmatpush1.bf16.msra.mxu0 0
      %1815 = vmatprep.subr.bf16.mxu0 0
      %1816 = vmatpush1.bf16.msra.mxu0 0
      %1817 = vmatprep.subr.bf16.mxu0 0
      %1818 = vmatpush1.bf16.msra.mxu0 0
      %1819 = vmatprep.mubr.bf16.mxu0 0
      %1820 = vmatmul.mubr.bf16.gmra.mrb[0].mxu0 %v1684
      %v1821 = vpop.f32.mrb[0].mxu0
      %v1822 = vadd.f32 %v1737, %v1821
      %v1823 = vpop.f32.mrb[0].mxu0
      %v1824 = vpop.f32.mrb[0].mxu0
      %v1825 = vadd.f32 %v1737, %v1824
      %v1826 = vpop.f32.mrb[0].mxu0
      %1827 = vmatprep.mubr.bf16.mxu0 0
      %1828 = vmatmul.mubr.bf16.gmra.mrb[0].mxu0 %v1685
      %v1829 = vpop.f32.mrb[0].mxu0
      %v1830 = vadd.f32 %v1737, %v1829
      %v1831 = vpop.f32.mrb[0].mxu0
      %v1832 = vpop.f32.mrb[0].mxu0
      %v1833 = vadd.f32 %v1737, %v1832
      %v1834 = vpop.f32.mrb[0].mxu0
      %1835 = vmatprep.mubr.bf16.mxu0 0
      %1836 = vmatmul.mubr.bf16.gmra.mrb[0].mxu0 %v1686
      %v1837 = vpop.f32.mrb[0].mxu0
      %v1838 = vadd.f32 %v1737, %v1837
      %v1839 = vpop.f32.mrb[0].mxu0
      %v1840 = vpop.f32.mrb[0].mxu0
      %v1841 = vadd.f32 %v1737, %v1840
      %v1842 = vpop.f32.mrb[0].mxu0
      %1843 = vmatprep.mubr.bf16.mxu0 0
      %1844 = vmatmul.mubr.bf16.gmra.mrb[0].mxu0 %v1687
      %v1845 = vpop.f32.mrb[0].mxu0
      %v1846 = vadd.f32 %v1737, %v1845
      %v1847 = vpop.f32.mrb[0].mxu0
      %v1848 = vpop.f32.mrb[0].mxu0
      %v1849 = vadd.f32 %v1737, %v1848
      %v1850 = vpop.f32.mrb[0].mxu0
      %1851 = vmatprep.mubr.bf16.mxu0 0
      %1852 = vmatmul.mubr.bf16.gmra.mrb[0].mxu0 %v1688
      %v1853 = vpop.f32.mrb[0].mxu0
      %v1854 = vadd.f32 %v1737, %v1853
      %v1855 = vpop.f32.mrb[0].mxu0
      %v1856 = vpop.f32.mrb[0].mxu0
      %v1857 = vadd.f32 %v1737, %v1856
      %v1858 = vpop.f32.mrb[0].mxu0
      %1859 = vmatprep.mubr.bf16.mxu0 0
      %1860 = vmatmul.mubr.bf16.gmra.mrb[0].mxu0 %v1689
      %v1861 = vpop.f32.mrb[0].mxu0
      %v1862 = vadd.f32 %v1737, %v1861
      %v1863 = vpop.f32.mrb[0].mxu0
      %v1864 = vpop.f32.mrb[0].mxu0
      %v1865 = vadd.f32 %v1737, %v1864
      %v1866 = vpop.f32.mrb[0].mxu0
      %1867 = vmatprep.mubr.bf16.mxu0 0
      %1868 = vmatmul.mubr.bf16.gmra.mrb[0].mxu0 %v1690
      %v1869 = vpop.f32.mrb[0].mxu0
      %v1870 = vadd.f32 %v1737, %v1869
      %v1871 = vpop.f32.mrb[0].mxu0
      %v1872 = vpop.f32.mrb[0].mxu0
      %v1873 = vadd.f32 %v1737, %v1872
      %v1874 = vpop.f32.mrb[0].mxu0
      %1875 = vmatprep.mubr.bf16.mxu0 0
      %1876 = vmatmul.mubr.bf16.gmra.mrb[0].mxu0 %v1691
      %v1877 = vpop.f32.mrb[0].mxu0
      %v1878 = vadd.f32 %v1737, %v1877
      %v1879 = vpop.f32.mrb[0].mxu0
      %v1880 = vpop.f32.mrb[0].mxu0
      %v1881 = vadd.f32 %v1737, %v1880
      %v1882 = vpop.f32.mrb[0].mxu0
      %1883 = vmatprep.mubr.bf16.mxu0 0
      %1884 = vmatmul.mubr.bf16.gmra.mrb[0].mxu0 %v1692
      %v1885 = vpop.f32.mrb[0].mxu0
      %v1886 = vadd.f32 %v1737, %v1885
      %v1887 = vpop.f32.mrb[0].mxu0
      %v1888 = vpop.f32.mrb[0].mxu0
      %v1889 = vadd.f32 %v1737, %v1888
      %v1890 = vpop.f32.mrb[0].mxu0
      %1891 = vmatprep.mubr.bf16.mxu0 0
      %1892 = vmatmul.mubr.bf16.gmra.mrb[0].mxu0 %v1693
      %v1893 = vpop.f32.mrb[0].mxu0
      %v1894 = vadd.f32 %v1737, %v1893
      %v1895 = vpop.f32.mrb[0].mxu0
      %v1896 = vpop.f32.mrb[0].mxu0
      %v1897 = vadd.f32 %v1737, %v1896
      %v1898 = vpop.f32.mrb[0].mxu0
      %1899 = vmatprep.mubr.bf16.mxu0 0
      %1900 = vmatmul.mubr.bf16.gmra.mrb[0].mxu0 %v1694
      %v1901 = vpop.f32.mrb[0].mxu0
      %v1902 = vadd.f32 %v1737, %v1901
      %v1903 = vpop.f32.mrb[0].mxu0
      %v1904 = vpop.f32.mrb[0].mxu0
      %v1905 = vadd.f32 %v1737, %v1904
      %v1906 = vpop.f32.mrb[0].mxu0
      %1907 = vmatprep.mubr.bf16.mxu0 0
      %1908 = vmatmul.mubr.bf16.gmra.mrb[0].mxu0 %v1695
      %v1909 = vpop.f32.mrb[0].mxu0
      %v1910 = vadd.f32 %v1737, %v1909
      %v1911 = vpop.f32.mrb[0].mxu0
      %v1912 = vpop.f32.mrb[0].mxu0
      %v1913 = vadd.f32 %v1737, %v1912
      %v1914 = vpop.f32.mrb[0].mxu0
      %1915 = vmatprep.mubr.bf16.mxu0 0
      %1916 = vmatmul.mubr.bf16.gmra.mrb[0].mxu0 %v1696
      %v1917 = vpop.f32.mrb[0].mxu0
      %v1918 = vadd.f32 %v1737, %v1917
      %v1919 = vpop.f32.mrb[0].mxu0
      %v1920 = vpop.f32.mrb[0].mxu0
      %v1921 = vadd.f32 %v1737, %v1920
      %v1922 = vpop.f32.mrb[0].mxu0
      %1923 = vmatprep.mubr.bf16.mxu0 0
      %1924 = vmatmul.mubr.bf16.gmra.mrb[0].mxu0 %v1697
      %v1925 = vpop.f32.mrb[0].mxu0
      %v1926 = vadd.f32 %v1737, %v1925
      %v1927 = vpop.f32.mrb[0].mxu0
      %v1928 = vpop.f32.mrb[0].mxu0
      %v1929 = vadd.f32 %v1737, %v1928
      %v1930 = vpop.f32.mrb[0].mxu0
      %1931 = vmatprep.mubr.bf16.mxu0 0
      %1932 = vmatmul.mubr.bf16.gmra.mrb[0].mxu0 %v1698
      %v1933 = vpop.f32.mrb[0].mxu0
      %v1934 = vadd.f32 %v1737, %v1933
      %v1935 = vpop.f32.mrb[0].mxu0
      %v1936 = vpop.f32.mrb[0].mxu0
      %v1937 = vadd.f32 %v1737, %v1936
      %v1938 = vpop.f32.mrb[0].mxu0
      %1939 = vmatprep.mubr.bf16.mxu0 0
      %1940 = vmatmul.mubr.bf16.gmra.mrb[0].mxu0 %v1699
      %v1941 = vpop.f32.mrb[0].mxu0
      %v1942 = vadd.f32 %v1737, %v1941
      %v1943 = vpop.f32.mrb[0].mxu0
      %v1944 = vpop.f32.mrb[0].mxu0
      %v1945 = vadd.f32 %v1737, %v1944
      %v1946 = vpop.f32.mrb[0].mxu0
      %1947 = vmatprep.mubr.bf16.mxu0 0
      %1948 = vmatmul.mubr.bf16.gmra.mrb[0].mxu0 %v1700
      %v1949 = vpop.f32.mrb[0].mxu0
      %v1950 = vadd.f32 %v1737, %v1949
      %v1951 = vpop.f32.mrb[0].mxu0
      %v1952 = vpop.f32.mrb[0].mxu0
      %v1953 = vadd.f32 %v1737, %v1952
      %v1954 = vpop.f32.mrb[0].mxu0
      %1955 = vmatprep.mubr.bf16.mxu0 0
      %1956 = vmatmul.mubr.bf16.gmra.mrb[0].mxu0 %v1701
      %v1957 = vpop.f32.mrb[0].mxu0
      %v1958 = vadd.f32 %v1737, %v1957
      %v1959 = vpop.f32.mrb[0].mxu0
      %v1960 = vpop.f32.mrb[0].mxu0
      %v1961 = vadd.f32 %v1737, %v1960
      %v1962 = vpop.f32.mrb[0].mxu0
      %1963 = vmatprep.mubr.bf16.mxu0 0
      %1964 = vmatmul.mubr.bf16.gmra.mrb[0].mxu0 %v1702
      %v1965 = vpop.f32.mrb[0].mxu0
      %v1966 = vadd.f32 %v1737, %v1965
      %v1967 = vpop.f32.mrb[0].mxu0
      %v1968 = vpop.f32.mrb[0].mxu0
      %v1969 = vadd.f32 %v1737, %v1968
      %v1970 = vpop.f32.mrb[0].mxu0
      %1971 = vmatprep.mubr.bf16.mxu0 0
      %1972 = vmatmul.mubr.bf16.gmra.mrb[0].mxu0 %v1703
      %v1973 = vpop.f32.mrb[0].mxu0
      %v1974 = vadd.f32 %v1737, %v1973
      %v1975 = vpop.f32.mrb[0].mxu0
      %v1976 = vpop.f32.mrb[0].mxu0
      %v1977 = vadd.f32 %v1737, %v1976
      %v1978 = vpop.f32.mrb[0].mxu0
      %1979 = vmatprep.mubr.bf16.mxu0 0
      %1980 = vmatmul.mubr.bf16.gmra.mrb[0].mxu0 %v1704
      %v1981 = vpop.f32.mrb[0].mxu0
      %v1982 = vadd.f32 %v1737, %v1981
      %v1983 = vpop.f32.mrb[0].mxu0
      %v1984 = vpop.f32.mrb[0].mxu0
      %v1985 = vadd.f32 %v1737, %v1984
      %v1986 = vpop.f32.mrb[0].mxu0
      %1987 = vmatprep.mubr.bf16.mxu0 0
      %1988 = vmatmul.mubr.bf16.gmra.mrb[0].mxu0 %v1705
      %v1989 = vpop.f32.mrb[0].mxu0
      %v1990 = vadd.f32 %v1737, %v1989
      %v1991 = vpop.f32.mrb[0].mxu0
      %v1992 = vpop.f32.mrb[0].mxu0
      %v1993 = vadd.f32 %v1737, %v1992
      %v1994 = vpop.f32.mrb[0].mxu0
      %1995 = vmatprep.mubr.bf16.mxu0 0
      %1996 = vmatmul.mubr.bf16.gmra.mrb[0].mxu0 %v1706
      %v1997 = vpop.f32.mrb[0].mxu0
      %v1998 = vadd.f32 %v1737, %v1997
      %v1999 = vpop.f32.mrb[0].mxu0
      %v2000 = vpop.f32.mrb[0].mxu0
      %v2001 = vadd.f32 %v1737, %v2000
      %v2002 = vpop.f32.mrb[0].mxu0
      %2003 = vmatprep.mubr.bf16.mxu0 0
      %2004 = vmatmul.mubr.bf16.gmra.mrb[0].mxu0 %v1707
      %v2005 = vpop.f32.mrb[0].mxu0
      %v2006 = vadd.f32 %v1737, %v2005
      %v2007 = vpop.f32.mrb[0].mxu0
      %v2008 = vpop.f32.mrb[0].mxu0
      %v2009 = vadd.f32 %v1737, %v2008
      %v2010 = vpop.f32.mrb[0].mxu0
      %2011 = vmatprep.mubr.bf16.mxu0 0
      %2012 = vmatmul.mubr.bf16.gmra.mrb[0].mxu0 %v1708
      %v2013 = vpop.f32.mrb[0].mxu0
      %v2014 = vadd.f32 %v1737, %v2013
      %v2015 = vpop.f32.mrb[0].mxu0
      %v2016 = vpop.f32.mrb[0].mxu0
      %v2017 = vadd.f32 %v1737, %v2016
      %v2018 = vpop.f32.mrb[0].mxu0
      %2019 = vmatprep.mubr.bf16.mxu0 0
      %2020 = vmatmul.mubr.bf16.gmra.mrb[0].mxu0 %v1709
      %v2021 = vpop.f32.mrb[0].mxu0
      %v2022 = vadd.f32 %v1737, %v2021
      %v2023 = vpop.f32.mrb[0].mxu0
      %v2024 = vpop.f32.mrb[0].mxu0
      %v2025 = vadd.f32 %v1737, %v2024
      %v2026 = vpop.f32.mrb[0].mxu0
      %2027 = vmatprep.mubr.bf16.mxu0 0
      %2028 = vmatmul.mubr.bf16.gmra.mrb[0].mxu0 %v1710
      %v2029 = vpop.f32.mrb[0].mxu0
      %v2030 = vadd.f32 %v1737, %v2029
      %v2031 = vpop.f32.mrb[0].mxu0
      %v2032 = vpop.f32.mrb[0].mxu0
      %v2033 = vadd.f32 %v1737, %v2032
      %v2034 = vpop.f32.mrb[0].mxu0
      %2035 = vmatprep.mubr.bf16.mxu0 0
      %2036 = vmatmul.mubr.bf16.gmra.mrb[0].mxu0 %v1711
      %v2037 = vpop.f32.mrb[0].mxu0
      %v2038 = vadd.f32 %v1737, %v2037
      %v2039 = vpop.f32.mrb[0].mxu0
      %v2040 = vpop.f32.mrb[0].mxu0
      %v2041 = vadd.f32 %v1737, %v2040
      %v2042 = vpop.f32.mrb[0].mxu0
      %2043 = vmatprep.mubr.bf16.mxu0 0
      %2044 = vmatmul.mubr.bf16.gmra.mrb[0].mxu0 %v1712
      %v2045 = vpop.f32.mrb[0].mxu0
      %v2046 = vadd.f32 %v1737, %v2045
      %v2047 = vpop.f32.mrb[0].mxu0
      %v2048 = vpop.f32.mrb[0].mxu0
      %v2049 = vadd.f32 %v1737, %v2048
      %v2050 = vpop.f32.mrb[0].mxu0
      %2051 = vmatprep.mubr.bf16.mxu0 0
      %2052 = vmatmul.mubr.bf16.gmra.mrb[0].mxu0 %v1713
      %v2053 = vpop.f32.mrb[0].mxu0
      %v2054 = vadd.f32 %v1737, %v2053
      %v2055 = vpop.f32.mrb[0].mxu0
      %v2056 = vpop.f32.mrb[0].mxu0
      %v2057 = vadd.f32 %v1737, %v2056
      %v2058 = vpop.f32.mrb[0].mxu0
      %2059 = vmatprep.mubr.bf16.mxu0 0
      %2060 = vmatmul.mubr.bf16.gmra.mrb[0].mxu0 %v1714
      %v2061 = vpop.f32.mrb[0].mxu0
      %v2062 = vadd.f32 %v1737, %v2061
      %v2063 = vpop.f32.mrb[0].mxu0
      %v2064 = vpop.f32.mrb[0].mxu0
      %v2065 = vadd.f32 %v1737, %v2064
      %v2066 = vpop.f32.mrb[0].mxu0
      %2067 = vmatprep.mubr.bf16.mxu0 0
      %2068 = vmatmul.mubr.bf16.gmra.mrb[0].mxu0 %v1715
      %v2069 = vpop.f32.mrb[0].mxu0
      %v2070 = vadd.f32 %v1737, %v2069
      %v2071 = vpop.f32.mrb[0].mxu0
      %v2072 = vpop.f32.mrb[0].mxu0
      %v2073 = vadd.f32 %v1737, %v2072
      %v2074 = vpop.f32.mrb[0].mxu0
      %2075 = vdwg.mxu0
      %v2076 = vmax.f32 %v1822, 0.0
      %v2077 = vmax.f32 %v1825, 0.0
      %v2078 = vmax.f32 %v1830, 0.0
      %v2079 = vmax.f32 %v1833, 0.0
      %v2080 = vmax.f32 %v1838, 0.0
      %v2081 = vmax.f32 %v1841, 0.0
      %v2082 = vmax.f32 %v1846, 0.0
      %v2083 = vmax.f32 %v1849, 0.0
      %v2084 = vmax.f32 %v1854, 0.0
      %v2085 = vmax.f32 %v1857, 0.0
      %v2086 = vmax.f32 %v1862, 0.0
      %v2087 = vmax.f32 %v1865, 0.0
      %v2088 = vmax.f32 %v1870, 0.0
      %v2089 = vmax.f32 %v1873, 0.0
      %v2090 = vmax.f32 %v1878, 0.0
      %v2091 = vmax.f32 %v1881, 0.0
      %v2092 = vmax.f32 %v1886, 0.0
      %v2093 = vmax.f32 %v1889, 0.0
      %v2094 = vmax.f32 %v1894, 0.0
      %v2095 = vmax.f32 %v1897, 0.0
      %v2096 = vmax.f32 %v1902, 0.0
      %v2097 = vmax.f32 %v1905, 0.0
      %v2098 = vmax.f32 %v1910, 0.0
      %v2099 = vmax.f32 %v1913, 0.0
      %v2100 = vmax.f32 %v1918, 0.0
      %v2101 = vmax.f32 %v1921, 0.0
      %v2102 = vmax.f32 %v1926, 0.0
      %v2103 = vmax.f32 %v1929, 0.0
      %v2104 = vmax.f32 %v1934, 0.0
      %v2105 = vmax.f32 %v1937, 0.0
      %v2106 = vmax.f32 %v1942, 0.0
      %v2107 = vmax.f32 %v1945, 0.0
      %v2108 = vmax.f32 %v1950, 0.0
      %v2109 = vmax.f32 %v1953, 0.0
      %v2110 = vmax.f32 %v1958, 0.0
      %v2111 = vmax.f32 %v1961, 0.0
      %v2112 = vmax.f32 %v1966, 0.0
      %v2113 = vmax.f32 %v1969, 0.0
      %v2114 = vmax.f32 %v1974, 0.0
      %v2115 = vmax.f32 %v1977, 0.0
      %v2116 = vmax.f32 %v1982, 0.0
      %v2117 = vmax.f32 %v1985, 0.0
      %v2118 = vmax.f32 %v1990, 0.0
      %v2119 = vmax.f32 %v1993, 0.0
      %v2120 = vmax.f32 %v1998, 0.0
      %v2121 = vmax.f32 %v2001, 0.0
      %v2122 = vmax.f32 %v2006, 0.0
      %v2123 = vmax.f32 %v2009, 0.0
      %v2124 = vmax.f32 %v2014, 0.0
      %v2125 = vmax.f32 %v2017, 0.0
      %v2126 = vmax.f32 %v2022, 0.0
      %v2127 = vmax.f32 %v2025, 0.0
      %v2128 = vmax.f32 %v2030, 0.0
      %v2129 = vmax.f32 %v2033, 0.0
      %v2130 = vmax.f32 %v2038, 0.0
      %v2131 = vmax.f32 %v2041, 0.0
      %v2132 = vmax.f32 %v2046, 0.0
      %v2133 = vmax.f32 %v2049, 0.0
      %v2134 = vmax.f32 %v2054, 0.0
      %v2135 = vmax.f32 %v2057, 0.0
      %v2136 = vmax.f32 %v2062, 0.0
      %v2137 = vmax.f32 %v2065, 0.0
      %v2138 = vmax.f32 %v2070, 0.0
      %v2139 = vmax.f32 %v2073, 0.0
      %v2140 = vpack.c.bf16 %v2077, %v2076
      %v2141 = vpack.c.bf16 %v2079, %v2078
      %v2142 = vpack.c.bf16 %v2081, %v2080
      %v2143 = vpack.c.bf16 %v2083, %v2082
      %v2144 = vpack.c.bf16 %v2085, %v2084
      %v2145 = vpack.c.bf16 %v2087, %v2086
      %v2146 = vpack.c.bf16 %v2089, %v2088
      %v2147 = vpack.c.bf16 %v2091, %v2090
      %v2148 = vpack.c.bf16 %v2093, %v2092
      %v2149 = vpack.c.bf16 %v2095, %v2094
      %v2150 = vpack.c.bf16 %v2097, %v2096
      %v2151 = vpack.c.bf16 %v2099, %v2098
      %v2152 = vpack.c.bf16 %v2101, %v2100
      %v2153 = vpack.c.bf16 %v2103, %v2102
      %v2154 = vpack.c.bf16 %v2105, %v2104
      %v2155 = vpack.c.bf16 %v2107, %v2106
      %v2156 = vpack.c.bf16 %v2109, %v2108
      %v2157 = vpack.c.bf16 %v2111, %v2110
      %v2158 = vpack.c.bf16 %v2113, %v2112
      %v2159 = vpack.c.bf16 %v2115, %v2114
      %v2160 = vpack.c.bf16 %v2117, %v2116
      %v2161 = vpack.c.bf16 %v2119, %v2118
      %v2162 = vpack.c.bf16 %v2121, %v2120
      %v2163 = vpack.c.bf16 %v2123, %v2122
      %v2164 = vpack.c.bf16 %v2125, %v2124
      %v2165 = vpack.c.bf16 %v2127, %v2126
      %v2166 = vpack.c.bf16 %v2129, %v2128
      %v2167 = vpack.c.bf16 %v2131, %v2130
      %v2168 = vpack.c.bf16 %v2133, %v2132
      %v2169 = vpack.c.bf16 %v2135, %v2134
      %v2170 = vpack.c.bf16 %v2137, %v2136
      %v2171 = vpack.c.bf16 %v2139, %v2138
      %v2172 = vld [vmem:[%s8] sm:$0xf]
      %v2173 = vld [vmem:[%s8 + $0x4] sm:$0xf]
      %v2174 = vld [vmem:[%s8 + $0x8] sm:$0xf]
      %v2175 = vld [vmem:[%s8 + $0xc] sm:$0xf]
      %v2176 = vld [vmem:[%s8 + $0x10] sm:$0xf]
      %v2177 = vld [vmem:[%s8 + $0x14] sm:$0xf]
      %v2178 = vld [vmem:[%s8 + $0x18] sm:$0xf]
      %v2179 = vld [vmem:[%s8 + $0x1c] sm:$0xf]
      %v2180 = vld [vmem:[%s9] sm:$0xf]
      %v2181 = vld [vmem:[%s9 + $0x4] sm:$0xf]
      %v2182 = vld [vmem:[%s9 + $0x8] sm:$0xf]
      %v2183 = vld [vmem:[%s9 + $0xc] sm:$0xf]
      %v2184 = vld [vmem:[%s9 + $0x10] sm:$0xf]
      %v2185 = vld [vmem:[%s9 + $0x14] sm:$0xf]
      %v2186 = vld [vmem:[%s9 + $0x18] sm:$0xf]
      %v2187 = vld [vmem:[%s9 + $0x1c] sm:$0xf]
      %v2252 = vunpack.c.l.b16 %v531
      %v2253 = vunpack.c.l.b16 %v532
      %v2254 = vunpack.c.l.b16 %v533
      %v2255 = vunpack.c.l.b16 %v534
      %v2256 = vunpack.c.l.b16 %v535
      %v2257 = vunpack.c.l.b16 %v536
      %v2258 = vunpack.c.l.b16 %v537
      %v2259 = vunpack.c.l.b16 %v538
      %v2260 = vunpack.c.l.b16 %v539
      %v2261 = vunpack.c.l.b16 %v540
      %v2262 = vunpack.c.l.b16 %v541
      %v2263 = vunpack.c.l.b16 %v542
      %v2264 = vunpack.c.l.b16 %v543
      %v2265 = vunpack.c.l.b16 %v544
      %v2266 = vunpack.c.l.b16 %v545
      %v2267 = vunpack.c.l.b16 %v546
      %v2268 = vunpack.c.l.b16 %v547
      %v2269 = vunpack.c.l.b16 %v548
      %v2270 = vunpack.c.l.b16 %v549
      %v2271 = vunpack.c.l.b16 %v550
      %v2272 = vunpack.c.l.b16 %v551
      %v2273 = vunpack.c.l.b16 %v552
      %v2274 = vunpack.c.l.b16 %v553
      %v2275 = vunpack.c.l.b16 %v554
      %v2276 = vunpack.c.l.b16 %v555
      %v2277 = vunpack.c.l.b16 %v556
      %v2278 = vunpack.c.l.b16 %v557
      %v2279 = vunpack.c.l.b16 %v558
      %v2280 = vunpack.c.l.b16 %v559
      %v2281 = vunpack.c.l.b16 %v560
      %v2282 = vunpack.c.l.b16 %v561
      %v2283 = vunpack.c.l.b16 %v562
      %v2284 = vunpack.c.l.b16 %v563
      %v2285 = vunpack.c.l.b16 %v564
      %v2286 = vunpack.c.l.b16 %v565
      %v2287 = vunpack.c.l.b16 %v566
      %v2288 = vunpack.c.l.b16 %v567
      %v2289 = vunpack.c.l.b16 %v568
      %v2290 = vunpack.c.l.b16 %v569
      %v2291 = vunpack.c.l.b16 %v570
      %v2292 = vunpack.c.l.b16 %v571
      %v2293 = vunpack.c.l.b16 %v572
      %v2294 = vunpack.c.l.b16 %v573
      %v2295 = vunpack.c.l.b16 %v574
      %v2296 = vunpack.c.l.b16 %v575
      %v2297 = vunpack.c.l.b16 %v576
      %v2298 = vunpack.c.l.b16 %v577
      %v2299 = vunpack.c.l.b16 %v578
      %v2300 = vunpack.c.l.b16 %v579
      %v2301 = vunpack.c.l.b16 %v580
      %v2302 = vunpack.c.l.b16 %v581
      %v2303 = vunpack.c.l.b16 %v582
      %v2304 = vunpack.c.l.b16 %v583
      %v2305 = vunpack.c.l.b16 %v584
      %v2306 = vunpack.c.l.b16 %v585
      %v2307 = vunpack.c.l.b16 %v586
      %v2308 = vunpack.c.l.b16 %v587
      %v2309 = vunpack.c.l.b16 %v588
      %v2310 = vunpack.c.l.b16 %v589
      %v2311 = vunpack.c.l.b16 %v590
      %v2312 = vunpack.c.l.b16 %v591
      %v2313 = vunpack.c.l.b16 %v592
      %v2314 = vunpack.c.l.b16 %v593
      %v2315 = vunpack.c.l.b16 %v594
      %v2316 = vpack.c.b16 %v2253, %v2252
      %v2317 = vpack.c.b16 %v2255, %v2254
      %v2318 = vpack.c.b16 %v2257, %v2256
      %v2319 = vpack.c.b16 %v2259, %v2258
      %v2320 = vpack.c.b16 %v2261, %v2260
      %v2321 = vpack.c.b16 %v2263, %v2262
      %v2322 = vpack.c.b16 %v2265, %v2264
      %v2323 = vpack.c.b16 %v2267, %v2266
      %v2324 = vpack.c.b16 %v2269, %v2268
      %v2325 = vpack.c.b16 %v2271, %v2270
      %v2326 = vpack.c.b16 %v2273, %v2272
      %v2327 = vpack.c.b16 %v2275, %v2274
      %v2328 = vpack.c.b16 %v2277, %v2276
      %v2329 = vpack.c.b16 %v2279, %v2278
      %v2330 = vpack.c.b16 %v2281, %v2280
      %v2331 = vpack.c.b16 %v2283, %v2282
      %v2332 = vpack.c.b16 %v2285, %v2284
      %v2333 = vpack.c.b16 %v2287, %v2286
      %v2334 = vpack.c.b16 %v2289, %v2288
      %v2335 = vpack.c.b16 %v2291, %v2290
      %v2336 = vpack.c.b16 %v2293, %v2292
      %v2337 = vpack.c.b16 %v2295, %v2294
      %v2338 = vpack.c.b16 %v2297, %v2296
      %v2339 = vpack.c.b16 %v2299, %v2298
      %v2340 = vpack.c.b16 %v2301, %v2300
      %v2341 = vpack.c.b16 %v2303, %v2302
      %v2342 = vpack.c.b16 %v2305, %v2304
      %v2343 = vpack.c.b16 %v2307, %v2306
      %v2344 = vpack.c.b16 %v2309, %v2308
      %v2345 = vpack.c.b16 %v2311, %v2310
      %v2346 = vpack.c.b16 %v2313, %v2312
      %v2347 = vpack.c.b16 %v2315, %v2314
      %v2356 = vunpack.c.l.b16 %v2180
      %v2357 = vunpack.c.l.b16 %v2181
      %v2358 = vunpack.c.l.b16 %v2182
      %v2359 = vunpack.c.l.b16 %v2183
      %v2360 = vunpack.c.l.b16 %v2184
      %v2361 = vunpack.c.l.b16 %v2185
      %v2362 = vunpack.c.l.b16 %v2186
      %v2363 = vunpack.c.l.b16 %v2187
      %v2364 = vpack.c.b16 %v2357, %v2356
      %v2365 = vpack.c.b16 %v2359, %v2358
      %v2366 = vpack.c.b16 %v2361, %v2360
      %v2367 = vpack.c.b16 %v2363, %v2362
      %vm2372 = vcmask 523264
      %v2374 = vsel %vm2372, %v2316, 0
      %v2377 = vsel %vm2372, %v2317, 0
      %v2380 = vsel %vm2372, %v2318, 0
      %v2383 = vsel %vm2372, %v2319, 0
      %v2386 = vsel %vm2372, %v2320, 0
      %v2389 = vsel %vm2372, %v2321, 0
      %v2392 = vsel %vm2372, %v2322, 0
      %v2395 = vsel %vm2372, %v2323, 0
      %v2398 = vsel %vm2372, %v2324, 0
      %v2401 = vsel %vm2372, %v2325, 0
      %v2404 = vsel %vm2372, %v2326, 0
      %v2407 = vsel %vm2372, %v2327, 0
      %v2410 = vsel %vm2372, %v2328, 0
      %v2413 = vsel %vm2372, %v2329, 0
      %v2416 = vsel %vm2372, %v2330, 0
      %v2419 = vsel %vm2372, %v2331, 0
      %v2422 = vsel %vm2372, %v2332, 0
      %v2425 = vsel %vm2372, %v2333, 0
      %v2428 = vsel %vm2372, %v2334, 0
      %v2431 = vsel %vm2372, %v2335, 0
      %v2434 = vsel %vm2372, %v2336, 0
      %v2437 = vsel %vm2372, %v2337, 0
      %v2440 = vsel %vm2372, %v2338, 0
      %v2443 = vsel %vm2372, %v2339, 0
      %v2446 = vsel %vm2372, %v2340, 0
      %v2449 = vsel %vm2372, %v2341, 0
      %v2452 = vsel %vm2372, %v2342, 0
      %v2455 = vsel %vm2372, %v2343, 0
      %v2458 = vsel %vm2372, %v2344, 0
      %v2461 = vsel %vm2372, %v2345, 0
      %v2464 = vsel %vm2372, %v2346, 0
      %v2467 = vsel %vm2372, %v2347, 0
      %2469 = vmatprep.subr.bf16.mxu0 0
      %2470 = vmatpush1.bf16.msra.mxu0 %v2364
      %2471 = vmatprep.subr.bf16.mxu0 0
      %2472 = vmatpush1.bf16.msra.mxu0 %v2365
      %2473 = vmatprep.subr.bf16.mxu0 0
      %2474 = vmatpush1.bf16.msra.mxu0 %v2366
      %2475 = vmatprep.subr.bf16.mxu0 0
      %2476 = vmatpush1.bf16.msra.mxu0 %v2367
      %2477 = vmatprep.subr.bf16.mxu0 0
      %2478 = vmatpush1.bf16.msra.mxu0 0
      %2479 = vmatprep.subr.bf16.mxu0 0
      %2480 = vmatpush1.bf16.msra.mxu0 0
      %2481 = vmatprep.subr.bf16.mxu0 0
      %2482 = vmatpush1.bf16.msra.mxu0 0
      %2483 = vmatprep.subr.bf16.mxu0 0
      %2484 = vmatpush1.bf16.msra.mxu0 0
      %2485 = vmatprep.subr.bf16.mxu0 0
      %2486 = vmatpush1.bf16.msra.mxu0 0
      %2487 = vmatprep.subr.bf16.mxu0 0
      %2488 = vmatpush1.bf16.msra.mxu0 0
      %2489 = vmatprep.subr.bf16.mxu0 0
      %2490 = vmatpush1.bf16.msra.mxu0 0
      %2491 = vmatprep.subr.bf16.mxu0 0
      %2492 = vmatpush1.bf16.msra.mxu0 0
      %2493 = vmatprep.subr.bf16.mxu0 0
      %2494 = vmatpush1.bf16.msra.mxu0 0
      %2495 = vmatprep.subr.bf16.mxu0 0
      %2496 = vmatpush1.bf16.msra.mxu0 0
      %2497 = vmatprep.subr.bf16.mxu0 0
      %2498 = vmatpush1.bf16.msra.mxu0 0
      %2499 = vmatprep.subr.bf16.mxu0 0
      %2500 = vmatpush1.bf16.msra.mxu0 0
      %2501 = vmatprep.mubr.bf16.mxu0 0
      %2502 = vmatmul.mubr.bf16.gmra.mrb[0].mxu0 %v2374
      %v2503 = vpop.f32.mrb[0].mxu0
      %v2504 = vadd.f32 0.0, %v2503
      %v2505 = vpop.f32.mrb[0].mxu0
      %v2506 = vpop.f32.mrb[0].mxu0
      %v2507 = vadd.f32 0.0, %v2506
      %v2508 = vpop.f32.mrb[0].mxu0
      %2509 = vmatprep.mubr.bf16.mxu0 0
      %2510 = vmatmul.mubr.bf16.gmra.mrb[0].mxu0 %v2377
      %v2511 = vpop.f32.mrb[0].mxu0
      %v2512 = vadd.f32 0.0, %v2511
      %v2513 = vpop.f32.mrb[0].mxu0
      %v2514 = vpop.f32.mrb[0].mxu0
      %v2515 = vadd.f32 0.0, %v2514
      %v2516 = vpop.f32.mrb[0].mxu0
      %2517 = vmatprep.mubr.bf16.mxu0 0
      %2518 = vmatmul.mubr.bf16.gmra.mrb[0].mxu0 %v2380
      %v2519 = vpop.f32.mrb[0].mxu0
      %v2520 = vadd.f32 0.0, %v2519
      %v2521 = vpop.f32.mrb[0].mxu0
      %v2522 = vpop.f32.mrb[0].mxu0
      %v2523 = vadd.f32 0.0, %v2522
      %v2524 = vpop.f32.mrb[0].mxu0
      %2525 = vmatprep.mubr.bf16.mxu0 0
      %2526 = vmatmul.mubr.bf16.gmra.mrb[0].mxu0 %v2383
      %v2527 = vpop.f32.mrb[0].mxu0
      %v2528 = vadd.f32 0.0, %v2527
      %v2529 = vpop.f32.mrb[0].mxu0
      %v2530 = vpop.f32.mrb[0].mxu0
      %v2531 = vadd.f32 0.0, %v2530
      %v2532 = vpop.f32.mrb[0].mxu0
      %2533 = vmatprep.mubr.bf16.mxu0 0
      %2534 = vmatmul.mubr.bf16.gmra.mrb[0].mxu0 %v2386
      %v2535 = vpop.f32.mrb[0].mxu0
      %v2536 = vadd.f32 0.0, %v2535
      %v2537 = vpop.f32.mrb[0].mxu0
      %v2538 = vpop.f32.mrb[0].mxu0
      %v2539 = vadd.f32 0.0, %v2538
      %v2540 = vpop.f32.mrb[0].mxu0
      %2541 = vmatprep.mubr.bf16.mxu0 0
      %2542 = vmatmul.mubr.bf16.gmra.mrb[0].mxu0 %v2389
      %v2543 = vpop.f32.mrb[0].mxu0
      %v2544 = vadd.f32 0.0, %v2543
      %v2545 = vpop.f32.mrb[0].mxu0
      %v2546 = vpop.f32.mrb[0].mxu0
      %v2547 = vadd.f32 0.0, %v2546
      %v2548 = vpop.f32.mrb[0].mxu0
      %2549 = vmatprep.mubr.bf16.mxu0 0
      %2550 = vmatmul.mubr.bf16.gmra.mrb[0].mxu0 %v2392
      %v2551 = vpop.f32.mrb[0].mxu0
      %v2552 = vadd.f32 0.0, %v2551
      %v2553 = vpop.f32.mrb[0].mxu0
      %v2554 = vpop.f32.mrb[0].mxu0
      %v2555 = vadd.f32 0.0, %v2554
      %v2556 = vpop.f32.mrb[0].mxu0
      %2557 = vmatprep.mubr.bf16.mxu0 0
      %2558 = vmatmul.mubr.bf16.gmra.mrb[0].mxu0 %v2395
      %v2559 = vpop.f32.mrb[0].mxu0
      %v2560 = vadd.f32 0.0, %v2559
      %v2561 = vpop.f32.mrb[0].mxu0
      %v2562 = vpop.f32.mrb[0].mxu0
      %v2563 = vadd.f32 0.0, %v2562
      %v2564 = vpop.f32.mrb[0].mxu0
      %2565 = vmatprep.mubr.bf16.mxu0 0
      %2566 = vmatmul.mubr.bf16.gmra.mrb[0].mxu0 %v2398
      %v2567 = vpop.f32.mrb[0].mxu0
      %v2568 = vadd.f32 0.0, %v2567
      %v2569 = vpop.f32.mrb[0].mxu0
      %v2570 = vpop.f32.mrb[0].mxu0
      %v2571 = vadd.f32 0.0, %v2570
      %v2572 = vpop.f32.mrb[0].mxu0
      %2573 = vmatprep.mubr.bf16.mxu0 0
      %2574 = vmatmul.mubr.bf16.gmra.mrb[0].mxu0 %v2401
      %v2575 = vpop.f32.mrb[0].mxu0
      %v2576 = vadd.f32 0.0, %v2575
      %v2577 = vpop.f32.mrb[0].mxu0
      %v2578 = vpop.f32.mrb[0].mxu0
      %v2579 = vadd.f32 0.0, %v2578
      %v2580 = vpop.f32.mrb[0].mxu0
      %2581 = vmatprep.mubr.bf16.mxu0 0
      %2582 = vmatmul.mubr.bf16.gmra.mrb[0].mxu0 %v2404
      %v2583 = vpop.f32.mrb[0].mxu0
      %v2584 = vadd.f32 0.0, %v2583
      %v2585 = vpop.f32.mrb[0].mxu0
      %v2586 = vpop.f32.mrb[0].mxu0
      %v2587 = vadd.f32 0.0, %v2586
      %v2588 = vpop.f32.mrb[0].mxu0
      %2589 = vmatprep.mubr.bf16.mxu0 0
      %2590 = vmatmul.mubr.bf16.gmra.mrb[0].mxu0 %v2407
      %v2591 = vpop.f32.mrb[0].mxu0
      %v2592 = vadd.f32 0.0, %v2591
      %v2593 = vpop.f32.mrb[0].mxu0
      %v2594 = vpop.f32.mrb[0].mxu0
      %v2595 = vadd.f32 0.0, %v2594
      %v2596 = vpop.f32.mrb[0].mxu0
      %2597 = vmatprep.mubr.bf16.mxu0 0
      %2598 = vmatmul.mubr.bf16.gmra.mrb[0].mxu0 %v2410
      %v2599 = vpop.f32.mrb[0].mxu0
      %v2600 = vadd.f32 0.0, %v2599
      %v2601 = vpop.f32.mrb[0].mxu0
      %v2602 = vpop.f32.mrb[0].mxu0
      %v2603 = vadd.f32 0.0, %v2602
      %v2604 = vpop.f32.mrb[0].mxu0
      %2605 = vmatprep.mubr.bf16.mxu0 0
      %2606 = vmatmul.mubr.bf16.gmra.mrb[0].mxu0 %v2413
      %v2607 = vpop.f32.mrb[0].mxu0
      %v2608 = vadd.f32 0.0, %v2607
      %v2609 = vpop.f32.mrb[0].mxu0
      %v2610 = vpop.f32.mrb[0].mxu0
      %v2611 = vadd.f32 0.0, %v2610
      %v2612 = vpop.f32.mrb[0].mxu0
      %2613 = vmatprep.mubr.bf16.mxu0 0
      %2614 = vmatmul.mubr.bf16.gmra.mrb[0].mxu0 %v2416
      %v2615 = vpop.f32.mrb[0].mxu0
      %v2616 = vadd.f32 0.0, %v2615
      %v2617 = vpop.f32.mrb[0].mxu0
      %v2618 = vpop.f32.mrb[0].mxu0
      %v2619 = vadd.f32 0.0, %v2618
      %v2620 = vpop.f32.mrb[0].mxu0
      %2621 = vmatprep.mubr.bf16.mxu0 0
      %2622 = vmatmul.mubr.bf16.gmra.mrb[0].mxu0 %v2419
      %v2623 = vpop.f32.mrb[0].mxu0
      %v2624 = vadd.f32 0.0, %v2623
      %v2625 = vpop.f32.mrb[0].mxu0
      %v2626 = vpop.f32.mrb[0].mxu0
      %v2627 = vadd.f32 0.0, %v2626
      %v2628 = vpop.f32.mrb[0].mxu0
      %2629 = vmatprep.mubr.bf16.mxu0 0
      %2630 = vmatmul.mubr.bf16.gmra.mrb[0].mxu0 %v2422
      %v2631 = vpop.f32.mrb[0].mxu0
      %v2632 = vadd.f32 0.0, %v2631
      %v2633 = vpop.f32.mrb[0].mxu0
      %v2634 = vpop.f32.mrb[0].mxu0
      %v2635 = vadd.f32 0.0, %v2634
      %v2636 = vpop.f32.mrb[0].mxu0
      %2637 = vmatprep.mubr.bf16.mxu0 0
      %2638 = vmatmul.mubr.bf16.gmra.mrb[0].mxu0 %v2425
      %v2639 = vpop.f32.mrb[0].mxu0
      %v2640 = vadd.f32 0.0, %v2639
      %v2641 = vpop.f32.mrb[0].mxu0
      %v2642 = vpop.f32.mrb[0].mxu0
      %v2643 = vadd.f32 0.0, %v2642
      %v2644 = vpop.f32.mrb[0].mxu0
      %2645 = vmatprep.mubr.bf16.mxu0 0
      %2646 = vmatmul.mubr.bf16.gmra.mrb[0].mxu0 %v2428
      %v2647 = vpop.f32.mrb[0].mxu0
      %v2648 = vadd.f32 0.0, %v2647
      %v2649 = vpop.f32.mrb[0].mxu0
      %v2650 = vpop.f32.mrb[0].mxu0
      %v2651 = vadd.f32 0.0, %v2650
      %v2652 = vpop.f32.mrb[0].mxu0
      %2653 = vmatprep.mubr.bf16.mxu0 0
      %2654 = vmatmul.mubr.bf16.gmra.mrb[0].mxu0 %v2431
      %v2655 = vpop.f32.mrb[0].mxu0
      %v2656 = vadd.f32 0.0, %v2655
      %v2657 = vpop.f32.mrb[0].mxu0
      %v2658 = vpop.f32.mrb[0].mxu0
      %v2659 = vadd.f32 0.0, %v2658
      %v2660 = vpop.f32.mrb[0].mxu0
      %2661 = vmatprep.mubr.bf16.mxu0 0
      %2662 = vmatmul.mubr.bf16.gmra.mrb[0].mxu0 %v2434
      %v2663 = vpop.f32.mrb[0].mxu0
      %v2664 = vadd.f32 0.0, %v2663
      %v2665 = vpop.f32.mrb[0].mxu0
      %v2666 = vpop.f32.mrb[0].mxu0
      %v2667 = vadd.f32 0.0, %v2666
      %v2668 = vpop.f32.mrb[0].mxu0
      %2669 = vmatprep.mubr.bf16.mxu0 0
      %2670 = vmatmul.mubr.bf16.gmra.mrb[0].mxu0 %v2437
      %v2671 = vpop.f32.mrb[0].mxu0
      %v2672 = vadd.f32 0.0, %v2671
      %v2673 = vpop.f32.mrb[0].mxu0
      %v2674 = vpop.f32.mrb[0].mxu0
      %v2675 = vadd.f32 0.0, %v2674
      %v2676 = vpop.f32.mrb[0].mxu0
      %2677 = vmatprep.mubr.bf16.mxu0 0
      %2678 = vmatmul.mubr.bf16.gmra.mrb[0].mxu0 %v2440
      %v2679 = vpop.f32.mrb[0].mxu0
      %v2680 = vadd.f32 0.0, %v2679
      %v2681 = vpop.f32.mrb[0].mxu0
      %v2682 = vpop.f32.mrb[0].mxu0
      %v2683 = vadd.f32 0.0, %v2682
      %v2684 = vpop.f32.mrb[0].mxu0
      %2685 = vmatprep.mubr.bf16.mxu0 0
      %2686 = vmatmul.mubr.bf16.gmra.mrb[0].mxu0 %v2443
      %v2687 = vpop.f32.mrb[0].mxu0
      %v2688 = vadd.f32 0.0, %v2687
      %v2689 = vpop.f32.mrb[0].mxu0
      %v2690 = vpop.f32.mrb[0].mxu0
      %v2691 = vadd.f32 0.0, %v2690
      %v2692 = vpop.f32.mrb[0].mxu0
      %2693 = vmatprep.mubr.bf16.mxu0 0
      %2694 = vmatmul.mubr.bf16.gmra.mrb[0].mxu0 %v2446
      %v2695 = vpop.f32.mrb[0].mxu0
      %v2696 = vadd.f32 0.0, %v2695
      %v2697 = vpop.f32.mrb[0].mxu0
      %v2698 = vpop.f32.mrb[0].mxu0
      %v2699 = vadd.f32 0.0, %v2698
      %v2700 = vpop.f32.mrb[0].mxu0
      %2701 = vmatprep.mubr.bf16.mxu0 0
      %2702 = vmatmul.mubr.bf16.gmra.mrb[0].mxu0 %v2449
      %v2703 = vpop.f32.mrb[0].mxu0
      %v2704 = vadd.f32 0.0, %v2703
      %v2705 = vpop.f32.mrb[0].mxu0
      %v2706 = vpop.f32.mrb[0].mxu0
      %v2707 = vadd.f32 0.0, %v2706
      %v2708 = vpop.f32.mrb[0].mxu0
      %2709 = vmatprep.mubr.bf16.mxu0 0
      %2710 = vmatmul.mubr.bf16.gmra.mrb[0].mxu0 %v2452
      %v2711 = vpop.f32.mrb[0].mxu0
      %v2712 = vadd.f32 0.0, %v2711
      %v2713 = vpop.f32.mrb[0].mxu0
      %v2714 = vpop.f32.mrb[0].mxu0
      %v2715 = vadd.f32 0.0, %v2714
      %v2716 = vpop.f32.mrb[0].mxu0
      %2717 = vmatprep.mubr.bf16.mxu0 0
      %2718 = vmatmul.mubr.bf16.gmra.mrb[0].mxu0 %v2455
      %v2719 = vpop.f32.mrb[0].mxu0
      %v2720 = vadd.f32 0.0, %v2719
      %v2721 = vpop.f32.mrb[0].mxu0
      %v2722 = vpop.f32.mrb[0].mxu0
      %v2723 = vadd.f32 0.0, %v2722
      %v2724 = vpop.f32.mrb[0].mxu0
      %2725 = vmatprep.mubr.bf16.mxu0 0
      %2726 = vmatmul.mubr.bf16.gmra.mrb[0].mxu0 %v2458
      %v2727 = vpop.f32.mrb[0].mxu0
      %v2728 = vadd.f32 0.0, %v2727
      %v2729 = vpop.f32.mrb[0].mxu0
      %v2730 = vpop.f32.mrb[0].mxu0
      %v2731 = vadd.f32 0.0, %v2730
      %v2732 = vpop.f32.mrb[0].mxu0
      %2733 = vmatprep.mubr.bf16.mxu0 0
      %2734 = vmatmul.mubr.bf16.gmra.mrb[0].mxu0 %v2461
      %v2735 = vpop.f32.mrb[0].mxu0
      %v2736 = vadd.f32 0.0, %v2735
      %v2737 = vpop.f32.mrb[0].mxu0
      %v2738 = vpop.f32.mrb[0].mxu0
      %v2739 = vadd.f32 0.0, %v2738
      %v2740 = vpop.f32.mrb[0].mxu0
      %2741 = vmatprep.mubr.bf16.mxu0 0
      %2742 = vmatmul.mubr.bf16.gmra.mrb[0].mxu0 %v2464
      %v2743 = vpop.f32.mrb[0].mxu0
      %v2744 = vadd.f32 0.0, %v2743
      %v2745 = vpop.f32.mrb[0].mxu0
      %v2746 = vpop.f32.mrb[0].mxu0
      %v2747 = vadd.f32 0.0, %v2746
      %v2748 = vpop.f32.mrb[0].mxu0
      %2749 = vmatprep.mubr.bf16.mxu0 0
      %2750 = vmatmul.mubr.bf16.gmra.mrb[0].mxu0 %v2467
      %v2751 = vpop.f32.mrb[0].mxu0
      %v2752 = vadd.f32 0.0, %v2751
      %v2753 = vpop.f32.mrb[0].mxu0
      %v2754 = vpop.f32.mrb[0].mxu0
      %v2755 = vadd.f32 0.0, %v2754
      %v2756 = vpop.f32.mrb[0].mxu0
      %2757 = vdwg.mxu0
      %v2766 = vunpack.c.l.b16 %v2172
      %v2767 = vunpack.c.l.b16 %v2173
      %v2768 = vunpack.c.l.b16 %v2174
      %v2769 = vunpack.c.l.b16 %v2175
      %v2770 = vunpack.c.l.b16 %v2176
      %v2771 = vunpack.c.l.b16 %v2177
      %v2772 = vunpack.c.l.b16 %v2178
      %v2773 = vunpack.c.l.b16 %v2179
      %v2774 = vpack.c.b16 %v2767, %v2766
      %v2775 = vpack.c.b16 %v2769, %v2768
      %v2776 = vpack.c.b16 %v2771, %v2770
      %v2777 = vpack.c.b16 %v2773, %v2772
      %v2783 = vsel %vm2372, %v2140, 0
      %v2786 = vsel %vm2372, %v2141, 0
      %v2789 = vsel %vm2372, %v2142, 0
      %v2792 = vsel %vm2372, %v2143, 0
      %v2795 = vsel %vm2372, %v2144, 0
      %v2798 = vsel %vm2372, %v2145, 0
      %v2801 = vsel %vm2372, %v2146, 0
      %v2804 = vsel %vm2372, %v2147, 0
      %v2807 = vsel %vm2372, %v2148, 0
      %v2810 = vsel %vm2372, %v2149, 0
      %v2813 = vsel %vm2372, %v2150, 0
      %v2816 = vsel %vm2372, %v2151, 0
      %v2819 = vsel %vm2372, %v2152, 0
      %v2822 = vsel %vm2372, %v2153, 0
      %v2825 = vsel %vm2372, %v2154, 0
      %v2828 = vsel %vm2372, %v2155, 0
      %v2831 = vsel %vm2372, %v2156, 0
      %v2834 = vsel %vm2372, %v2157, 0
      %v2837 = vsel %vm2372, %v2158, 0
      %v2840 = vsel %vm2372, %v2159, 0
      %v2843 = vsel %vm2372, %v2160, 0
      %v2846 = vsel %vm2372, %v2161, 0
      %v2849 = vsel %vm2372, %v2162, 0
      %v2852 = vsel %vm2372, %v2163, 0
      %v2855 = vsel %vm2372, %v2164, 0
      %v2858 = vsel %vm2372, %v2165, 0
      %v2861 = vsel %vm2372, %v2166, 0
      %v2864 = vsel %vm2372, %v2167, 0
      %v2867 = vsel %vm2372, %v2168, 0
      %v2870 = vsel %vm2372, %v2169, 0
      %v2873 = vsel %vm2372, %v2170, 0
      %v2876 = vsel %vm2372, %v2171, 0
      %2878 = vmatprep.subr.bf16.mxu0 0
      %2879 = vmatpush1.bf16.msra.mxu0 %v2774
      %2880 = vmatprep.subr.bf16.mxu0 0
      %2881 = vmatpush1.bf16.msra.mxu0 %v2775
      %2882 = vmatprep.subr.bf16.mxu0 0
      %2883 = vmatpush1.bf16.msra.mxu0 %v2776
      %2884 = vmatprep.subr.bf16.mxu0 0
      %2885 = vmatpush1.bf16.msra.mxu0 %v2777
      %2886 = vmatprep.subr.bf16.mxu0 0
      %2887 = vmatpush1.bf16.msra.mxu0 0
      %2888 = vmatprep.subr.bf16.mxu0 0
      %2889 = vmatpush1.bf16.msra.mxu0 0
      %2890 = vmatprep.subr.bf16.mxu0 0
      %2891 = vmatpush1.bf16.msra.mxu0 0
      %2892 = vmatprep.subr.bf16.mxu0 0
      %2893 = vmatpush1.bf16.msra.mxu0 0
      %2894 = vmatprep.subr.bf16.mxu0 0
      %2895 = vmatpush1.bf16.msra.mxu0 0
      %2896 = vmatprep.subr.bf16.mxu0 0
      %2897 = vmatpush1.bf16.msra.mxu0 0
      %2898 = vmatprep.subr.bf16.mxu0 0
      %2899 = vmatpush1.bf16.msra.mxu0 0
      %2900 = vmatprep.subr.bf16.mxu0 0
      %2901 = vmatpush1.bf16.msra.mxu0 0
      %2902 = vmatprep.subr.bf16.mxu0 0
      %2903 = vmatpush1.bf16.msra.mxu0 0
      %2904 = vmatprep.subr.bf16.mxu0 0
      %2905 = vmatpush1.bf16.msra.mxu0 0
      %2906 = vmatprep.subr.bf16.mxu0 0
      %2907 = vmatpush1.bf16.msra.mxu0 0
      %2908 = vmatprep.subr.bf16.mxu0 0
      %2909 = vmatpush1.bf16.msra.mxu0 0
      %2910 = vmatprep.mubr.bf16.mxu0 0
      %2911 = vmatmul.mubr.bf16.gmra.mrb[0].mxu0 %v2783
      %v2912 = vpop.f32.mrb[0].mxu0
      %v2913 = vadd.f32 %v2504, %v2912
      %v2914 = vpop.f32.mrb[0].mxu0
      %v2915 = vpop.f32.mrb[0].mxu0
      %v2916 = vadd.f32 %v2507, %v2915
      %v2917 = vpop.f32.mrb[0].mxu0
      %2918 = vmatprep.mubr.bf16.mxu0 0
      %2919 = vmatmul.mubr.bf16.gmra.mrb[0].mxu0 %v2786
      %v2920 = vpop.f32.mrb[0].mxu0
      %v2921 = vadd.f32 %v2512, %v2920
      %v2922 = vpop.f32.mrb[0].mxu0
      %v2923 = vpop.f32.mrb[0].mxu0
      %v2924 = vadd.f32 %v2515, %v2923
      %v2925 = vpop.f32.mrb[0].mxu0
      %2926 = vmatprep.mubr.bf16.mxu0 0
      %2927 = vmatmul.mubr.bf16.gmra.mrb[0].mxu0 %v2789
      %v2928 = vpop.f32.mrb[0].mxu0
      %v2929 = vadd.f32 %v2520, %v2928
      %v2930 = vpop.f32.mrb[0].mxu0
      %v2931 = vpop.f32.mrb[0].mxu0
      %v2932 = vadd.f32 %v2523, %v2931
      %v2933 = vpop.f32.mrb[0].mxu0
      %2934 = vmatprep.mubr.bf16.mxu0 0
      %2935 = vmatmul.mubr.bf16.gmra.mrb[0].mxu0 %v2792
      %v2936 = vpop.f32.mrb[0].mxu0
      %v2937 = vadd.f32 %v2528, %v2936
      %v2938 = vpop.f32.mrb[0].mxu0
      %v2939 = vpop.f32.mrb[0].mxu0
      %v2940 = vadd.f32 %v2531, %v2939
      %v2941 = vpop.f32.mrb[0].mxu0
      %2942 = vmatprep.mubr.bf16.mxu0 0
      %2943 = vmatmul.mubr.bf16.gmra.mrb[0].mxu0 %v2795
      %v2944 = vpop.f32.mrb[0].mxu0
      %v2945 = vadd.f32 %v2536, %v2944
      %v2946 = vpop.f32.mrb[0].mxu0
      %v2947 = vpop.f32.mrb[0].mxu0
      %v2948 = vadd.f32 %v2539, %v2947
      %v2949 = vpop.f32.mrb[0].mxu0
      %2950 = vmatprep.mubr.bf16.mxu0 0
      %2951 = vmatmul.mubr.bf16.gmra.mrb[0].mxu0 %v2798
      %v2952 = vpop.f32.mrb[0].mxu0
      %v2953 = vadd.f32 %v2544, %v2952
      %v2954 = vpop.f32.mrb[0].mxu0
      %v2955 = vpop.f32.mrb[0].mxu0
      %v2956 = vadd.f32 %v2547, %v2955
      %v2957 = vpop.f32.mrb[0].mxu0
      %2958 = vmatprep.mubr.bf16.mxu0 0
      %2959 = vmatmul.mubr.bf16.gmra.mrb[0].mxu0 %v2801
      %v2960 = vpop.f32.mrb[0].mxu0
      %v2961 = vadd.f32 %v2552, %v2960
      %v2962 = vpop.f32.mrb[0].mxu0
      %v2963 = vpop.f32.mrb[0].mxu0
      %v2964 = vadd.f32 %v2555, %v2963
      %v2965 = vpop.f32.mrb[0].mxu0
      %2966 = vmatprep.mubr.bf16.mxu0 0
      %2967 = vmatmul.mubr.bf16.gmra.mrb[0].mxu0 %v2804
      %v2968 = vpop.f32.mrb[0].mxu0
      %v2969 = vadd.f32 %v2560, %v2968
      %v2970 = vpop.f32.mrb[0].mxu0
      %v2971 = vpop.f32.mrb[0].mxu0
      %v2972 = vadd.f32 %v2563, %v2971
      %v2973 = vpop.f32.mrb[0].mxu0
      %2974 = vmatprep.mubr.bf16.mxu0 0
      %2975 = vmatmul.mubr.bf16.gmra.mrb[0].mxu0 %v2807
      %v2976 = vpop.f32.mrb[0].mxu0
      %v2977 = vadd.f32 %v2568, %v2976
      %v2978 = vpop.f32.mrb[0].mxu0
      %v2979 = vpop.f32.mrb[0].mxu0
      %v2980 = vadd.f32 %v2571, %v2979
      %v2981 = vpop.f32.mrb[0].mxu0
      %2982 = vmatprep.mubr.bf16.mxu0 0
      %2983 = vmatmul.mubr.bf16.gmra.mrb[0].mxu0 %v2810
      %v2984 = vpop.f32.mrb[0].mxu0
      %v2985 = vadd.f32 %v2576, %v2984
      %v2986 = vpop.f32.mrb[0].mxu0
      %v2987 = vpop.f32.mrb[0].mxu0
      %v2988 = vadd.f32 %v2579, %v2987
      %v2989 = vpop.f32.mrb[0].mxu0
      %2990 = vmatprep.mubr.bf16.mxu0 0
      %2991 = vmatmul.mubr.bf16.gmra.mrb[0].mxu0 %v2813
      %v2992 = vpop.f32.mrb[0].mxu0
      %v2993 = vadd.f32 %v2584, %v2992
      %v2994 = vpop.f32.mrb[0].mxu0
      %v2995 = vpop.f32.mrb[0].mxu0
      %v2996 = vadd.f32 %v2587, %v2995
      %v2997 = vpop.f32.mrb[0].mxu0
      %2998 = vmatprep.mubr.bf16.mxu0 0
      %2999 = vmatmul.mubr.bf16.gmra.mrb[0].mxu0 %v2816
      %v3000 = vpop.f32.mrb[0].mxu0
      %v3001 = vadd.f32 %v2592, %v3000
      %v3002 = vpop.f32.mrb[0].mxu0
      %v3003 = vpop.f32.mrb[0].mxu0
      %v3004 = vadd.f32 %v2595, %v3003
      %v3005 = vpop.f32.mrb[0].mxu0
      %3006 = vmatprep.mubr.bf16.mxu0 0
      %3007 = vmatmul.mubr.bf16.gmra.mrb[0].mxu0 %v2819
      %v3008 = vpop.f32.mrb[0].mxu0
      %v3009 = vadd.f32 %v2600, %v3008
      %v3010 = vpop.f32.mrb[0].mxu0
      %v3011 = vpop.f32.mrb[0].mxu0
      %v3012 = vadd.f32 %v2603, %v3011
      %v3013 = vpop.f32.mrb[0].mxu0
      %3014 = vmatprep.mubr.bf16.mxu0 0
      %3015 = vmatmul.mubr.bf16.gmra.mrb[0].mxu0 %v2822
      %v3016 = vpop.f32.mrb[0].mxu0
      %v3017 = vadd.f32 %v2608, %v3016
      %v3018 = vpop.f32.mrb[0].mxu0
      %v3019 = vpop.f32.mrb[0].mxu0
      %v3020 = vadd.f32 %v2611, %v3019
      %v3021 = vpop.f32.mrb[0].mxu0
      %3022 = vmatprep.mubr.bf16.mxu0 0
      %3023 = vmatmul.mubr.bf16.gmra.mrb[0].mxu0 %v2825
      %v3024 = vpop.f32.mrb[0].mxu0
      %v3025 = vadd.f32 %v2616, %v3024
      %v3026 = vpop.f32.mrb[0].mxu0
      %v3027 = vpop.f32.mrb[0].mxu0
      %v3028 = vadd.f32 %v2619, %v3027
      %v3029 = vpop.f32.mrb[0].mxu0
      %3030 = vmatprep.mubr.bf16.mxu0 0
      %3031 = vmatmul.mubr.bf16.gmra.mrb[0].mxu0 %v2828
      %v3032 = vpop.f32.mrb[0].mxu0
      %v3033 = vadd.f32 %v2624, %v3032
      %v3034 = vpop.f32.mrb[0].mxu0
      %v3035 = vpop.f32.mrb[0].mxu0
      %v3036 = vadd.f32 %v2627, %v3035
      %v3037 = vpop.f32.mrb[0].mxu0
      %3038 = vmatprep.mubr.bf16.mxu0 0
      %3039 = vmatmul.mubr.bf16.gmra.mrb[0].mxu0 %v2831
      %v3040 = vpop.f32.mrb[0].mxu0
      %v3041 = vadd.f32 %v2632, %v3040
      %v3042 = vpop.f32.mrb[0].mxu0
      %v3043 = vpop.f32.mrb[0].mxu0
      %v3044 = vadd.f32 %v2635, %v3043
      %v3045 = vpop.f32.mrb[0].mxu0
      %3046 = vmatprep.mubr.bf16.mxu0 0
      %3047 = vmatmul.mubr.bf16.gmra.mrb[0].mxu0 %v2834
      %v3048 = vpop.f32.mrb[0].mxu0
      %v3049 = vadd.f32 %v2640, %v3048
      %v3050 = vpop.f32.mrb[0].mxu0
      %v3051 = vpop.f32.mrb[0].mxu0
      %v3052 = vadd.f32 %v2643, %v3051
      %v3053 = vpop.f32.mrb[0].mxu0
      %3054 = vmatprep.mubr.bf16.mxu0 0
      %3055 = vmatmul.mubr.bf16.gmra.mrb[0].mxu0 %v2837
      %v3056 = vpop.f32.mrb[0].mxu0
      %v3057 = vadd.f32 %v2648, %v3056
      %v3058 = vpop.f32.mrb[0].mxu0
      %v3059 = vpop.f32.mrb[0].mxu0
      %v3060 = vadd.f32 %v2651, %v3059
      %v3061 = vpop.f32.mrb[0].mxu0
      %3062 = vmatprep.mubr.bf16.mxu0 0
      %3063 = vmatmul.mubr.bf16.gmra.mrb[0].mxu0 %v2840
      %v3064 = vpop.f32.mrb[0].mxu0
      %v3065 = vadd.f32 %v2656, %v3064
      %v3066 = vpop.f32.mrb[0].mxu0
      %v3067 = vpop.f32.mrb[0].mxu0
      %v3068 = vadd.f32 %v2659, %v3067
      %v3069 = vpop.f32.mrb[0].mxu0
      %3070 = vmatprep.mubr.bf16.mxu0 0
      %3071 = vmatmul.mubr.bf16.gmra.mrb[0].mxu0 %v2843
      %v3072 = vpop.f32.mrb[0].mxu0
      %v3073 = vadd.f32 %v2664, %v3072
      %v3074 = vpop.f32.mrb[0].mxu0
      %v3075 = vpop.f32.mrb[0].mxu0
      %v3076 = vadd.f32 %v2667, %v3075
      %v3077 = vpop.f32.mrb[0].mxu0
      %3078 = vmatprep.mubr.bf16.mxu0 0
      %3079 = vmatmul.mubr.bf16.gmra.mrb[0].mxu0 %v2846
      %v3080 = vpop.f32.mrb[0].mxu0
      %v3081 = vadd.f32 %v2672, %v3080
      %v3082 = vpop.f32.mrb[0].mxu0
      %v3083 = vpop.f32.mrb[0].mxu0
      %v3084 = vadd.f32 %v2675, %v3083
      %v3085 = vpop.f32.mrb[0].mxu0
      %3086 = vmatprep.mubr.bf16.mxu0 0
      %3087 = vmatmul.mubr.bf16.gmra.mrb[0].mxu0 %v2849
      %v3088 = vpop.f32.mrb[0].mxu0
      %v3089 = vadd.f32 %v2680, %v3088
      %v3090 = vpop.f32.mrb[0].mxu0
      %v3091 = vpop.f32.mrb[0].mxu0
      %v3092 = vadd.f32 %v2683, %v3091
      %v3093 = vpop.f32.mrb[0].mxu0
      %3094 = vmatprep.mubr.bf16.mxu0 0
      %3095 = vmatmul.mubr.bf16.gmra.mrb[0].mxu0 %v2852
      %v3096 = vpop.f32.mrb[0].mxu0
      %v3097 = vadd.f32 %v2688, %v3096
      %v3098 = vpop.f32.mrb[0].mxu0
      %v3099 = vpop.f32.mrb[0].mxu0
      %v3100 = vadd.f32 %v2691, %v3099
      %v3101 = vpop.f32.mrb[0].mxu0
      %3102 = vmatprep.mubr.bf16.mxu0 0
      %3103 = vmatmul.mubr.bf16.gmra.mrb[0].mxu0 %v2855
      %v3104 = vpop.f32.mrb[0].mxu0
      %v3105 = vadd.f32 %v2696, %v3104
      %v3106 = vpop.f32.mrb[0].mxu0
      %v3107 = vpop.f32.mrb[0].mxu0
      %v3108 = vadd.f32 %v2699, %v3107
      %v3109 = vpop.f32.mrb[0].mxu0
      %3110 = vmatprep.mubr.bf16.mxu0 0
      %3111 = vmatmul.mubr.bf16.gmra.mrb[0].mxu0 %v2858
      %v3112 = vpop.f32.mrb[0].mxu0
      %v3113 = vadd.f32 %v2704, %v3112
      %v3114 = vpop.f32.mrb[0].mxu0
      %v3115 = vpop.f32.mrb[0].mxu0
      %v3116 = vadd.f32 %v2707, %v3115
      %v3117 = vpop.f32.mrb[0].mxu0
      %3118 = vmatprep.mubr.bf16.mxu0 0
      %3119 = vmatmul.mubr.bf16.gmra.mrb[0].mxu0 %v2861
      %v3120 = vpop.f32.mrb[0].mxu0
      %v3121 = vadd.f32 %v2712, %v3120
      %v3122 = vpop.f32.mrb[0].mxu0
      %v3123 = vpop.f32.mrb[0].mxu0
      %v3124 = vadd.f32 %v2715, %v3123
      %v3125 = vpop.f32.mrb[0].mxu0
      %3126 = vmatprep.mubr.bf16.mxu0 0
      %3127 = vmatmul.mubr.bf16.gmra.mrb[0].mxu0 %v2864
      %v3128 = vpop.f32.mrb[0].mxu0
      %v3129 = vadd.f32 %v2720, %v3128
      %v3130 = vpop.f32.mrb[0].mxu0
      %v3131 = vpop.f32.mrb[0].mxu0
      %v3132 = vadd.f32 %v2723, %v3131
      %v3133 = vpop.f32.mrb[0].mxu0
      %3134 = vmatprep.mubr.bf16.mxu0 0
      %3135 = vmatmul.mubr.bf16.gmra.mrb[0].mxu0 %v2867
      %v3136 = vpop.f32.mrb[0].mxu0
      %v3137 = vadd.f32 %v2728, %v3136
      %v3138 = vpop.f32.mrb[0].mxu0
      %v3139 = vpop.f32.mrb[0].mxu0
      %v3140 = vadd.f32 %v2731, %v3139
      %v3141 = vpop.f32.mrb[0].mxu0
      %3142 = vmatprep.mubr.bf16.mxu0 0
      %3143 = vmatmul.mubr.bf16.gmra.mrb[0].mxu0 %v2870
      %v3144 = vpop.f32.mrb[0].mxu0
      %v3145 = vadd.f32 %v2736, %v3144
      %v3146 = vpop.f32.mrb[0].mxu0
      %v3147 = vpop.f32.mrb[0].mxu0
      %v3148 = vadd.f32 %v2739, %v3147
      %v3149 = vpop.f32.mrb[0].mxu0
      %3150 = vmatprep.mubr.bf16.mxu0 0
      %3151 = vmatmul.mubr.bf16.gmra.mrb[0].mxu0 %v2873
      %v3152 = vpop.f32.mrb[0].mxu0
      %v3153 = vadd.f32 %v2744, %v3152
      %v3154 = vpop.f32.mrb[0].mxu0
      %v3155 = vpop.f32.mrb[0].mxu0
      %v3156 = vadd.f32 %v2747, %v3155
      %v3157 = vpop.f32.mrb[0].mxu0
      %3158 = vmatprep.mubr.bf16.mxu0 0
      %3159 = vmatmul.mubr.bf16.gmra.mrb[0].mxu0 %v2876
      %v3160 = vpop.f32.mrb[0].mxu0
      %v3161 = vadd.f32 %v2752, %v3160
      %v3162 = vpop.f32.mrb[0].mxu0
      %v3163 = vpop.f32.mrb[0].mxu0
      %v3164 = vadd.f32 %v2755, %v3163
      %v3165 = vpop.f32.mrb[0].mxu0
      %3166 = vdwg.mxu0
      %v3167 = vld [vmem:[%s10] sm:$0x1]
      %v3169 = vlaneseq
      %v3170 = vshrl.u32 %v3169, 7
      %v3171 = vsub.s32 0, %v3170
      %v3172 = vrot.slane %v3167, %v3171
      %v3174 = vadd.f32 %v2913, %v3172
      %v3175 = vadd.f32 %v2916, %v3172
      %v3176 = vadd.f32 %v2921, %v3172
      %v3177 = vadd.f32 %v2924, %v3172
      %v3178 = vadd.f32 %v2929, %v3172
      %v3179 = vadd.f32 %v2932, %v3172
      %v3180 = vadd.f32 %v2937, %v3172
      %v3181 = vadd.f32 %v2940, %v3172
      %v3182 = vadd.f32 %v2945, %v3172
      %v3183 = vadd.f32 %v2948, %v3172
      %v3184 = vadd.f32 %v2953, %v3172
      %v3185 = vadd.f32 %v2956, %v3172
      %v3186 = vadd.f32 %v2961, %v3172
      %v3187 = vadd.f32 %v2964, %v3172
      %v3188 = vadd.f32 %v2969, %v3172
      %v3189 = vadd.f32 %v2972, %v3172
      %v3190 = vadd.f32 %v2977, %v3172
      %v3191 = vadd.f32 %v2980, %v3172
      %v3192 = vadd.f32 %v2985, %v3172
      %v3193 = vadd.f32 %v2988, %v3172
      %v3194 = vadd.f32 %v2993, %v3172
      %v3195 = vadd.f32 %v2996, %v3172
      %v3196 = vadd.f32 %v3001, %v3172
      %v3197 = vadd.f32 %v3004, %v3172
      %v3198 = vadd.f32 %v3009, %v3172
      %v3199 = vadd.f32 %v3012, %v3172
      %v3200 = vadd.f32 %v3017, %v3172
      %v3201 = vadd.f32 %v3020, %v3172
      %v3202 = vadd.f32 %v3025, %v3172
      %v3203 = vadd.f32 %v3028, %v3172
      %v3204 = vadd.f32 %v3033, %v3172
      %v3205 = vadd.f32 %v3036, %v3172
      %v3206 = vadd.f32 %v3041, %v3172
      %v3207 = vadd.f32 %v3044, %v3172
      %v3208 = vadd.f32 %v3049, %v3172
      %v3209 = vadd.f32 %v3052, %v3172
      %v3210 = vadd.f32 %v3057, %v3172
      %v3211 = vadd.f32 %v3060, %v3172
      %v3212 = vadd.f32 %v3065, %v3172
      %v3213 = vadd.f32 %v3068, %v3172
      %v3214 = vadd.f32 %v3073, %v3172
      %v3215 = vadd.f32 %v3076, %v3172
      %v3216 = vadd.f32 %v3081, %v3172
      %v3217 = vadd.f32 %v3084, %v3172
      %v3218 = vadd.f32 %v3089, %v3172
      %v3219 = vadd.f32 %v3092, %v3172
      %v3220 = vadd.f32 %v3097, %v3172
      %v3221 = vadd.f32 %v3100, %v3172
      %v3222 = vadd.f32 %v3105, %v3172
      %v3223 = vadd.f32 %v3108, %v3172
      %v3224 = vadd.f32 %v3113, %v3172
      %v3225 = vadd.f32 %v3116, %v3172
      %v3226 = vadd.f32 %v3121, %v3172
      %v3227 = vadd.f32 %v3124, %v3172
      %v3228 = vadd.f32 %v3129, %v3172
      %v3229 = vadd.f32 %v3132, %v3172
      %v3230 = vadd.f32 %v3137, %v3172
      %v3231 = vadd.f32 %v3140, %v3172
      %v3232 = vadd.f32 %v3145, %v3172
      %v3233 = vadd.f32 %v3148, %v3172
      %v3234 = vadd.f32 %v3153, %v3172
      %v3235 = vadd.f32 %v3156, %v3172
      %v3236 = vadd.f32 %v3161, %v3172
      %v3237 = vadd.f32 %v3164, %v3172
      %v3238 = vmax.f32 %v3174, 0.0
      %v3239 = vmax.f32 %v3175, 0.0
      %v3240 = vmax.f32 %v3176, 0.0
      %v3241 = vmax.f32 %v3177, 0.0
      %v3242 = vmax.f32 %v3178, 0.0
      %v3243 = vmax.f32 %v3179, 0.0
      %v3244 = vmax.f32 %v3180, 0.0
      %v3245 = vmax.f32 %v3181, 0.0
      %v3246 = vmax.f32 %v3182, 0.0
      %v3247 = vmax.f32 %v3183, 0.0
      %v3248 = vmax.f32 %v3184, 0.0
      %v3249 = vmax.f32 %v3185, 0.0
      %v3250 = vmax.f32 %v3186, 0.0
      %v3251 = vmax.f32 %v3187, 0.0
      %v3252 = vmax.f32 %v3188, 0.0
      %v3253 = vmax.f32 %v3189, 0.0
      %v3254 = vmax.f32 %v3190, 0.0
      %v3255 = vmax.f32 %v3191, 0.0
      %v3256 = vmax.f32 %v3192, 0.0
      %v3257 = vmax.f32 %v3193, 0.0
      %v3258 = vmax.f32 %v3194, 0.0
      %v3259 = vmax.f32 %v3195, 0.0
      %v3260 = vmax.f32 %v3196, 0.0
      %v3261 = vmax.f32 %v3197, 0.0
      %v3262 = vmax.f32 %v3198, 0.0
      %v3263 = vmax.f32 %v3199, 0.0
      %v3264 = vmax.f32 %v3200, 0.0
      %v3265 = vmax.f32 %v3201, 0.0
      %v3266 = vmax.f32 %v3202, 0.0
      %v3267 = vmax.f32 %v3203, 0.0
      %v3268 = vmax.f32 %v3204, 0.0
      %v3269 = vmax.f32 %v3205, 0.0
      %v3270 = vmax.f32 %v3206, 0.0
      %v3271 = vmax.f32 %v3207, 0.0
      %v3272 = vmax.f32 %v3208, 0.0
      %v3273 = vmax.f32 %v3209, 0.0
      %v3274 = vmax.f32 %v3210, 0.0
      %v3275 = vmax.f32 %v3211, 0.0
      %v3276 = vmax.f32 %v3212, 0.0
      %v3277 = vmax.f32 %v3213, 0.0
      %v3278 = vmax.f32 %v3214, 0.0
      %v3279 = vmax.f32 %v3215, 0.0
      %v3280 = vmax.f32 %v3216, 0.0
      %v3281 = vmax.f32 %v3217, 0.0
      %v3282 = vmax.f32 %v3218, 0.0
      %v3283 = vmax.f32 %v3219, 0.0
      %v3284 = vmax.f32 %v3220, 0.0
      %v3285 = vmax.f32 %v3221, 0.0
      %v3286 = vmax.f32 %v3222, 0.0
      %v3287 = vmax.f32 %v3223, 0.0
      %v3288 = vmax.f32 %v3224, 0.0
      %v3289 = vmax.f32 %v3225, 0.0
      %v3290 = vmax.f32 %v3226, 0.0
      %v3291 = vmax.f32 %v3227, 0.0
      %v3292 = vmax.f32 %v3228, 0.0
      %v3293 = vmax.f32 %v3229, 0.0
      %v3294 = vmax.f32 %v3230, 0.0
      %v3295 = vmax.f32 %v3231, 0.0
      %v3296 = vmax.f32 %v3232, 0.0
      %v3297 = vmax.f32 %v3233, 0.0
      %v3298 = vmax.f32 %v3234, 0.0
      %v3299 = vmax.f32 %v3235, 0.0
      %v3300 = vmax.f32 %v3236, 0.0
      %v3301 = vmax.f32 %v3237, 0.0
      %v3302 = vpack.c.bf16 %v3239, %v3238
      %v3303 = vpack.c.bf16 %v3241, %v3240
      %v3304 = vpack.c.bf16 %v3243, %v3242
      %v3305 = vpack.c.bf16 %v3245, %v3244
      %v3306 = vpack.c.bf16 %v3247, %v3246
      %v3307 = vpack.c.bf16 %v3249, %v3248
      %v3308 = vpack.c.bf16 %v3251, %v3250
      %v3309 = vpack.c.bf16 %v3253, %v3252
      %v3310 = vpack.c.bf16 %v3255, %v3254
      %v3311 = vpack.c.bf16 %v3257, %v3256
      %v3312 = vpack.c.bf16 %v3259, %v3258
      %v3313 = vpack.c.bf16 %v3261, %v3260
      %v3314 = vpack.c.bf16 %v3263, %v3262
      %v3315 = vpack.c.bf16 %v3265, %v3264
      %v3316 = vpack.c.bf16 %v3267, %v3266
      %v3317 = vpack.c.bf16 %v3269, %v3268
      %v3318 = vpack.c.bf16 %v3271, %v3270
      %v3319 = vpack.c.bf16 %v3273, %v3272
      %v3320 = vpack.c.bf16 %v3275, %v3274
      %v3321 = vpack.c.bf16 %v3277, %v3276
      %v3322 = vpack.c.bf16 %v3279, %v3278
      %v3323 = vpack.c.bf16 %v3281, %v3280
      %v3324 = vpack.c.bf16 %v3283, %v3282
      %v3325 = vpack.c.bf16 %v3285, %v3284
      %v3326 = vpack.c.bf16 %v3287, %v3286
      %v3327 = vpack.c.bf16 %v3289, %v3288
      %v3328 = vpack.c.bf16 %v3291, %v3290
      %v3329 = vpack.c.bf16 %v3293, %v3292
      %v3330 = vpack.c.bf16 %v3295, %v3294
      %v3331 = vpack.c.bf16 %v3297, %v3296
      %v3332 = vpack.c.bf16 %v3299, %v3298
      %v3333 = vpack.c.bf16 %v3301, %v3300
      %v3334 = vld [vmem:[%s11] sm:$0xf]
      %v3335 = vld [vmem:[%s11 + $0x4] sm:$0xf]
      %v3336 = vld [vmem:[%s11 + $0x8] sm:$0xf]
      %v3337 = vld [vmem:[%s11 + $0xc] sm:$0xf]
      %v3338 = vld [vmem:[%s11 + $0x10] sm:$0xf]
      %v3339 = vld [vmem:[%s11 + $0x14] sm:$0xf]
      %v3340 = vld [vmem:[%s11 + $0x18] sm:$0xf]
      %v3341 = vld [vmem:[%s11 + $0x1c] sm:$0xf]
      %v3342 = vld [vmem:[%s11 + $0x20] sm:$0xf]
      %v3343 = vld [vmem:[%s11 + $0x24] sm:$0xf]
      %v3344 = vld [vmem:[%s11 + $0x28] sm:$0xf]
      %v3345 = vld [vmem:[%s11 + $0x2c] sm:$0xf]
      %v3346 = vld [vmem:[%s11 + $0x30] sm:$0xf]
      %v3347 = vld [vmem:[%s11 + $0x34] sm:$0xf]
      %v3348 = vld [vmem:[%s11 + $0x38] sm:$0xf]
      %v3349 = vld [vmem:[%s11 + $0x3c] sm:$0xf]
      %v3350 = vld [vmem:[%s12] sm:$0x1]
      %v3352 = vlaneseq
      %v3353 = vshrl.u32 %v3352, 7
      %v3354 = vsub.s32 0, %v3353
      %v3355 = vrot.slane %v3350, %v3354
      %v3373 = vunpack.c.l.b16 %v3334
      %v3374 = vunpack.c.l.b16 %v3335
      %v3375 = vunpack.c.l.b16 %v3336
      %v3376 = vunpack.c.l.b16 %v3337
      %v3377 = vunpack.c.l.b16 %v3338
      %v3378 = vunpack.c.l.b16 %v3339
      %v3379 = vunpack.c.l.b16 %v3340
      %v3380 = vunpack.c.l.b16 %v3341
      %v3381 = vunpack.c.l.b16 %v3342
      %v3382 = vunpack.c.l.b16 %v3343
      %v3383 = vunpack.c.l.b16 %v3344
      %v3384 = vunpack.c.l.b16 %v3345
      %v3385 = vunpack.c.l.b16 %v3346
      %v3386 = vunpack.c.l.b16 %v3347
      %v3387 = vunpack.c.l.b16 %v3348
      %v3388 = vunpack.c.l.b16 %v3349
      %v3389 = vpack.c.b16 %v3374, %v3373
      %v3390 = vpack.c.b16 %v3376, %v3375
      %v3391 = vpack.c.b16 %v3378, %v3377
      %v3392 = vpack.c.b16 %v3380, %v3379
      %v3393 = vpack.c.b16 %v3382, %v3381
      %v3394 = vpack.c.b16 %v3384, %v3383
      %v3395 = vpack.c.b16 %v3386, %v3385
      %v3396 = vpack.c.b16 %v3388, %v3387
      %3405 = vmatprep.subr.bf16.mxu0 0
      %3406 = vmatpush1.bf16.msra.mxu0 %v3389
      %3407 = vmatprep.subr.bf16.mxu0 0
      %3408 = vmatpush1.bf16.msra.mxu0 %v3390
      %3409 = vmatprep.subr.bf16.mxu0 0
      %3410 = vmatpush1.bf16.msra.mxu0 %v3391
      %3411 = vmatprep.subr.bf16.mxu0 0
      %3412 = vmatpush1.bf16.msra.mxu0 %v3392
      %3413 = vmatprep.subr.bf16.mxu0 0
      %3414 = vmatpush1.bf16.msra.mxu0 %v3393
      %3415 = vmatprep.subr.bf16.mxu0 0
      %3416 = vmatpush1.bf16.msra.mxu0 %v3394
      %3417 = vmatprep.subr.bf16.mxu0 0
      %3418 = vmatpush1.bf16.msra.mxu0 %v3395
      %3419 = vmatprep.subr.bf16.mxu0 0
      %3420 = vmatpush1.bf16.msra.mxu0 %v3396
      %3421 = vmatprep.subr.bf16.mxu0 0
      %3422 = vmatpush1.bf16.msra.mxu0 0
      %3423 = vmatprep.subr.bf16.mxu0 0
      %3424 = vmatpush1.bf16.msra.mxu0 0
      %3425 = vmatprep.subr.bf16.mxu0 0
      %3426 = vmatpush1.bf16.msra.mxu0 0
      %3427 = vmatprep.subr.bf16.mxu0 0
      %3428 = vmatpush1.bf16.msra.mxu0 0
      %3429 = vmatprep.subr.bf16.mxu0 0
      %3430 = vmatpush1.bf16.msra.mxu0 0
      %3431 = vmatprep.subr.bf16.mxu0 0
      %3432 = vmatpush1.bf16.msra.mxu0 0
      %3433 = vmatprep.subr.bf16.mxu0 0
      %3434 = vmatpush1.bf16.msra.mxu0 0
      %3435 = vmatprep.subr.bf16.mxu0 0
      %3436 = vmatpush1.bf16.msra.mxu0 0
      %3437 = vmatprep.mubr.bf16.mxu0 0
      %3438 = vmatmul.mubr.bf16.gmra.mrb[0].mxu0 %v3302
      %v3439 = vpop.f32.mrb[0].mxu0
      %v3440 = vadd.f32 %v3355, %v3439
      %v3441 = vpop.f32.mrb[0].mxu0
      %v3442 = vpop.f32.mrb[0].mxu0
      %v3443 = vadd.f32 %v3355, %v3442
      %v3444 = vpop.f32.mrb[0].mxu0
      %3445 = vmatprep.mubr.bf16.mxu0 0
      %3446 = vmatmul.mubr.bf16.gmra.mrb[0].mxu0 %v3303
      %v3447 = vpop.f32.mrb[0].mxu0
      %v3448 = vadd.f32 %v3355, %v3447
      %v3449 = vpop.f32.mrb[0].mxu0
      %v3450 = vpop.f32.mrb[0].mxu0
      %v3451 = vadd.f32 %v3355, %v3450
      %v3452 = vpop.f32.mrb[0].mxu0
      %3453 = vmatprep.mubr.bf16.mxu0 0
      %3454 = vmatmul.mubr.bf16.gmra.mrb[0].mxu0 %v3304
      %v3455 = vpop.f32.mrb[0].mxu0
      %v3456 = vadd.f32 %v3355, %v3455
      %v3457 = vpop.f32.mrb[0].mxu0
      %v3458 = vpop.f32.mrb[0].mxu0
      %v3459 = vadd.f32 %v3355, %v3458
      %v3460 = vpop.f32.mrb[0].mxu0
      %3461 = vmatprep.mubr.bf16.mxu0 0
      %3462 = vmatmul.mubr.bf16.gmra.mrb[0].mxu0 %v3305
      %v3463 = vpop.f32.mrb[0].mxu0
      %v3464 = vadd.f32 %v3355, %v3463
      %v3465 = vpop.f32.mrb[0].mxu0
      %v3466 = vpop.f32.mrb[0].mxu0
      %v3467 = vadd.f32 %v3355, %v3466
      %v3468 = vpop.f32.mrb[0].mxu0
      %3469 = vmatprep.mubr.bf16.mxu0 0
      %3470 = vmatmul.mubr.bf16.gmra.mrb[0].mxu0 %v3306
      %v3471 = vpop.f32.mrb[0].mxu0
      %v3472 = vadd.f32 %v3355, %v3471
      %v3473 = vpop.f32.mrb[0].mxu0
      %v3474 = vpop.f32.mrb[0].mxu0
      %v3475 = vadd.f32 %v3355, %v3474
      %v3476 = vpop.f32.mrb[0].mxu0
      %3477 = vmatprep.mubr.bf16.mxu0 0
      %3478 = vmatmul.mubr.bf16.gmra.mrb[0].mxu0 %v3307
      %v3479 = vpop.f32.mrb[0].mxu0
      %v3480 = vadd.f32 %v3355, %v3479
      %v3481 = vpop.f32.mrb[0].mxu0
      %v3482 = vpop.f32.mrb[0].mxu0
      %v3483 = vadd.f32 %v3355, %v3482
      %v3484 = vpop.f32.mrb[0].mxu0
      %3485 = vmatprep.mubr.bf16.mxu0 0
      %3486 = vmatmul.mubr.bf16.gmra.mrb[0].mxu0 %v3308
      %v3487 = vpop.f32.mrb[0].mxu0
      %v3488 = vadd.f32 %v3355, %v3487
      %v3489 = vpop.f32.mrb[0].mxu0
      %v3490 = vpop.f32.mrb[0].mxu0
      %v3491 = vadd.f32 %v3355, %v3490
      %v3492 = vpop.f32.mrb[0].mxu0
      %3493 = vmatprep.mubr.bf16.mxu0 0
      %3494 = vmatmul.mubr.bf16.gmra.mrb[0].mxu0 %v3309
      %v3495 = vpop.f32.mrb[0].mxu0
      %v3496 = vadd.f32 %v3355, %v3495
      %v3497 = vpop.f32.mrb[0].mxu0
      %v3498 = vpop.f32.mrb[0].mxu0
      %v3499 = vadd.f32 %v3355, %v3498
      %v3500 = vpop.f32.mrb[0].mxu0
      %3501 = vmatprep.mubr.bf16.mxu0 0
      %3502 = vmatmul.mubr.bf16.gmra.mrb[0].mxu0 %v3310
      %v3503 = vpop.f32.mrb[0].mxu0
      %v3504 = vadd.f32 %v3355, %v3503
      %v3505 = vpop.f32.mrb[0].mxu0
      %v3506 = vpop.f32.mrb[0].mxu0
      %v3507 = vadd.f32 %v3355, %v3506
      %v3508 = vpop.f32.mrb[0].mxu0
      %3509 = vmatprep.mubr.bf16.mxu0 0
      %3510 = vmatmul.mubr.bf16.gmra.mrb[0].mxu0 %v3311
      %v3511 = vpop.f32.mrb[0].mxu0
      %v3512 = vadd.f32 %v3355, %v3511
      %v3513 = vpop.f32.mrb[0].mxu0
      %v3514 = vpop.f32.mrb[0].mxu0
      %v3515 = vadd.f32 %v3355, %v3514
      %v3516 = vpop.f32.mrb[0].mxu0
      %3517 = vmatprep.mubr.bf16.mxu0 0
      %3518 = vmatmul.mubr.bf16.gmra.mrb[0].mxu0 %v3312
      %v3519 = vpop.f32.mrb[0].mxu0
      %v3520 = vadd.f32 %v3355, %v3519
      %v3521 = vpop.f32.mrb[0].mxu0
      %v3522 = vpop.f32.mrb[0].mxu0
      %v3523 = vadd.f32 %v3355, %v3522
      %v3524 = vpop.f32.mrb[0].mxu0
      %3525 = vmatprep.mubr.bf16.mxu0 0
      %3526 = vmatmul.mubr.bf16.gmra.mrb[0].mxu0 %v3313
      %v3527 = vpop.f32.mrb[0].mxu0
      %v3528 = vadd.f32 %v3355, %v3527
      %v3529 = vpop.f32.mrb[0].mxu0
      %v3530 = vpop.f32.mrb[0].mxu0
      %v3531 = vadd.f32 %v3355, %v3530
      %v3532 = vpop.f32.mrb[0].mxu0
      %3533 = vmatprep.mubr.bf16.mxu0 0
      %3534 = vmatmul.mubr.bf16.gmra.mrb[0].mxu0 %v3314
      %v3535 = vpop.f32.mrb[0].mxu0
      %v3536 = vadd.f32 %v3355, %v3535
      %v3537 = vpop.f32.mrb[0].mxu0
      %v3538 = vpop.f32.mrb[0].mxu0
      %v3539 = vadd.f32 %v3355, %v3538
      %v3540 = vpop.f32.mrb[0].mxu0
      %3541 = vmatprep.mubr.bf16.mxu0 0
      %3542 = vmatmul.mubr.bf16.gmra.mrb[0].mxu0 %v3315
      %v3543 = vpop.f32.mrb[0].mxu0
      %v3544 = vadd.f32 %v3355, %v3543
      %v3545 = vpop.f32.mrb[0].mxu0
      %v3546 = vpop.f32.mrb[0].mxu0
      %v3547 = vadd.f32 %v3355, %v3546
      %v3548 = vpop.f32.mrb[0].mxu0
      %3549 = vmatprep.mubr.bf16.mxu0 0
      %3550 = vmatmul.mubr.bf16.gmra.mrb[0].mxu0 %v3316
      %v3551 = vpop.f32.mrb[0].mxu0
      %v3552 = vadd.f32 %v3355, %v3551
      %v3553 = vpop.f32.mrb[0].mxu0
      %v3554 = vpop.f32.mrb[0].mxu0
      %v3555 = vadd.f32 %v3355, %v3554
      %v3556 = vpop.f32.mrb[0].mxu0
      %3557 = vmatprep.mubr.bf16.mxu0 0
      %3558 = vmatmul.mubr.bf16.gmra.mrb[0].mxu0 %v3317
      %v3559 = vpop.f32.mrb[0].mxu0
      %v3560 = vadd.f32 %v3355, %v3559
      %v3561 = vpop.f32.mrb[0].mxu0
      %v3562 = vpop.f32.mrb[0].mxu0
      %v3563 = vadd.f32 %v3355, %v3562
      %v3564 = vpop.f32.mrb[0].mxu0
      %3565 = vmatprep.mubr.bf16.mxu0 0
      %3566 = vmatmul.mubr.bf16.gmra.mrb[0].mxu0 %v3318
      %v3567 = vpop.f32.mrb[0].mxu0
      %v3568 = vadd.f32 %v3355, %v3567
      %v3569 = vpop.f32.mrb[0].mxu0
      %v3570 = vpop.f32.mrb[0].mxu0
      %v3571 = vadd.f32 %v3355, %v3570
      %v3572 = vpop.f32.mrb[0].mxu0
      %3573 = vmatprep.mubr.bf16.mxu0 0
      %3574 = vmatmul.mubr.bf16.gmra.mrb[0].mxu0 %v3319
      %v3575 = vpop.f32.mrb[0].mxu0
      %v3576 = vadd.f32 %v3355, %v3575
      %v3577 = vpop.f32.mrb[0].mxu0
      %v3578 = vpop.f32.mrb[0].mxu0
      %v3579 = vadd.f32 %v3355, %v3578
      %v3580 = vpop.f32.mrb[0].mxu0
      %3581 = vmatprep.mubr.bf16.mxu0 0
      %3582 = vmatmul.mubr.bf16.gmra.mrb[0].mxu0 %v3320
      %v3583 = vpop.f32.mrb[0].mxu0
      %v3584 = vadd.f32 %v3355, %v3583
      %v3585 = vpop.f32.mrb[0].mxu0
      %v3586 = vpop.f32.mrb[0].mxu0
      %v3587 = vadd.f32 %v3355, %v3586
      %v3588 = vpop.f32.mrb[0].mxu0
      %3589 = vmatprep.mubr.bf16.mxu0 0
      %3590 = vmatmul.mubr.bf16.gmra.mrb[0].mxu0 %v3321
      %v3591 = vpop.f32.mrb[0].mxu0
      %v3592 = vadd.f32 %v3355, %v3591
      %v3593 = vpop.f32.mrb[0].mxu0
      %v3594 = vpop.f32.mrb[0].mxu0
      %v3595 = vadd.f32 %v3355, %v3594
      %v3596 = vpop.f32.mrb[0].mxu0
      %3597 = vmatprep.mubr.bf16.mxu0 0
      %3598 = vmatmul.mubr.bf16.gmra.mrb[0].mxu0 %v3322
      %v3599 = vpop.f32.mrb[0].mxu0
      %v3600 = vadd.f32 %v3355, %v3599
      %v3601 = vpop.f32.mrb[0].mxu0
      %v3602 = vpop.f32.mrb[0].mxu0
      %v3603 = vadd.f32 %v3355, %v3602
      %v3604 = vpop.f32.mrb[0].mxu0
      %3605 = vmatprep.mubr.bf16.mxu0 0
      %3606 = vmatmul.mubr.bf16.gmra.mrb[0].mxu0 %v3323
      %v3607 = vpop.f32.mrb[0].mxu0
      %v3608 = vadd.f32 %v3355, %v3607
      %v3609 = vpop.f32.mrb[0].mxu0
      %v3610 = vpop.f32.mrb[0].mxu0
      %v3611 = vadd.f32 %v3355, %v3610
      %v3612 = vpop.f32.mrb[0].mxu0
      %3613 = vmatprep.mubr.bf16.mxu0 0
      %3614 = vmatmul.mubr.bf16.gmra.mrb[0].mxu0 %v3324
      %v3615 = vpop.f32.mrb[0].mxu0
      %v3616 = vadd.f32 %v3355, %v3615
      %v3617 = vpop.f32.mrb[0].mxu0
      %v3618 = vpop.f32.mrb[0].mxu0
      %v3619 = vadd.f32 %v3355, %v3618
      %v3620 = vpop.f32.mrb[0].mxu0
      %3621 = vmatprep.mubr.bf16.mxu0 0
      %3622 = vmatmul.mubr.bf16.gmra.mrb[0].mxu0 %v3325
      %v3623 = vpop.f32.mrb[0].mxu0
      %v3624 = vadd.f32 %v3355, %v3623
      %v3625 = vpop.f32.mrb[0].mxu0
      %v3626 = vpop.f32.mrb[0].mxu0
      %v3627 = vadd.f32 %v3355, %v3626
      %v3628 = vpop.f32.mrb[0].mxu0
      %3629 = vmatprep.mubr.bf16.mxu0 0
      %3630 = vmatmul.mubr.bf16.gmra.mrb[0].mxu0 %v3326
      %v3631 = vpop.f32.mrb[0].mxu0
      %v3632 = vadd.f32 %v3355, %v3631
      %v3633 = vpop.f32.mrb[0].mxu0
      %v3634 = vpop.f32.mrb[0].mxu0
      %v3635 = vadd.f32 %v3355, %v3634
      %v3636 = vpop.f32.mrb[0].mxu0
      %3637 = vmatprep.mubr.bf16.mxu0 0
      %3638 = vmatmul.mubr.bf16.gmra.mrb[0].mxu0 %v3327
      %v3639 = vpop.f32.mrb[0].mxu0
      %v3640 = vadd.f32 %v3355, %v3639
      %v3641 = vpop.f32.mrb[0].mxu0
      %v3642 = vpop.f32.mrb[0].mxu0
      %v3643 = vadd.f32 %v3355, %v3642
      %v3644 = vpop.f32.mrb[0].mxu0
      %3645 = vmatprep.mubr.bf16.mxu0 0
      %3646 = vmatmul.mubr.bf16.gmra.mrb[0].mxu0 %v3328
      %v3647 = vpop.f32.mrb[0].mxu0
      %v3648 = vadd.f32 %v3355, %v3647
      %v3649 = vpop.f32.mrb[0].mxu0
      %v3650 = vpop.f32.mrb[0].mxu0
      %v3651 = vadd.f32 %v3355, %v3650
      %v3652 = vpop.f32.mrb[0].mxu0
      %3653 = vmatprep.mubr.bf16.mxu0 0
      %3654 = vmatmul.mubr.bf16.gmra.mrb[0].mxu0 %v3329
      %v3655 = vpop.f32.mrb[0].mxu0
      %v3656 = vadd.f32 %v3355, %v3655
      %v3657 = vpop.f32.mrb[0].mxu0
      %v3658 = vpop.f32.mrb[0].mxu0
      %v3659 = vadd.f32 %v3355, %v3658
      %v3660 = vpop.f32.mrb[0].mxu0
      %3661 = vmatprep.mubr.bf16.mxu0 0
      %3662 = vmatmul.mubr.bf16.gmra.mrb[0].mxu0 %v3330
      %v3663 = vpop.f32.mrb[0].mxu0
      %v3664 = vadd.f32 %v3355, %v3663
      %v3665 = vpop.f32.mrb[0].mxu0
      %v3666 = vpop.f32.mrb[0].mxu0
      %v3667 = vadd.f32 %v3355, %v3666
      %v3668 = vpop.f32.mrb[0].mxu0
      %3669 = vmatprep.mubr.bf16.mxu0 0
      %3670 = vmatmul.mubr.bf16.gmra.mrb[0].mxu0 %v3331
      %v3671 = vpop.f32.mrb[0].mxu0
      %v3672 = vadd.f32 %v3355, %v3671
      %v3673 = vpop.f32.mrb[0].mxu0
      %v3674 = vpop.f32.mrb[0].mxu0
      %v3675 = vadd.f32 %v3355, %v3674
      %v3676 = vpop.f32.mrb[0].mxu0
      %3677 = vmatprep.mubr.bf16.mxu0 0
      %3678 = vmatmul.mubr.bf16.gmra.mrb[0].mxu0 %v3332
      %v3679 = vpop.f32.mrb[0].mxu0
      %v3680 = vadd.f32 %v3355, %v3679
      %v3681 = vpop.f32.mrb[0].mxu0
      %v3682 = vpop.f32.mrb[0].mxu0
      %v3683 = vadd.f32 %v3355, %v3682
      %v3684 = vpop.f32.mrb[0].mxu0
      %3685 = vmatprep.mubr.bf16.mxu0 0
      %3686 = vmatmul.mubr.bf16.gmra.mrb[0].mxu0 %v3333
      %v3687 = vpop.f32.mrb[0].mxu0
      %v3688 = vadd.f32 %v3355, %v3687
      %v3689 = vpop.f32.mrb[0].mxu0
      %v3690 = vpop.f32.mrb[0].mxu0
      %v3691 = vadd.f32 %v3355, %v3690
      %v3692 = vpop.f32.mrb[0].mxu0
      %3693 = vdwg.mxu0
      %vm3694 = vcmask 64512
      %3695 = vst.msk [vmem:[%s464] sm:$0xff] %vm3694, %v3440
      %3696 = vst.msk [vmem:[%s464 + $0x8] sm:$0xff] %vm3694, %v3443
      %3697 = vst.msk [vmem:[%s464 + $0x10] sm:$0xff] %vm3694, %v3448
      %3698 = vst.msk [vmem:[%s464 + $0x18] sm:$0xff] %vm3694, %v3451
      %3699 = vst.msk [vmem:[%s464 + $0x20] sm:$0xff] %vm3694, %v3456
      %3700 = vst.msk [vmem:[%s464 + $0x28] sm:$0xff] %vm3694, %v3459
      %3701 = vst.msk [vmem:[%s464 + $0x30] sm:$0xff] %vm3694, %v3464
      %3702 = vst.msk [vmem:[%s464 + $0x38] sm:$0xff] %vm3694, %v3467
      %3703 = vst.msk [vmem:[%s464 + $0x40] sm:$0xff] %vm3694, %v3472
      %3704 = vst.msk [vmem:[%s464 + $0x48] sm:$0xff] %vm3694, %v3475
      %3705 = vst.msk [vmem:[%s464 + $0x50] sm:$0xff] %vm3694, %v3480
      %3706 = vst.msk [vmem:[%s464 + $0x58] sm:$0xff] %vm3694, %v3483
      %3707 = vst.msk [vmem:[%s464 + $0x60] sm:$0xff] %vm3694, %v3488
      %3708 = vst.msk [vmem:[%s464 + $0x68] sm:$0xff] %vm3694, %v3491
      %3709 = vst.msk [vmem:[%s464 + $0x70] sm:$0xff] %vm3694, %v3496
      %3710 = vst.msk [vmem:[%s464 + $0x78] sm:$0xff] %vm3694, %v3499
      %3711 = vst.msk [vmem:[%s464 + $0x80] sm:$0xff] %vm3694, %v3504
      %3712 = vst.msk [vmem:[%s464 + $0x88] sm:$0xff] %vm3694, %v3507
      %3713 = vst.msk [vmem:[%s464 + $0x90] sm:$0xff] %vm3694, %v3512
      %3714 = vst.msk [vmem:[%s464 + $0x98] sm:$0xff] %vm3694, %v3515
      %3715 = vst.msk [vmem:[%s464 + $0xa0] sm:$0xff] %vm3694, %v3520
      %3716 = vst.msk [vmem:[%s464 + $0xa8] sm:$0xff] %vm3694, %v3523
      %3717 = vst.msk [vmem:[%s464 + $0xb0] sm:$0xff] %vm3694, %v3528
      %3718 = vst.msk [vmem:[%s464 + $0xb8] sm:$0xff] %vm3694, %v3531
      %3719 = vst.msk [vmem:[%s464 + $0xc0] sm:$0xff] %vm3694, %v3536
      %3720 = vst.msk [vmem:[%s464 + $0xc8] sm:$0xff] %vm3694, %v3539
      %3721 = vst.msk [vmem:[%s464 + $0xd0] sm:$0xff] %vm3694, %v3544
      %3722 = vst.msk [vmem:[%s464 + $0xd8] sm:$0xff] %vm3694, %v3547
      %3723 = vst.msk [vmem:[%s464 + $0xe0] sm:$0xff] %vm3694, %v3552
      %3724 = vst.msk [vmem:[%s464 + $0xe8] sm:$0xff] %vm3694, %v3555
      %3725 = vst.msk [vmem:[%s464 + $0xf0] sm:$0xff] %vm3694, %v3560
      %3726 = vst.msk [vmem:[%s464 + $0xf8] sm:$0xff] %vm3694, %v3563
      %3727 = vst.msk [vmem:[%s464 + $0x100] sm:$0xff] %vm3694, %v3568
      %3728 = vst.msk [vmem:[%s464 + $0x108] sm:$0xff] %vm3694, %v3571
      %3729 = vst.msk [vmem:[%s464 + $0x110] sm:$0xff] %vm3694, %v3576
      %3730 = vst.msk [vmem:[%s464 + $0x118] sm:$0xff] %vm3694, %v3579
      %3731 = vst.msk [vmem:[%s464 + $0x120] sm:$0xff] %vm3694, %v3584
      %3732 = vst.msk [vmem:[%s464 + $0x128] sm:$0xff] %vm3694, %v3587
      %3733 = vst.msk [vmem:[%s464 + $0x130] sm:$0xff] %vm3694, %v3592
      %3734 = vst.msk [vmem:[%s464 + $0x138] sm:$0xff] %vm3694, %v3595
      %3735 = vst.msk [vmem:[%s464 + $0x140] sm:$0xff] %vm3694, %v3600
      %3736 = vst.msk [vmem:[%s464 + $0x148] sm:$0xff] %vm3694, %v3603
      %3737 = vst.msk [vmem:[%s464 + $0x150] sm:$0xff] %vm3694, %v3608
      %3738 = vst.msk [vmem:[%s464 + $0x158] sm:$0xff] %vm3694, %v3611
      %3739 = vst.msk [vmem:[%s464 + $0x160] sm:$0xff] %vm3694, %v3616
      %3740 = vst.msk [vmem:[%s464 + $0x168] sm:$0xff] %vm3694, %v3619
      %3741 = vst.msk [vmem:[%s464 + $0x170] sm:$0xff] %vm3694, %v3624
      %3742 = vst.msk [vmem:[%s464 + $0x178] sm:$0xff] %vm3694, %v3627
      %3743 = vst.msk [vmem:[%s464 + $0x180] sm:$0xff] %vm3694, %v3632
      %3744 = vst.msk [vmem:[%s464 + $0x188] sm:$0xff] %vm3694, %v3635
      %3745 = vst.msk [vmem:[%s464 + $0x190] sm:$0xff] %vm3694, %v3640
      %3746 = vst.msk [vmem:[%s464 + $0x198] sm:$0xff] %vm3694, %v3643
      %3747 = vst.msk [vmem:[%s464 + $0x1a0] sm:$0xff] %vm3694, %v3648
      %3748 = vst.msk [vmem:[%s464 + $0x1a8] sm:$0xff] %vm3694, %v3651
      %3749 = vst.msk [vmem:[%s464 + $0x1b0] sm:$0xff] %vm3694, %v3656
      %3750 = vst.msk [vmem:[%s464 + $0x1b8] sm:$0xff] %vm3694, %v3659
      %3751 = vst.msk [vmem:[%s464 + $0x1c0] sm:$0xff] %vm3694, %v3664
      %3752 = vst.msk [vmem:[%s464 + $0x1c8] sm:$0xff] %vm3694, %v3667
      %3753 = vst.msk [vmem:[%s464 + $0x1d0] sm:$0xff] %vm3694, %v3672
      %3754 = vst.msk [vmem:[%s464 + $0x1d8] sm:$0xff] %vm3694, %v3675
      %3755 = vst.msk [vmem:[%s464 + $0x1e0] sm:$0xff] %vm3694, %v3680
      %3756 = vst.msk [vmem:[%s464 + $0x1e8] sm:$0xff] %vm3694, %v3683
      %3757 = vst.msk [vmem:[%s464 + $0x1f0] sm:$0xff] %vm3694, %v3688
      %3758 = vst.msk [vmem:[%s464 + $0x1f8] sm:$0xff] %vm3694, %v3691
      %s3759 = smul.u32 64, %s24
      %p3760 = scmp.lt.s32.totalorder %s3759, 127
      %s3761 = scalar_select %p3760, %s3759, 127
      %s3762 = smul.addr %s3761, 8
      %s3763 = scalar_lea.vmem %s13, %s3762
      // Predicated region
      $region73: #{rgbnet_forward.1} parent=71 // pred_check
        %p3764 = pneg %p325
      $region74: #{rgbnet_forward.1} parent=71 // pred_check_branch
        %3766 = sbr.rel (%p3764) target = $region76
      $region75: #{rgbnet_forward.1} parent=71 // pred_region
        %s3767 = smul.u32 64, %s24
      $region76: #{rgbnet_forward.1} parent=71 // pred_fallthru
        _
    $region72: #{rgbnet_forward.1} parent=5 // pred_fallthru
      _
    %p3768 = scmp.le.s32.totalorder 2, %s19
    // Predicated region
    $region77: #{rgbnet_forward.1} parent=5 // pred_check
      %p3769 = pneg %p3768
    $region78: #{rgbnet_forward.1} parent=5 // pred_check_branch
      %3771 = sbr.rel (%p3769) target = $region80
    $region79: #{rgbnet_forward.1} parent=5 // pred_region
      %s3772 = ssub.s32 %s19, 2
      // Predicated region
      $region81: #{rgbnet_forward.1} parent=79 // pred_check
        %p3773 = pneg %p331
      $region82: #{rgbnet_forward.1} parent=79 // pred_check_branch
        %3775 = sbr.rel (%p3773) target = $region84
      $region83: #{rgbnet_forward.1} parent=79 // pred_region
        %s3776 = smul.u32 64, %s25
        %p3777 = scmp.lt.s32.totalorder %s3776, 127
        %s3778 = scalar_select %p3777, %s3776, 127
        %s3779 = smul.addr %s3778, 8
        %s3780 = scalar_lea.vmem %s13, %s3779
      $region84: #{rgbnet_forward.1} parent=79 // pred_fallthru
        _
    $region80: #{rgbnet_forward.1} parent=5 // pred_fallthru
      _
  $region6: #{rgbnet_forward.1} parent=0 // loop_footer
    %s23 = sadd.s32 1, %s19
  $region7: #{rgbnet_forward.1} parent=0 // loop_footer_branch
    %18 = sbr.rel target = $region3
  $region8: #{rgbnet_forward.1} parent=0 // loop_exit
    _

</llo_original>
